<compile_context>
chip_gen: v7x
topology: tpu7x:2x2x1
jax: 0.10.0
libtpu: 0.0.40
codegen_flags: <defaults>
</compile_context>

<pallas_src>
import math

import jax
import jax.numpy as jnp
from jax.experimental import pallas as pl
from jax.experimental.pallas import tpu as pltpu

_TWO_PI = 2.0 * math.pi


def _multiscale_fourier_kernel(
    x_ref,      # (1, TM)    input coordinates, batch on the lane axis
    bcat_ref,   # (100, 1)   [B; B] as a feature column
    phase_ref,  # (100, 1)   [0]*50 + [pi/2]*50 (cos(t) == sin(t + pi/2))
    w1_ref,     # (100, 100) hidden layer 1 weight, (out, in)
    b1_ref,     # (100, 1)   hidden layer 1 bias (column)
    w2_ref,     # (100, 100) hidden layer 2 weight, (out, in)
    b2_ref,     # (100, 1)   hidden layer 2 bias (column)
    wf_ref,     # (1, 100)   final linear weight, (out, in)
    bf_ref,     # (1, 1)     final linear bias
    o_ref,      # (1, TM)    output u(x), lane-dense
):
    # --- Fourier feature embedding (VPU broadcast mul + EUP sin; no MXU, no concat) ---
    x = x_ref[...] * _TWO_PI                                    # (1, TM)
    emb = jnp.sin(bcat_ref[...] * x + phase_ref[...])           # (100, TM)

    # --- FeedForward MLP (tanh), feature-major: h = tanh(W @ h + b) --------------------
    h = jnp.tanh(
        jnp.dot(w1_ref[...], emb, preferred_element_type=jnp.float32) + b1_ref[...]
    )                                                           # (100, TM)
    h = jnp.tanh(
        jnp.dot(w2_ref[...], h, preferred_element_type=jnp.float32) + b2_ref[...]
    )                                                           # (100, TM)

    # --- Final linear 100 -> 1 (output stays lane-dense along the batch) ---------------
    out = jnp.dot(wf_ref[...], h, preferred_element_type=jnp.float32) + bf_ref[...]
    o_ref[...] = out.astype(o_ref.dtype)                        # (1, TM)


def multiscale_fourier_net(x, params, *, block_m=4096):
    """x: (N, 1) float32. Returns (N, 1) float32. Any N (wrapper pads to the tile)."""
    B, w1, b1, w2, b2, wf, bf = params
    N = x.shape[0]
    assert x.shape == (N, 1)

    # ---- parameter prep (tiny, O(100^2)): feature-major weights, column biases --------
    half = B.shape[1]                                           # 50
    bcat = jnp.concatenate([B, B], axis=1).reshape(-1, 1)       # (100, 1)
    phase = jnp.concatenate(
        [jnp.zeros((half, 1), jnp.float32),
         jnp.full((half, 1), 0.5 * math.pi, jnp.float32)], axis=0)  # (100, 1)
    w1_t, b1_c = w1.T, b1.reshape(-1, 1)                        # (100,100), (100,1)
    w2_t, b2_c = w2.T, b2.reshape(-1, 1)                        # (100,100), (100,1)
    wf_t = wf.T                                                 # (1, 100)
    bf2 = bf.reshape(1, 1)                                      # (1, 1)

    # ---- lane-dense batch layout: (1, N) padded to a multiple of the batch tile -------
    n_pad = max(128, pl.cdiv(N, 128) * 128)
    tm = min(block_m, n_pad)
    n_pad = pl.cdiv(n_pad, tm) * tm
    x_fm = jnp.pad(x.reshape(1, N).astype(jnp.float32), ((0, 0), (0, n_pad - N)))

    grid = (n_pad // tm,)

    def rep(a):
        nd = a.ndim
        return pl.BlockSpec(a.shape, lambda i, nd=nd: (0,) * nd)  # whole param in VMEM

    y = pl.pallas_call(
        _multiscale_fourier_kernel,
        out_shape=jax.ShapeDtypeStruct((1, n_pad), jnp.float32),
        grid_spec=pltpu.PrefetchScalarGridSpec(
            num_scalar_prefetch=0,
            grid=grid,
            in_specs=[
                pl.BlockSpec((1, tm), lambda i: (0, i)),  # x tile, batch on lanes
                rep(bcat), rep(phase),
                rep(w1_t), rep(b1_c),
                rep(w2_t), rep(b2_c),
                rep(wf_t), rep(bf2),
            ],
            out_specs=pl.BlockSpec((1, tm), lambda i: (0, i)),
        ),
        compiler_params=pltpu.CompilerParams(
            dimension_semantics=("parallel",),   # lets v7x shard the batch over 2 TCs
        ),
    )(x_fm, bcat, phase, w1_t, b1_c, w2_t, b2_c, wf_t, bf2)

    return y[0, :N].reshape(N, 1)


def init_params(key, sigma=10.0, hidden=100, fourier_out=100):
    """Deterministic synthetic parameters matching the module's shapes."""
    half = fourier_out // 2                                     # 50
    k = jax.random.split(key, 7)
    # FourierFeatureEmbedding: B ~ N(0, sigma^2), shape (input_dim=1, out/2)
    B = sigma * jax.random.normal(k[0], (1, half), jnp.float32)
    # FeedForward: two hidden Linear(100, 100) layers (stored as (in, out))
    w1 = jax.random.normal(k[1], (fourier_out, hidden), jnp.float32) / math.sqrt(fourier_out)
    b1 = jax.random.normal(k[2], (1, hidden), jnp.float32) * 0.01
    w2 = jax.random.normal(k[3], (hidden, hidden), jnp.float32) / math.sqrt(hidden)
    b2 = jax.random.normal(k[4], (1, hidden), jnp.float32) * 0.01
    # final_layer: Linear(100, 1)
    wf = jax.random.normal(k[5], (hidden, 1), jnp.float32) / math.sqrt(hidden)
    bf = jax.random.normal(k[6], (1, 1), jnp.float32) * 0.01
    return (B, w1, b1, w2, b2, wf, bf)


def reference_forward(x, params):
    """Pure-JAX reference of the spec's forward pass (batch-major, sin/cos concat)."""
    B, w1, b1, w2, b2, wf, bf = params
    proj = 2.0 * math.pi * (x @ B)
    emb = jnp.concatenate([jnp.sin(proj), jnp.cos(proj)], axis=-1)
    h = jnp.tanh(emb @ w1 + b1)
    h = jnp.tanh(h @ w2 + b2)
    return h @ wf + bf


if __name__ == "__main__":
    key = jax.random.PRNGKey(0)
    pkey, xkey = jax.random.split(key)

    params = init_params(pkey, sigma=10.0)

    # Small 1-D coordinate batch, shape (N, 1) as implied by input_dimension=1.
    # N deliberately not a multiple of 128 to exercise the wrapper's padding path.
    N = 200
    x = jax.random.uniform(xkey, (N, 1), jnp.float32, minval=-1.0, maxval=1.0)

    out = multiscale_fourier_net(x, params)
    out = jax.block_until_ready(out)

    ref = reference_forward(x, params)
    assert out.shape == (N, 1)
    # Slightly loose tolerance: kernel evaluates cos(t) as sin(t + pi/2) and reorders
    # the 2*pi multiply, which differs from the reference by a few float32 ulps.
    assert jnp.allclose(out, ref, atol=1e-3, rtol=1e-3), "mismatch vs pure-JAX reference"

    # TODO(synk): PyTorch attaches `out.labels = ['u']` to the tensor; JAX arrays
    # have no attribute metadata, so that annotation is dropped.
    print("KERNEL_OK")
</pallas_src>

<mosaic_0001>
module attributes {stable_mosaic.version = 11 : i64} {
  func.func @_multiscale_fourier_kernel(%arg0: i32, %arg1: memref<1x256xf32, #tpu.memory_space<vmem>>, %arg2: memref<100x1xf32, #tpu.memory_space<vmem>>, %arg3: memref<100x1xf32, #tpu.memory_space<vmem>>, %arg4: memref<100x100xf32, #tpu.memory_space<vmem>>, %arg5: memref<100x1xf32, #tpu.memory_space<vmem>>, %arg6: memref<100x100xf32, #tpu.memory_space<vmem>>, %arg7: memref<100x1xf32, #tpu.memory_space<vmem>>, %arg8: memref<1x100xf32, #tpu.memory_space<vmem>>, %arg9: memref<1x1xf32, #tpu.memory_space<vmem>>, %arg10: memref<1x256xf32, #tpu.memory_space<vmem>>) attributes {dimension_semantics = [#tpu.dimension_semantics<parallel>], iteration_bounds = array<i64: 1>, scalar_prefetch = 0 : i64, scratch_operands = 0 : i64, tpu.core_type = #tpu.core_type<tc>, window_params = [{transform_indices = @transform_0, window_bounds = array<i64: 1, 256>}, {pipeline_mode = #tpu.pipeline_mode<synchronous>, transform_indices = @transform_1, window_bounds = array<i64: 100, 1>}, {pipeline_mode = #tpu.pipeline_mode<synchronous>, transform_indices = @transform_2, window_bounds = array<i64: 100, 1>}, {pipeline_mode = #tpu.pipeline_mode<synchronous>, transform_indices = @transform_3, window_bounds = array<i64: 100, 100>}, {pipeline_mode = #tpu.pipeline_mode<synchronous>, transform_indices = @transform_4, window_bounds = array<i64: 100, 1>}, {pipeline_mode = #tpu.pipeline_mode<synchronous>, transform_indices = @transform_5, window_bounds = array<i64: 100, 100>}, {pipeline_mode = #tpu.pipeline_mode<synchronous>, transform_indices = @transform_6, window_bounds = array<i64: 100, 1>}, {pipeline_mode = #tpu.pipeline_mode<synchronous>, transform_indices = @transform_7, window_bounds = array<i64: 1, 100>}, {pipeline_mode = #tpu.pipeline_mode<synchronous>, transform_indices = @transform_8, window_bounds = array<i64: 1, 1>}, {transform_indices = @transform_9, window_bounds = array<i64: 1, 256>}]} {
    %c0 = arith.constant 0 : index
    %c0_0 = arith.constant 0 : index
    %0 = vector.load %arg1[%c0, %c0_0] : memref<1x256xf32, #tpu.memory_space<vmem>>, vector<1x256xf32>
    %cst = arith.constant 6.28318548 : f32
    %1 = vector.broadcast %cst : f32 to vector<1x256xf32>
    %2 = arith.mulf %0, %1 : vector<1x256xf32>
    %c0_1 = arith.constant 0 : index
    %c0_2 = arith.constant 0 : index
    %3 = vector.load %arg2[%c0_1, %c0_2] : memref<100x1xf32, #tpu.memory_space<vmem>>, vector<100x1xf32>
    %4 = vector.broadcast %3 : vector<100x1xf32> to vector<100x256xf32>
    %5 = vector.broadcast %2 : vector<1x256xf32> to vector<100x256xf32>
    %6 = arith.mulf %4, %5 : vector<100x256xf32>
    %c0_3 = arith.constant 0 : index
    %c0_4 = arith.constant 0 : index
    %7 = vector.load %arg3[%c0_3, %c0_4] : memref<100x1xf32, #tpu.memory_space<vmem>>, vector<100x1xf32>
    %8 = vector.broadcast %7 : vector<100x1xf32> to vector<100x256xf32>
    %9 = arith.addf %6, %8 : vector<100x256xf32>
    %10 = math.sin %9 : vector<100x256xf32>
    %c0_5 = arith.constant 0 : index
    %c0_6 = arith.constant 0 : index
    %11 = vector.load %arg4[%c0_5, %c0_6] : memref<100x100xf32, #tpu.memory_space<vmem>>, vector<100x100xf32>
    %cst_7 = arith.constant dense<0.000000e+00> : vector<100x256xf32>
    %12 = tpu.matmul %11, %10, %cst_7 {dimension_numbers = #tpu.dot_dimension_numbers<[1], [0], [0], [1], [0, 0, 1, 1], [], []>} : vector<100x100xf32>, vector<100x256xf32>, vector<100x256xf32> -> vector<100x256xf32>
    %c0_8 = arith.constant 0 : index
    %c0_9 = arith.constant 0 : index
    %13 = vector.load %arg5[%c0_8, %c0_9] : memref<100x1xf32, #tpu.memory_space<vmem>>, vector<100x1xf32>
    %14 = vector.broadcast %13 : vector<100x1xf32> to vector<100x256xf32>
    %15 = arith.addf %12, %14 : vector<100x256xf32>
    %16 = math.tanh %15 : vector<100x256xf32>
    %c0_10 = arith.constant 0 : index
    %c0_11 = arith.constant 0 : index
    %17 = vector.load %arg6[%c0_10, %c0_11] : memref<100x100xf32, #tpu.memory_space<vmem>>, vector<100x100xf32>
    %cst_12 = arith.constant dense<0.000000e+00> : vector<100x256xf32>
    %18 = tpu.matmul %17, %16, %cst_12 {dimension_numbers = #tpu.dot_dimension_numbers<[1], [0], [0], [1], [0, 0, 1, 1], [], []>} : vector<100x100xf32>, vector<100x256xf32>, vector<100x256xf32> -> vector<100x256xf32>
    %c0_13 = arith.constant 0 : index
    %c0_14 = arith.constant 0 : index
    %19 = vector.load %arg7[%c0_13, %c0_14] : memref<100x1xf32, #tpu.memory_space<vmem>>, vector<100x1xf32>
    %20 = vector.broadcast %19 : vector<100x1xf32> to vector<100x256xf32>
    %21 = arith.addf %18, %20 : vector<100x256xf32>
    %22 = math.tanh %21 : vector<100x256xf32>
    %c0_15 = arith.constant 0 : index
    %c0_16 = arith.constant 0 : index
    %23 = vector.load %arg8[%c0_15, %c0_16] : memref<1x100xf32, #tpu.memory_space<vmem>>, vector<1x100xf32>
    %cst_17 = arith.constant dense<0.000000e+00> : vector<1x256xf32>
    %24 = tpu.matmul %23, %22, %cst_17 {dimension_numbers = #tpu.dot_dimension_numbers<[1], [0], [0], [1], [0, 0, 1, 1], [], []>} : vector<1x100xf32>, vector<100x256xf32>, vector<1x256xf32> -> vector<1x256xf32>
    %c0_18 = arith.constant 0 : index
    %c0_19 = arith.constant 0 : index
    %25 = vector.load %arg9[%c0_18, %c0_19] : memref<1x1xf32, #tpu.memory_space<vmem>>, vector<1x1xf32>
    %26 = vector.broadcast %25 : vector<1x1xf32> to vector<1x256xf32>
    %27 = arith.addf %24, %26 : vector<1x256xf32>
    %c0_20 = arith.constant 0 : index
    %c0_21 = arith.constant 0 : index
    %28 = vector.load %arg10[%c0_20, %c0_21] : memref<1x256xf32, #tpu.memory_space<vmem>>, vector<1x256xf32>
    tpu.vector_store %arg10[%c0_20, %c0_21], %27 {strides = array<i32>} : memref<1x256xf32, #tpu.memory_space<vmem>>, vector<1x256xf32>,
    return
  }
  func.func @transform_0(%arg0: i32) -> (i32, i32) {
    %c0_i32 = arith.constant 0 : i32
    %c0_i32_0 = arith.constant 0 : i32
    return %c0_i32, %arg0 : i32, i32
  }
  func.func @transform_1(%arg0: i32) -> (i32, i32) {
    %c0_i32 = arith.constant 0 : i32
    %c0_i32_0 = arith.constant 0 : i32
    %c0_i32_1 = arith.constant 0 : i32
    return %c0_i32, %c0_i32_0 : i32, i32
  }
  func.func @transform_2(%arg0: i32) -> (i32, i32) {
    %c0_i32 = arith.constant 0 : i32
    %c0_i32_0 = arith.constant 0 : i32
    %c0_i32_1 = arith.constant 0 : i32
    return %c0_i32, %c0_i32_0 : i32, i32
  }
  func.func @transform_3(%arg0: i32) -> (i32, i32) {
    %c0_i32 = arith.constant 0 : i32
    %c0_i32_0 = arith.constant 0 : i32
    %c0_i32_1 = arith.constant 0 : i32
    return %c0_i32, %c0_i32_0 : i32, i32
  }
  func.func @transform_4(%arg0: i32) -> (i32, i32) {
    %c0_i32 = arith.constant 0 : i32
    %c0_i32_0 = arith.constant 0 : i32
    %c0_i32_1 = arith.constant 0 : i32
    return %c0_i32, %c0_i32_0 : i32, i32
  }
  func.func @transform_5(%arg0: i32) -> (i32, i32) {
    %c0_i32 = arith.constant 0 : i32
    %c0_i32_0 = arith.constant 0 : i32
    %c0_i32_1 = arith.constant 0 : i32
    return %c0_i32, %c0_i32_0 : i32, i32
  }
  func.func @transform_6(%arg0: i32) -> (i32, i32) {
    %c0_i32 = arith.constant 0 : i32
    %c0_i32_0 = arith.constant 0 : i32
    %c0_i32_1 = arith.constant 0 : i32
    return %c0_i32, %c0_i32_0 : i32, i32
  }
  func.func @transform_7(%arg0: i32) -> (i32, i32) {
    %c0_i32 = arith.constant 0 : i32
    %c0_i32_0 = arith.constant 0 : i32
    %c0_i32_1 = arith.constant 0 : i32
    return %c0_i32, %c0_i32_0 : i32, i32
  }
  func.func @transform_8(%arg0: i32) -> (i32, i32) {
    %c0_i32 = arith.constant 0 : i32
    %c0_i32_0 = arith.constant 0 : i32
    %c0_i32_1 = arith.constant 0 : i32
    return %c0_i32, %c0_i32_0 : i32, i32
  }
  func.func @transform_9(%arg0: i32) -> (i32, i32) {
    %c0_i32 = arith.constant 0 : i32
    %c0_i32_0 = arith.constant 0 : i32
    return %c0_i32, %arg0 : i32, i32
  }
}

</mosaic_0001>

<llo_original>
// kernel: tpu_custom_call.1
$region0: #{tpu_custom_call.1}
  #allocation0 [shape = 'u32[]', space=smem, size = 0x4, offset = 0x4, fixed_abs, tag = 'smem constant byte address 0x4 - core index']
  #allocation1 [shape = 'u32[144,128]{1,0:T(1,128)}', space=vmem, size = 0x12000, scoped, tag = 'internal scratch']
  #allocation2 [shape = 'f32[1,1]{1,0:T(1,128)S(1)}', space=vmem, size = 0x200, scoped, tag = 'scoped memory for tpu_custom_call.1']
  %s0 = inlined_call_operand.vmem [shape: f32[1,256], index: 0, kind: input, shape index: {}]
  %s1 = inlined_call_operand.vmem [shape: f32[100,1], index: 1, kind: input, shape index: {}]
  %s2 = inlined_call_operand.vmem [shape: f32[100,1], index: 2, kind: input, shape index: {}]
  %s3 = inlined_call_operand.vmem [shape: f32[100,100], index: 3, kind: input, shape index: {}]
  %s4 = inlined_call_operand.vmem [shape: f32[100,1], index: 4, kind: input, shape index: {}]
  %s5 = inlined_call_operand.vmem [shape: f32[100,100], index: 5, kind: input, shape index: {}]
  %s6 = inlined_call_operand.vmem [shape: f32[100,1], index: 6, kind: input, shape index: {}]
  %s7 = inlined_call_operand.vmem [shape: f32[1,100], index: 7, kind: input, shape index: {}]
  %s8 = inlined_call_operand.<no memory space> [shape: f32[1,1], index: 8, kind: input, shape index: {}]
  %s9 = inlined_call_operand.hbm [shape: f32[1,256], index: 9, kind: output, shape index: {}]
  %s10 = sld [smem:[#allocation0]]
  $region46: #{tpu_custom_call.1} parent=0
    _
  %s12 = ssub.s32 1, %s10
  %s13 = scalar_select 0, %s12, %s10
  %v14 = vstv %s8
  %15 = vst [vmem:[#allocation2] sm:$0x1] %v14
  $region1: #{tpu_custom_call.1} parent=0
    #allocation3 [shape = 'u8[1024]{0}', space=vmem, size = 0x400, scoped, tag = 'output window, operand 0, single buffered']
    #allocation4 [shape = 's32[1]{0}', space=sflag, size = 0x4, scoped, tag = 'scoped memory for tpu_custom_call.1']
    %16 = vsyncpa [#allocation4], 0
    // Predicated region
    $region2: #{tpu_custom_call.1} parent=1 // pred_check
      _
    $region3: #{tpu_custom_call.1} parent=1 // pred_check_branch
      %18 = sbr.rel (0) target = $region5
    $region4: #{tpu_custom_call.1} parent=1 // pred_region
      _
    $region5: #{tpu_custom_call.1} parent=1 // pred_fallthru
      _
    // Predicated region
    $region6: #{tpu_custom_call.1} parent=1 // pred_check
      _
    $region7: #{tpu_custom_call.1} parent=1 // pred_check_branch
      %20 = sbr.rel (0) target = $region9
    $region8: #{tpu_custom_call.1} parent=1 // pred_region
      _
    $region9: #{tpu_custom_call.1} parent=1 // pred_fallthru
      _
    // Predicated region
    $region10: #{tpu_custom_call.1} parent=1 // pred_check
      _
    $region11: #{tpu_custom_call.1} parent=1 // pred_check_branch
      %22 = sbr.rel (0) target = $region13
    $region12: #{tpu_custom_call.1} parent=1 // pred_region
      _
    $region13: #{tpu_custom_call.1} parent=1 // pred_fallthru
      _
    // Predicated region
    $region14: #{tpu_custom_call.1} parent=1 // pred_check
      _
    $region15: #{tpu_custom_call.1} parent=1 // pred_check_branch
      %24 = sbr.rel (0) target = $region17
    $region16: #{tpu_custom_call.1} parent=1 // pred_region
      _
    $region17: #{tpu_custom_call.1} parent=1 // pred_fallthru
      _
    // Predicated region
    $region18: #{tpu_custom_call.1} parent=1 // pred_check
      _
    $region19: #{tpu_custom_call.1} parent=1 // pred_check_branch
      %26 = sbr.rel (0) target = $region21
    $region20: #{tpu_custom_call.1} parent=1 // pred_region
      _
    $region21: #{tpu_custom_call.1} parent=1 // pred_fallthru
      _
    // Predicated region
    $region22: #{tpu_custom_call.1} parent=1 // pred_check
      _
    $region23: #{tpu_custom_call.1} parent=1 // pred_check_branch
      %28 = sbr.rel (0) target = $region25
    $region24: #{tpu_custom_call.1} parent=1 // pred_region
      _
    $region25: #{tpu_custom_call.1} parent=1 // pred_fallthru
      _
    // Predicated region
    $region26: #{tpu_custom_call.1} parent=1 // pred_check
      _
    $region27: #{tpu_custom_call.1} parent=1 // pred_check_branch
      %30 = sbr.rel (0) target = $region29
    $region28: #{tpu_custom_call.1} parent=1 // pred_region
      _
    $region29: #{tpu_custom_call.1} parent=1 // pred_fallthru
      _
    // Predicated region
    $region30: #{tpu_custom_call.1} parent=1 // pred_check
      _
    $region31: #{tpu_custom_call.1} parent=1 // pred_check_branch
      %32 = sbr.rel (0) target = $region33
    $region32: #{tpu_custom_call.1} parent=1 // pred_region
      _
    $region33: #{tpu_custom_call.1} parent=1 // pred_fallthru
      _
    // Predicated region
    $region34: #{tpu_custom_call.1} parent=1 // pred_check
      _
    $region35: #{tpu_custom_call.1} parent=1 // pred_check_branch
      %34 = sbr.rel (0) target = $region37
    $region36: #{tpu_custom_call.1} parent=1 // pred_region
      _
    $region37: #{tpu_custom_call.1} parent=1 // pred_fallthru
      _
    %v35 = vld [vmem:[%s0] sm:$0x3]
    %v36 = vmul.f32 %v35, 6.2831855
    %v37 = vld [vmem:[%s1] sm:$0xff]
    %v38 = vld [vmem:[%s1 + $0x8] sm:$0xff]
    %v39 = vld [vmem:[%s1 + $0x10] sm:$0xff]
    %v40 = vld [vmem:[%s1 + $0x18] sm:$0xff]
    %v41 = vld [vmem:[%s1 + $0x20] sm:$0xff]
    %v42 = vld [vmem:[%s1 + $0x28] sm:$0xff]
    %v43 = vld [vmem:[%s1 + $0x30] sm:$0xff]
    %v44 = vld [vmem:[%s1 + $0x38] sm:$0xff]
    %v45 = vld [vmem:[%s1 + $0x40] sm:$0xff]
    %v46 = vld [vmem:[%s1 + $0x48] sm:$0xff]
    %v47 = vld [vmem:[%s1 + $0x50] sm:$0xff]
    %v48 = vld [vmem:[%s1 + $0x58] sm:$0xff]
    %v49 = vld [vmem:[%s1 + $0x60] sm:$0xf]
    %51 = vset.pattern.permute.xlu0 0
    %52 = vperm.xlu0 %51, %v37
    %v53 = vpop.permute.xlu0 %52
    %56 = vset.pattern.permute.xlu0 0
    %57 = vperm.xlu0 %56, %v38
    %v58 = vpop.permute.xlu0 %57
    %61 = vset.pattern.permute.xlu0 0
    %62 = vperm.xlu0 %61, %v39
    %v63 = vpop.permute.xlu0 %62
    %66 = vset.pattern.permute.xlu0 0
    %67 = vperm.xlu0 %66, %v40
    %v68 = vpop.permute.xlu0 %67
    %71 = vset.pattern.permute.xlu0 0
    %72 = vperm.xlu0 %71, %v41
    %v73 = vpop.permute.xlu0 %72
    %76 = vset.pattern.permute.xlu0 0
    %77 = vperm.xlu0 %76, %v42
    %v78 = vpop.permute.xlu0 %77
    %81 = vset.pattern.permute.xlu0 0
    %82 = vperm.xlu0 %81, %v43
    %v83 = vpop.permute.xlu0 %82
    %86 = vset.pattern.permute.xlu0 0
    %87 = vperm.xlu0 %86, %v44
    %v88 = vpop.permute.xlu0 %87
    %91 = vset.pattern.permute.xlu0 0
    %92 = vperm.xlu0 %91, %v45
    %v93 = vpop.permute.xlu0 %92
    %96 = vset.pattern.permute.xlu0 0
    %97 = vperm.xlu0 %96, %v46
    %v98 = vpop.permute.xlu0 %97
    %101 = vset.pattern.permute.xlu0 0
    %102 = vperm.xlu0 %101, %v47
    %v103 = vpop.permute.xlu0 %102
    %106 = vset.pattern.permute.xlu0 0
    %107 = vperm.xlu0 %106, %v48
    %v108 = vpop.permute.xlu0 %107
    %111 = vset.pattern.permute.xlu0 0
    %112 = vperm.xlu0 %111, %v49
    %v113 = vpop.permute.xlu0 %112
    %v116 = vlaneseq
    %v117 = vshrl.u32 %v116, 7
    %v118 = vsub.s32 0, %v117
    %v119 = vrot.slane %v36, %v118
    %v120 = vlaneseq
    %v121 = vshrl.u32 %v120, 7
    %v122 = vsub.s32 1, %v121
    %v123 = vrot.slane %v36, %v122
    %v126 = vmul.f32 %v53, %v119
    %v127 = vmul.f32 %v53, %v123
    %v128 = vmul.f32 %v58, %v119
    %v129 = vmul.f32 %v58, %v123
    %v130 = vmul.f32 %v63, %v119
    %v131 = vmul.f32 %v63, %v123
    %v132 = vmul.f32 %v68, %v119
    %v133 = vmul.f32 %v68, %v123
    %v134 = vmul.f32 %v73, %v119
    %v135 = vmul.f32 %v73, %v123
    %v136 = vmul.f32 %v78, %v119
    %v137 = vmul.f32 %v78, %v123
    %v138 = vmul.f32 %v83, %v119
    %v139 = vmul.f32 %v83, %v123
    %v140 = vmul.f32 %v88, %v119
    %v141 = vmul.f32 %v88, %v123
    %v142 = vmul.f32 %v93, %v119
    %v143 = vmul.f32 %v93, %v123
    %v144 = vmul.f32 %v98, %v119
    %v145 = vmul.f32 %v98, %v123
    %v146 = vmul.f32 %v103, %v119
    %v147 = vmul.f32 %v103, %v123
    %v148 = vmul.f32 %v108, %v119
    %v149 = vmul.f32 %v108, %v123
    %v150 = vmul.f32 %v113, %v119
    %v151 = vmul.f32 %v113, %v123
    %v152 = vld [vmem:[%s2] sm:$0xff]
    %v153 = vld [vmem:[%s2 + $0x8] sm:$0xff]
    %v154 = vld [vmem:[%s2 + $0x10] sm:$0xff]
    %v155 = vld [vmem:[%s2 + $0x18] sm:$0xff]
    %v156 = vld [vmem:[%s2 + $0x20] sm:$0xff]
    %v157 = vld [vmem:[%s2 + $0x28] sm:$0xff]
    %v158 = vld [vmem:[%s2 + $0x30] sm:$0xff]
    %v159 = vld [vmem:[%s2 + $0x38] sm:$0xff]
    %v160 = vld [vmem:[%s2 + $0x40] sm:$0xff]
    %v161 = vld [vmem:[%s2 + $0x48] sm:$0xff]
    %v162 = vld [vmem:[%s2 + $0x50] sm:$0xff]
    %v163 = vld [vmem:[%s2 + $0x58] sm:$0xff]
    %v164 = vld [vmem:[%s2 + $0x60] sm:$0xf]
    %166 = vset.pattern.permute.xlu0 0
    %167 = vperm.xlu0 %166, %v152
    %v168 = vpop.permute.xlu0 %167
    %171 = vset.pattern.permute.xlu0 0
    %172 = vperm.xlu0 %171, %v153
    %v173 = vpop.permute.xlu0 %172
    %176 = vset.pattern.permute.xlu0 0
    %177 = vperm.xlu0 %176, %v154
    %v178 = vpop.permute.xlu0 %177
    %181 = vset.pattern.permute.xlu0 0
    %182 = vperm.xlu0 %181, %v155
    %v183 = vpop.permute.xlu0 %182
    %186 = vset.pattern.permute.xlu0 0
    %187 = vperm.xlu0 %186, %v156
    %v188 = vpop.permute.xlu0 %187
    %191 = vset.pattern.permute.xlu0 0
    %192 = vperm.xlu0 %191, %v157
    %v193 = vpop.permute.xlu0 %192
    %196 = vset.pattern.permute.xlu0 0
    %197 = vperm.xlu0 %196, %v158
    %v198 = vpop.permute.xlu0 %197
    %201 = vset.pattern.permute.xlu0 0
    %202 = vperm.xlu0 %201, %v159
    %v203 = vpop.permute.xlu0 %202
    %206 = vset.pattern.permute.xlu0 0
    %207 = vperm.xlu0 %206, %v160
    %v208 = vpop.permute.xlu0 %207
    %211 = vset.pattern.permute.xlu0 0
    %212 = vperm.xlu0 %211, %v161
    %v213 = vpop.permute.xlu0 %212
    %216 = vset.pattern.permute.xlu0 0
    %217 = vperm.xlu0 %216, %v162
    %v218 = vpop.permute.xlu0 %217
    %221 = vset.pattern.permute.xlu0 0
    %222 = vperm.xlu0 %221, %v163
    %v223 = vpop.permute.xlu0 %222
    %226 = vset.pattern.permute.xlu0 0
    %227 = vperm.xlu0 %226, %v164
    %v228 = vpop.permute.xlu0 %227
    %v230 = vadd.f32 %v126, %v168
    %v231 = vadd.f32 %v127, %v168
    %v232 = vadd.f32 %v128, %v173
    %v233 = vadd.f32 %v129, %v173
    %v234 = vadd.f32 %v130, %v178
    %v235 = vadd.f32 %v131, %v178
    %v236 = vadd.f32 %v132, %v183
    %v237 = vadd.f32 %v133, %v183
    %v238 = vadd.f32 %v134, %v188
    %v239 = vadd.f32 %v135, %v188
    %v240 = vadd.f32 %v136, %v193
    %v241 = vadd.f32 %v137, %v193
    %v242 = vadd.f32 %v138, %v198
    %v243 = vadd.f32 %v139, %v198
    %v244 = vadd.f32 %v140, %v203
    %v245 = vadd.f32 %v141, %v203
    %v246 = vadd.f32 %v142, %v208
    %v247 = vadd.f32 %v143, %v208
    %v248 = vadd.f32 %v144, %v213
    %v249 = vadd.f32 %v145, %v213
    %v250 = vadd.f32 %v146, %v218
    %v251 = vadd.f32 %v147, %v218
    %v252 = vadd.f32 %v148, %v223
    %v253 = vadd.f32 %v149, %v223
    %v254 = vadd.f32 %v150, %v228
    %v255 = vadd.f32 %v151, %v228
    %v256 = vand.u32 2147483647, %v230
    %vm257 = vcmp.le.f32.partialorder %v256, 0.7853982
    %vm258 = vcmp.lt.s32.totalorder %v230, 0
    %v259 = vand.u32 %v230, 2139095040
    %v260 = vshrl.u32 %v259, 23
    %v261 = vsub.s32 %v260, 127
    %v262 = vand.u32 2147483647, %v230
    %v263 = vand.u32 %v262, 8388607
    %v264 = vor.u32 %v263, 8388608
    %v265 = vsub.s32 0, %v264
    %v266 = vadd.s32 %v261, 1
    %vm267 = vcmp.gt.s32.totalorder %v266, 0
    %v268 = vsel %vm267, %v266, 0
    %v269 = vshrl.u32 %v268, 5
    %v270 = vand.u32 %v268, 31
    %v271 = vsub.s32 32, %v270
    %v272 = vshrl.u32 683565275, %v271
    %v273 = vshll.u32 683565275, %v270
    %v274 = vshrl.u32 2475754826, %v271
    %v275 = vor.u32 %v273, %v274
    %v276 = vshll.u32 2475754826, %v270
    %v277 = vshrl.u32 2131351028, %v271
    %v278 = vor.u32 %v276, %v277
    %v279 = vshll.u32 2131351028, %v270
    %v280 = vshrl.u32 2102212464, %v271
    %v281 = vor.u32 %v279, %v280
    %v282 = vshll.u32 2102212464, %v270
    %v283 = vshrl.u32 920167782, %v271
    %v284 = vor.u32 %v282, %v283
    %v285 = vshll.u32 920167782, %v270
    %v286 = vshrl.u32 1326507024, %v271
    %v287 = vor.u32 %v285, %v286
    %vm288 = vcmp.lt.s32.totalorder %v269, 1
    %vm289 = vcmp.lt.s32.totalorder %v269, 2
    %vm290 = vcmp.lt.s32.totalorder %v269, 3
    %vm291 = vcmp.lt.s32.totalorder %v269, 4
    %v292 = vsel %vm288, %v272, %v275
    %v293 = vsel %vm291, %v281, 2102212464
    %v294 = vsel %vm290, %v278, %v293
    %v295 = vsel %vm289, %v292, %v294
    %v296 = vsel %vm288, %v275, %v278
    %v297 = vsel %vm291, %v284, 920167782
    %v298 = vsel %vm290, %v281, %v297
    %v299 = vsel %vm289, %v296, %v298
    %v300 = vsel %vm288, %v278, %v281
    %v301 = vsel %vm291, %v287, 1326507024
    %v302 = vsel %vm290, %v284, %v301
    %v303 = vsel %vm289, %v300, %v302
    %v304 = vshll.u32 %v264, 8
    %v305 = vmul.u32.u64.compose %v304, %v303
    %v306 = vextract.low.u32 %v305
    %v307 = vextract.high.u32 %v305
    %v308 = vmul.u32.u64.compose %v304, %v299
    %v309 = vextract.low.u32 %v308
    %v310 = vextract.high.u32 %v308
    %v311 = vmul.u32 %v304, %v295
    %v312 = vadd.s32 %v307, %v309
    %vm313 = vc.u32 %v307, %v309
    %v314 = vadd.s32 %v310, 1
    %v315 = vsel %vm313, %v314, %v310
    %v316 = vadd.s32 %v311, %v315
    %v317 = vadd.s32 %v316, 536870912
    %v318 = vshrl.u32 %v317, 30
    %v319 = vshll.u32 %v318, 30
    %v320 = vsub.s32 %v316, %v319
    %vm321 = vcmp.lt.s32.totalorder %v320, 0
    %v322 = vsub.s32 0, %v320
    %v323 = vsel %vm321, %v322, %v320
    %v324 = vclz %v323
    %v325 = vsub.s32 %v324, 2
    %vm326 = vcmp.gt.s32.totalorder 0, %v325
    %v327 = vsel %vm326, 0, %v325
    %v328 = vsub.s32 32, %v327
    %v329 = vshll.u32 %v320, %v327
    %v330 = vshrl.u32 %v312, %v328
    %v331 = vor.u32 %v329, %v330
    %v332 = vsub.s32 4294967266, %v327
    %v333 = vadd.s32 %v332, 127
    %v334 = vshll.u32 %v333, 23
    %v335 = vor.u32 4788187, %v334
    %v336 = vand.u32 2147483647, %v335
    %v338 = vcvt.s32.f32 %v331
    %v339 = vmul.f32 %v338, %v336
    %v340 = vxor.u32 %v339, 2147483648
    %v341 = vsel %vm258, %v340, %v339
    %v342 = vsub.s32 4, %v318
    %v343 = vsel %vm258, %v342, %v318
    %v344 = vsel %vm257, %v230, %v341
    %v345 = vsel %vm257, 0, %v343
    %v346 = vcosq.f32.pop %v344
    %v347 = vsinq.f32.pop %v344
    %vm348 = vweird.f32 %v230
    %v349 = vadd.s32 %v345, 3
    %v350 = vand.u32 %v349, 3
    %vm351 = vcmp.lt.s32.totalorder %v350, 2
    %vm352 = vcmp.eq.s32.totalorder %v350, 0
    %v353 = vxor.u32 %v347, 2147483648
    %v354 = vsel %vm352, %v346, %v353
    %vm355 = vcmp.eq.s32.totalorder %v350, 2
    %v356 = vxor.u32 %v346, 2147483648
    %v357 = vsel %vm355, %v356, %v347
    %v358 = vsel %vm351, %v354, %v357
    %v359 = vsel %vm348, nan, %v358
    %v360 = vand.u32 2147483647, %v231
    %vm361 = vcmp.le.f32.partialorder %v360, 0.7853982
    %vm362 = vcmp.lt.s32.totalorder %v231, 0
    %v363 = vand.u32 %v231, 2139095040
    %v364 = vshrl.u32 %v363, 23
    %v365 = vsub.s32 %v364, 127
    %v366 = vand.u32 2147483647, %v231
    %v367 = vand.u32 %v366, 8388607
    %v368 = vor.u32 %v367, 8388608
    %v369 = vsub.s32 0, %v368
    %v370 = vadd.s32 %v365, 1
    %vm371 = vcmp.gt.s32.totalorder %v370, 0
    %v372 = vsel %vm371, %v370, 0
    %v373 = vshrl.u32 %v372, 5
    %v374 = vand.u32 %v372, 31
    %v375 = vsub.s32 32, %v374
    %v376 = vshrl.u32 683565275, %v375
    %v377 = vshll.u32 683565275, %v374
    %v378 = vshrl.u32 2475754826, %v375
    %v379 = vor.u32 %v377, %v378
    %v380 = vshll.u32 2475754826, %v374
    %v381 = vshrl.u32 2131351028, %v375
    %v382 = vor.u32 %v380, %v381
    %v383 = vshll.u32 2131351028, %v374
    %v384 = vshrl.u32 2102212464, %v375
    %v385 = vor.u32 %v383, %v384
    %v386 = vshll.u32 2102212464, %v374
    %v387 = vshrl.u32 920167782, %v375
    %v388 = vor.u32 %v386, %v387
    %v389 = vshll.u32 920167782, %v374
    %v390 = vshrl.u32 1326507024, %v375
    %v391 = vor.u32 %v389, %v390
    %vm392 = vcmp.lt.s32.totalorder %v373, 1
    %vm393 = vcmp.lt.s32.totalorder %v373, 2
    %vm394 = vcmp.lt.s32.totalorder %v373, 3
    %vm395 = vcmp.lt.s32.totalorder %v373, 4
    %v396 = vsel %vm392, %v376, %v379
    %v397 = vsel %vm395, %v385, 2102212464
    %v398 = vsel %vm394, %v382, %v397
    %v399 = vsel %vm393, %v396, %v398
    %v400 = vsel %vm392, %v379, %v382
    %v401 = vsel %vm395, %v388, 920167782
    %v402 = vsel %vm394, %v385, %v401
    %v403 = vsel %vm393, %v400, %v402
    %v404 = vsel %vm392, %v382, %v385
    %v405 = vsel %vm395, %v391, 1326507024
    %v406 = vsel %vm394, %v388, %v405
    %v407 = vsel %vm393, %v404, %v406
    %v408 = vshll.u32 %v368, 8
    %v409 = vmul.u32.u64.compose %v408, %v407
    %v410 = vextract.low.u32 %v409
    %v411 = vextract.high.u32 %v409
    %v412 = vmul.u32.u64.compose %v408, %v403
    %v413 = vextract.low.u32 %v412
    %v414 = vextract.high.u32 %v412
    %v415 = vmul.u32 %v408, %v399
    %v416 = vadd.s32 %v411, %v413
    %vm417 = vc.u32 %v411, %v413
    %v418 = vadd.s32 %v414, 1
    %v419 = vsel %vm417, %v418, %v414
    %v420 = vadd.s32 %v415, %v419
    %v421 = vadd.s32 %v420, 536870912
    %v422 = vshrl.u32 %v421, 30
    %v423 = vshll.u32 %v422, 30
    %v424 = vsub.s32 %v420, %v423
    %vm425 = vcmp.lt.s32.totalorder %v424, 0
    %v426 = vsub.s32 0, %v424
    %v427 = vsel %vm425, %v426, %v424
    %v428 = vclz %v427
    %v429 = vsub.s32 %v428, 2
    %vm430 = vcmp.gt.s32.totalorder 0, %v429
    %v431 = vsel %vm430, 0, %v429
    %v432 = vsub.s32 32, %v431
    %v433 = vshll.u32 %v424, %v431
    %v434 = vshrl.u32 %v416, %v432
    %v435 = vor.u32 %v433, %v434
    %v436 = vsub.s32 4294967266, %v431
    %v437 = vadd.s32 %v436, 127
    %v438 = vshll.u32 %v437, 23
    %v439 = vor.u32 4788187, %v438
    %v440 = vand.u32 2147483647, %v439
    %v442 = vcvt.s32.f32 %v435
    %v443 = vmul.f32 %v442, %v440
    %v444 = vxor.u32 %v443, 2147483648
    %v445 = vsel %vm362, %v444, %v443
    %v446 = vsub.s32 4, %v422
    %v447 = vsel %vm362, %v446, %v422
    %v448 = vsel %vm361, %v231, %v445
    %v449 = vsel %vm361, 0, %v447
    %v450 = vcosq.f32.pop %v448
    %v451 = vsinq.f32.pop %v448
    %vm452 = vweird.f32 %v231
    %v453 = vadd.s32 %v449, 3
    %v454 = vand.u32 %v453, 3
    %vm455 = vcmp.lt.s32.totalorder %v454, 2
    %vm456 = vcmp.eq.s32.totalorder %v454, 0
    %v457 = vxor.u32 %v451, 2147483648
    %v458 = vsel %vm456, %v450, %v457
    %vm459 = vcmp.eq.s32.totalorder %v454, 2
    %v460 = vxor.u32 %v450, 2147483648
    %v461 = vsel %vm459, %v460, %v451
    %v462 = vsel %vm455, %v458, %v461
    %v463 = vsel %vm452, nan, %v462
    %v464 = vand.u32 2147483647, %v232
    %vm465 = vcmp.le.f32.partialorder %v464, 0.7853982
    %vm466 = vcmp.lt.s32.totalorder %v232, 0
    %v467 = vand.u32 %v232, 2139095040
    %v468 = vshrl.u32 %v467, 23
    %v469 = vsub.s32 %v468, 127
    %v470 = vand.u32 2147483647, %v232
    %v471 = vand.u32 %v470, 8388607
    %v472 = vor.u32 %v471, 8388608
    %v473 = vsub.s32 0, %v472
    %v474 = vadd.s32 %v469, 1
    %vm475 = vcmp.gt.s32.totalorder %v474, 0
    %v476 = vsel %vm475, %v474, 0
    %v477 = vshrl.u32 %v476, 5
    %v478 = vand.u32 %v476, 31
    %v479 = vsub.s32 32, %v478
    %v480 = vshrl.u32 683565275, %v479
    %v481 = vshll.u32 683565275, %v478
    %v482 = vshrl.u32 2475754826, %v479
    %v483 = vor.u32 %v481, %v482
    %v484 = vshll.u32 2475754826, %v478
    %v485 = vshrl.u32 2131351028, %v479
    %v486 = vor.u32 %v484, %v485
    %v487 = vshll.u32 2131351028, %v478
    %v488 = vshrl.u32 2102212464, %v479
    %v489 = vor.u32 %v487, %v488
    %v490 = vshll.u32 2102212464, %v478
    %v491 = vshrl.u32 920167782, %v479
    %v492 = vor.u32 %v490, %v491
    %v493 = vshll.u32 920167782, %v478
    %v494 = vshrl.u32 1326507024, %v479
    %v495 = vor.u32 %v493, %v494
    %vm496 = vcmp.lt.s32.totalorder %v477, 1
    %vm497 = vcmp.lt.s32.totalorder %v477, 2
    %vm498 = vcmp.lt.s32.totalorder %v477, 3
    %vm499 = vcmp.lt.s32.totalorder %v477, 4
    %v500 = vsel %vm496, %v480, %v483
    %v501 = vsel %vm499, %v489, 2102212464
    %v502 = vsel %vm498, %v486, %v501
    %v503 = vsel %vm497, %v500, %v502
    %v504 = vsel %vm496, %v483, %v486
    %v505 = vsel %vm499, %v492, 920167782
    %v506 = vsel %vm498, %v489, %v505
    %v507 = vsel %vm497, %v504, %v506
    %v508 = vsel %vm496, %v486, %v489
    %v509 = vsel %vm499, %v495, 1326507024
    %v510 = vsel %vm498, %v492, %v509
    %v511 = vsel %vm497, %v508, %v510
    %v512 = vshll.u32 %v472, 8
    %v513 = vmul.u32.u64.compose %v512, %v511
    %v514 = vextract.low.u32 %v513
    %v515 = vextract.high.u32 %v513
    %v516 = vmul.u32.u64.compose %v512, %v507
    %v517 = vextract.low.u32 %v516
    %v518 = vextract.high.u32 %v516
    %v519 = vmul.u32 %v512, %v503
    %v520 = vadd.s32 %v515, %v517
    %vm521 = vc.u32 %v515, %v517
    %v522 = vadd.s32 %v518, 1
    %v523 = vsel %vm521, %v522, %v518
    %v524 = vadd.s32 %v519, %v523
    %v525 = vadd.s32 %v524, 536870912
    %v526 = vshrl.u32 %v525, 30
    %v527 = vshll.u32 %v526, 30
    %v528 = vsub.s32 %v524, %v527
    %vm529 = vcmp.lt.s32.totalorder %v528, 0
    %v530 = vsub.s32 0, %v528
    %v531 = vsel %vm529, %v530, %v528
    %v532 = vclz %v531
    %v533 = vsub.s32 %v532, 2
    %vm534 = vcmp.gt.s32.totalorder 0, %v533
    %v535 = vsel %vm534, 0, %v533
    %v536 = vsub.s32 32, %v535
    %v537 = vshll.u32 %v528, %v535
    %v538 = vshrl.u32 %v520, %v536
    %v539 = vor.u32 %v537, %v538
    %v540 = vsub.s32 4294967266, %v535
    %v541 = vadd.s32 %v540, 127
    %v542 = vshll.u32 %v541, 23
    %v543 = vor.u32 4788187, %v542
    %v544 = vand.u32 2147483647, %v543
    %v546 = vcvt.s32.f32 %v539
    %v547 = vmul.f32 %v546, %v544
    %v548 = vxor.u32 %v547, 2147483648
    %v549 = vsel %vm466, %v548, %v547
    %v550 = vsub.s32 4, %v526
    %v551 = vsel %vm466, %v550, %v526
    %v552 = vsel %vm465, %v232, %v549
    %v553 = vsel %vm465, 0, %v551
    %v554 = vcosq.f32.pop %v552
    %v555 = vsinq.f32.pop %v552
    %vm556 = vweird.f32 %v232
    %v557 = vadd.s32 %v553, 3
    %v558 = vand.u32 %v557, 3
    %vm559 = vcmp.lt.s32.totalorder %v558, 2
    %vm560 = vcmp.eq.s32.totalorder %v558, 0
    %v561 = vxor.u32 %v555, 2147483648
    %v562 = vsel %vm560, %v554, %v561
    %vm563 = vcmp.eq.s32.totalorder %v558, 2
    %v564 = vxor.u32 %v554, 2147483648
    %v565 = vsel %vm563, %v564, %v555
    %v566 = vsel %vm559, %v562, %v565
    %v567 = vsel %vm556, nan, %v566
    %v568 = vand.u32 2147483647, %v233
    %vm569 = vcmp.le.f32.partialorder %v568, 0.7853982
    %vm570 = vcmp.lt.s32.totalorder %v233, 0
    %v571 = vand.u32 %v233, 2139095040
    %v572 = vshrl.u32 %v571, 23
    %v573 = vsub.s32 %v572, 127
    %v574 = vand.u32 2147483647, %v233
    %v575 = vand.u32 %v574, 8388607
    %v576 = vor.u32 %v575, 8388608
    %v577 = vsub.s32 0, %v576
    %v578 = vadd.s32 %v573, 1
    %vm579 = vcmp.gt.s32.totalorder %v578, 0
    %v580 = vsel %vm579, %v578, 0
    %v581 = vshrl.u32 %v580, 5
    %v582 = vand.u32 %v580, 31
    %v583 = vsub.s32 32, %v582
    %v584 = vshrl.u32 683565275, %v583
    %v585 = vshll.u32 683565275, %v582
    %v586 = vshrl.u32 2475754826, %v583
    %v587 = vor.u32 %v585, %v586
    %v588 = vshll.u32 2475754826, %v582
    %v589 = vshrl.u32 2131351028, %v583
    %v590 = vor.u32 %v588, %v589
    %v591 = vshll.u32 2131351028, %v582
    %v592 = vshrl.u32 2102212464, %v583
    %v593 = vor.u32 %v591, %v592
    %v594 = vshll.u32 2102212464, %v582
    %v595 = vshrl.u32 920167782, %v583
    %v596 = vor.u32 %v594, %v595
    %v597 = vshll.u32 920167782, %v582
    %v598 = vshrl.u32 1326507024, %v583
    %v599 = vor.u32 %v597, %v598
    %vm600 = vcmp.lt.s32.totalorder %v581, 1
    %vm601 = vcmp.lt.s32.totalorder %v581, 2
    %vm602 = vcmp.lt.s32.totalorder %v581, 3
    %vm603 = vcmp.lt.s32.totalorder %v581, 4
    %v604 = vsel %vm600, %v584, %v587
    %v605 = vsel %vm603, %v593, 2102212464
    %v606 = vsel %vm602, %v590, %v605
    %v607 = vsel %vm601, %v604, %v606
    %v608 = vsel %vm600, %v587, %v590
    %v609 = vsel %vm603, %v596, 920167782
    %v610 = vsel %vm602, %v593, %v609
    %v611 = vsel %vm601, %v608, %v610
    %v612 = vsel %vm600, %v590, %v593
    %v613 = vsel %vm603, %v599, 1326507024
    %v614 = vsel %vm602, %v596, %v613
    %v615 = vsel %vm601, %v612, %v614
    %v616 = vshll.u32 %v576, 8
    %v617 = vmul.u32.u64.compose %v616, %v615
    %v618 = vextract.low.u32 %v617
    %v619 = vextract.high.u32 %v617
    %v620 = vmul.u32.u64.compose %v616, %v611
    %v621 = vextract.low.u32 %v620
    %v622 = vextract.high.u32 %v620
    %v623 = vmul.u32 %v616, %v607
    %v624 = vadd.s32 %v619, %v621
    %vm625 = vc.u32 %v619, %v621
    %v626 = vadd.s32 %v622, 1
    %v627 = vsel %vm625, %v626, %v622
    %v628 = vadd.s32 %v623, %v627
    %v629 = vadd.s32 %v628, 536870912
    %v630 = vshrl.u32 %v629, 30
    %v631 = vshll.u32 %v630, 30
    %v632 = vsub.s32 %v628, %v631
    %vm633 = vcmp.lt.s32.totalorder %v632, 0
    %v634 = vsub.s32 0, %v632
    %v635 = vsel %vm633, %v634, %v632
    %v636 = vclz %v635
    %v637 = vsub.s32 %v636, 2
    %vm638 = vcmp.gt.s32.totalorder 0, %v637
    %v639 = vsel %vm638, 0, %v637
    %v640 = vsub.s32 32, %v639
    %v641 = vshll.u32 %v632, %v639
    %v642 = vshrl.u32 %v624, %v640
    %v643 = vor.u32 %v641, %v642
    %v644 = vsub.s32 4294967266, %v639
    %v645 = vadd.s32 %v644, 127
    %v646 = vshll.u32 %v645, 23
    %v647 = vor.u32 4788187, %v646
    %v648 = vand.u32 2147483647, %v647
    %v650 = vcvt.s32.f32 %v643
    %v651 = vmul.f32 %v650, %v648
    %v652 = vxor.u32 %v651, 2147483648
    %v653 = vsel %vm570, %v652, %v651
    %v654 = vsub.s32 4, %v630
    %v655 = vsel %vm570, %v654, %v630
    %v656 = vsel %vm569, %v233, %v653
    %v657 = vsel %vm569, 0, %v655
    %v658 = vcosq.f32.pop %v656
    %v659 = vsinq.f32.pop %v656
    %vm660 = vweird.f32 %v233
    %v661 = vadd.s32 %v657, 3
    %v662 = vand.u32 %v661, 3
    %vm663 = vcmp.lt.s32.totalorder %v662, 2
    %vm664 = vcmp.eq.s32.totalorder %v662, 0
    %v665 = vxor.u32 %v659, 2147483648
    %v666 = vsel %vm664, %v658, %v665
    %vm667 = vcmp.eq.s32.totalorder %v662, 2
    %v668 = vxor.u32 %v658, 2147483648
    %v669 = vsel %vm667, %v668, %v659
    %v670 = vsel %vm663, %v666, %v669
    %v671 = vsel %vm660, nan, %v670
    %v672 = vand.u32 2147483647, %v234
    %vm673 = vcmp.le.f32.partialorder %v672, 0.7853982
    %vm674 = vcmp.lt.s32.totalorder %v234, 0
    %v675 = vand.u32 %v234, 2139095040
    %v676 = vshrl.u32 %v675, 23
    %v677 = vsub.s32 %v676, 127
    %v678 = vand.u32 2147483647, %v234
    %v679 = vand.u32 %v678, 8388607
    %v680 = vor.u32 %v679, 8388608
    %v681 = vsub.s32 0, %v680
    %v682 = vadd.s32 %v677, 1
    %vm683 = vcmp.gt.s32.totalorder %v682, 0
    %v684 = vsel %vm683, %v682, 0
    %v685 = vshrl.u32 %v684, 5
    %v686 = vand.u32 %v684, 31
    %v687 = vsub.s32 32, %v686
    %v688 = vshrl.u32 683565275, %v687
    %v689 = vshll.u32 683565275, %v686
    %v690 = vshrl.u32 2475754826, %v687
    %v691 = vor.u32 %v689, %v690
    %v692 = vshll.u32 2475754826, %v686
    %v693 = vshrl.u32 2131351028, %v687
    %v694 = vor.u32 %v692, %v693
    %v695 = vshll.u32 2131351028, %v686
    %v696 = vshrl.u32 2102212464, %v687
    %v697 = vor.u32 %v695, %v696
    %v698 = vshll.u32 2102212464, %v686
    %v699 = vshrl.u32 920167782, %v687
    %v700 = vor.u32 %v698, %v699
    %v701 = vshll.u32 920167782, %v686
    %v702 = vshrl.u32 1326507024, %v687
    %v703 = vor.u32 %v701, %v702
    %vm704 = vcmp.lt.s32.totalorder %v685, 1
    %vm705 = vcmp.lt.s32.totalorder %v685, 2
    %vm706 = vcmp.lt.s32.totalorder %v685, 3
    %vm707 = vcmp.lt.s32.totalorder %v685, 4
    %v708 = vsel %vm704, %v688, %v691
    %v709 = vsel %vm707, %v697, 2102212464
    %v710 = vsel %vm706, %v694, %v709
    %v711 = vsel %vm705, %v708, %v710
    %v712 = vsel %vm704, %v691, %v694
    %v713 = vsel %vm707, %v700, 920167782
    %v714 = vsel %vm706, %v697, %v713
    %v715 = vsel %vm705, %v712, %v714
    %v716 = vsel %vm704, %v694, %v697
    %v717 = vsel %vm707, %v703, 1326507024
    %v718 = vsel %vm706, %v700, %v717
    %v719 = vsel %vm705, %v716, %v718
    %v720 = vshll.u32 %v680, 8
    %v721 = vmul.u32.u64.compose %v720, %v719
    %v722 = vextract.low.u32 %v721
    %v723 = vextract.high.u32 %v721
    %v724 = vmul.u32.u64.compose %v720, %v715
    %v725 = vextract.low.u32 %v724
    %v726 = vextract.high.u32 %v724
    %v727 = vmul.u32 %v720, %v711
    %v728 = vadd.s32 %v723, %v725
    %vm729 = vc.u32 %v723, %v725
    %v730 = vadd.s32 %v726, 1
    %v731 = vsel %vm729, %v730, %v726
    %v732 = vadd.s32 %v727, %v731
    %v733 = vadd.s32 %v732, 536870912
    %v734 = vshrl.u32 %v733, 30
    %v735 = vshll.u32 %v734, 30
    %v736 = vsub.s32 %v732, %v735
    %vm737 = vcmp.lt.s32.totalorder %v736, 0
    %v738 = vsub.s32 0, %v736
    %v739 = vsel %vm737, %v738, %v736
    %v740 = vclz %v739
    %v741 = vsub.s32 %v740, 2
    %vm742 = vcmp.gt.s32.totalorder 0, %v741
    %v743 = vsel %vm742, 0, %v741
    %v744 = vsub.s32 32, %v743
    %v745 = vshll.u32 %v736, %v743
    %v746 = vshrl.u32 %v728, %v744
    %v747 = vor.u32 %v745, %v746
    %v748 = vsub.s32 4294967266, %v743
    %v749 = vadd.s32 %v748, 127
    %v750 = vshll.u32 %v749, 23
    %v751 = vor.u32 4788187, %v750
    %v752 = vand.u32 2147483647, %v751
    %v754 = vcvt.s32.f32 %v747
    %v755 = vmul.f32 %v754, %v752
    %v756 = vxor.u32 %v755, 2147483648
    %v757 = vsel %vm674, %v756, %v755
    %v758 = vsub.s32 4, %v734
    %v759 = vsel %vm674, %v758, %v734
    %v760 = vsel %vm673, %v234, %v757
    %v761 = vsel %vm673, 0, %v759
    %v762 = vcosq.f32.pop %v760
    %v763 = vsinq.f32.pop %v760
    %vm764 = vweird.f32 %v234
    %v765 = vadd.s32 %v761, 3
    %v766 = vand.u32 %v765, 3
    %vm767 = vcmp.lt.s32.totalorder %v766, 2
    %vm768 = vcmp.eq.s32.totalorder %v766, 0
    %v769 = vxor.u32 %v763, 2147483648
    %v770 = vsel %vm768, %v762, %v769
    %vm771 = vcmp.eq.s32.totalorder %v766, 2
    %v772 = vxor.u32 %v762, 2147483648
    %v773 = vsel %vm771, %v772, %v763
    %v774 = vsel %vm767, %v770, %v773
    %v775 = vsel %vm764, nan, %v774
    %v776 = vand.u32 2147483647, %v235
    %vm777 = vcmp.le.f32.partialorder %v776, 0.7853982
    %vm778 = vcmp.lt.s32.totalorder %v235, 0
    %v779 = vand.u32 %v235, 2139095040
    %v780 = vshrl.u32 %v779, 23
    %v781 = vsub.s32 %v780, 127
    %v782 = vand.u32 2147483647, %v235
    %v783 = vand.u32 %v782, 8388607
    %v784 = vor.u32 %v783, 8388608
    %v785 = vsub.s32 0, %v784
    %v786 = vadd.s32 %v781, 1
    %vm787 = vcmp.gt.s32.totalorder %v786, 0
    %v788 = vsel %vm787, %v786, 0
    %v789 = vshrl.u32 %v788, 5
    %v790 = vand.u32 %v788, 31
    %v791 = vsub.s32 32, %v790
    %v792 = vshrl.u32 683565275, %v791
    %v793 = vshll.u32 683565275, %v790
    %v794 = vshrl.u32 2475754826, %v791
    %v795 = vor.u32 %v793, %v794
    %v796 = vshll.u32 2475754826, %v790
    %v797 = vshrl.u32 2131351028, %v791
    %v798 = vor.u32 %v796, %v797
    %v799 = vshll.u32 2131351028, %v790
    %v800 = vshrl.u32 2102212464, %v791
    %v801 = vor.u32 %v799, %v800
    %v802 = vshll.u32 2102212464, %v790
    %v803 = vshrl.u32 920167782, %v791
    %v804 = vor.u32 %v802, %v803
    %v805 = vshll.u32 920167782, %v790
    %v806 = vshrl.u32 1326507024, %v791
    %v807 = vor.u32 %v805, %v806
    %vm808 = vcmp.lt.s32.totalorder %v789, 1
    %vm809 = vcmp.lt.s32.totalorder %v789, 2
    %vm810 = vcmp.lt.s32.totalorder %v789, 3
    %vm811 = vcmp.lt.s32.totalorder %v789, 4
    %v812 = vsel %vm808, %v792, %v795
    %v813 = vsel %vm811, %v801, 2102212464
    %v814 = vsel %vm810, %v798, %v813
    %v815 = vsel %vm809, %v812, %v814
    %v816 = vsel %vm808, %v795, %v798
    %v817 = vsel %vm811, %v804, 920167782
    %v818 = vsel %vm810, %v801, %v817
    %v819 = vsel %vm809, %v816, %v818
    %v820 = vsel %vm808, %v798, %v801
    %v821 = vsel %vm811, %v807, 1326507024
    %v822 = vsel %vm810, %v804, %v821
    %v823 = vsel %vm809, %v820, %v822
    %v824 = vshll.u32 %v784, 8
    %v825 = vmul.u32.u64.compose %v824, %v823
    %v826 = vextract.low.u32 %v825
    %v827 = vextract.high.u32 %v825
    %v828 = vmul.u32.u64.compose %v824, %v819
    %v829 = vextract.low.u32 %v828
    %v830 = vextract.high.u32 %v828
    %v831 = vmul.u32 %v824, %v815
    %v832 = vadd.s32 %v827, %v829
    %vm833 = vc.u32 %v827, %v829
    %v834 = vadd.s32 %v830, 1
    %v835 = vsel %vm833, %v834, %v830
    %v836 = vadd.s32 %v831, %v835
    %v837 = vadd.s32 %v836, 536870912
    %v838 = vshrl.u32 %v837, 30
    %v839 = vshll.u32 %v838, 30
    %v840 = vsub.s32 %v836, %v839
    %vm841 = vcmp.lt.s32.totalorder %v840, 0
    %v842 = vsub.s32 0, %v840
    %v843 = vsel %vm841, %v842, %v840
    %v844 = vclz %v843
    %v845 = vsub.s32 %v844, 2
    %vm846 = vcmp.gt.s32.totalorder 0, %v845
    %v847 = vsel %vm846, 0, %v845
    %v848 = vsub.s32 32, %v847
    %v849 = vshll.u32 %v840, %v847
    %v850 = vshrl.u32 %v832, %v848
    %v851 = vor.u32 %v849, %v850
    %v852 = vsub.s32 4294967266, %v847
    %v853 = vadd.s32 %v852, 127
    %v854 = vshll.u32 %v853, 23
    %v855 = vor.u32 4788187, %v854
    %v856 = vand.u32 2147483647, %v855
    %v858 = vcvt.s32.f32 %v851
    %v859 = vmul.f32 %v858, %v856
    %v860 = vxor.u32 %v859, 2147483648
    %v861 = vsel %vm778, %v860, %v859
    %v862 = vsub.s32 4, %v838
    %v863 = vsel %vm778, %v862, %v838
    %v864 = vsel %vm777, %v235, %v861
    %v865 = vsel %vm777, 0, %v863
    %v866 = vcosq.f32.pop %v864
    %v867 = vsinq.f32.pop %v864
    %vm868 = vweird.f32 %v235
    %v869 = vadd.s32 %v865, 3
    %v870 = vand.u32 %v869, 3
    %vm871 = vcmp.lt.s32.totalorder %v870, 2
    %vm872 = vcmp.eq.s32.totalorder %v870, 0
    %v873 = vxor.u32 %v867, 2147483648
    %v874 = vsel %vm872, %v866, %v873
    %vm875 = vcmp.eq.s32.totalorder %v870, 2
    %v876 = vxor.u32 %v866, 2147483648
    %v877 = vsel %vm875, %v876, %v867
    %v878 = vsel %vm871, %v874, %v877
    %v879 = vsel %vm868, nan, %v878
    %v880 = vand.u32 2147483647, %v236
    %vm881 = vcmp.le.f32.partialorder %v880, 0.7853982
    %vm882 = vcmp.lt.s32.totalorder %v236, 0
    %v883 = vand.u32 %v236, 2139095040
    %v884 = vshrl.u32 %v883, 23
    %v885 = vsub.s32 %v884, 127
    %v886 = vand.u32 2147483647, %v236
    %v887 = vand.u32 %v886, 8388607
    %v888 = vor.u32 %v887, 8388608
    %v889 = vsub.s32 0, %v888
    %v890 = vadd.s32 %v885, 1
    %vm891 = vcmp.gt.s32.totalorder %v890, 0
    %v892 = vsel %vm891, %v890, 0
    %v893 = vshrl.u32 %v892, 5
    %v894 = vand.u32 %v892, 31
    %v895 = vsub.s32 32, %v894
    %v896 = vshrl.u32 683565275, %v895
    %v897 = vshll.u32 683565275, %v894
    %v898 = vshrl.u32 2475754826, %v895
    %v899 = vor.u32 %v897, %v898
    %v900 = vshll.u32 2475754826, %v894
    %v901 = vshrl.u32 2131351028, %v895
    %v902 = vor.u32 %v900, %v901
    %v903 = vshll.u32 2131351028, %v894
    %v904 = vshrl.u32 2102212464, %v895
    %v905 = vor.u32 %v903, %v904
    %v906 = vshll.u32 2102212464, %v894
    %v907 = vshrl.u32 920167782, %v895
    %v908 = vor.u32 %v906, %v907
    %v909 = vshll.u32 920167782, %v894
    %v910 = vshrl.u32 1326507024, %v895
    %v911 = vor.u32 %v909, %v910
    %vm912 = vcmp.lt.s32.totalorder %v893, 1
    %vm913 = vcmp.lt.s32.totalorder %v893, 2
    %vm914 = vcmp.lt.s32.totalorder %v893, 3
    %vm915 = vcmp.lt.s32.totalorder %v893, 4
    %v916 = vsel %vm912, %v896, %v899
    %v917 = vsel %vm915, %v905, 2102212464
    %v918 = vsel %vm914, %v902, %v917
    %v919 = vsel %vm913, %v916, %v918
    %v920 = vsel %vm912, %v899, %v902
    %v921 = vsel %vm915, %v908, 920167782
    %v922 = vsel %vm914, %v905, %v921
    %v923 = vsel %vm913, %v920, %v922
    %v924 = vsel %vm912, %v902, %v905
    %v925 = vsel %vm915, %v911, 1326507024
    %v926 = vsel %vm914, %v908, %v925
    %v927 = vsel %vm913, %v924, %v926
    %v928 = vshll.u32 %v888, 8
    %v929 = vmul.u32.u64.compose %v928, %v927
    %v930 = vextract.low.u32 %v929
    %v931 = vextract.high.u32 %v929
    %v932 = vmul.u32.u64.compose %v928, %v923
    %v933 = vextract.low.u32 %v932
    %v934 = vextract.high.u32 %v932
    %v935 = vmul.u32 %v928, %v919
    %v936 = vadd.s32 %v931, %v933
    %vm937 = vc.u32 %v931, %v933
    %v938 = vadd.s32 %v934, 1
    %v939 = vsel %vm937, %v938, %v934
    %v940 = vadd.s32 %v935, %v939
    %v941 = vadd.s32 %v940, 536870912
    %v942 = vshrl.u32 %v941, 30
    %v943 = vshll.u32 %v942, 30
    %v944 = vsub.s32 %v940, %v943
    %vm945 = vcmp.lt.s32.totalorder %v944, 0
    %v946 = vsub.s32 0, %v944
    %v947 = vsel %vm945, %v946, %v944
    %v948 = vclz %v947
    %v949 = vsub.s32 %v948, 2
    %vm950 = vcmp.gt.s32.totalorder 0, %v949
    %v951 = vsel %vm950, 0, %v949
    %v952 = vsub.s32 32, %v951
    %v953 = vshll.u32 %v944, %v951
    %v954 = vshrl.u32 %v936, %v952
    %v955 = vor.u32 %v953, %v954
    %v956 = vsub.s32 4294967266, %v951
    %v957 = vadd.s32 %v956, 127
    %v958 = vshll.u32 %v957, 23
    %v959 = vor.u32 4788187, %v958
    %v960 = vand.u32 2147483647, %v959
    %v962 = vcvt.s32.f32 %v955
    %v963 = vmul.f32 %v962, %v960
    %v964 = vxor.u32 %v963, 2147483648
    %v965 = vsel %vm882, %v964, %v963
    %v966 = vsub.s32 4, %v942
    %v967 = vsel %vm882, %v966, %v942
    %v968 = vsel %vm881, %v236, %v965
    %v969 = vsel %vm881, 0, %v967
    %v970 = vcosq.f32.pop %v968
    %v971 = vsinq.f32.pop %v968
    %vm972 = vweird.f32 %v236
    %v973 = vadd.s32 %v969, 3
    %v974 = vand.u32 %v973, 3
    %vm975 = vcmp.lt.s32.totalorder %v974, 2
    %vm976 = vcmp.eq.s32.totalorder %v974, 0
    %v977 = vxor.u32 %v971, 2147483648
    %v978 = vsel %vm976, %v970, %v977
    %vm979 = vcmp.eq.s32.totalorder %v974, 2
    %v980 = vxor.u32 %v970, 2147483648
    %v981 = vsel %vm979, %v980, %v971
    %v982 = vsel %vm975, %v978, %v981
    %v983 = vsel %vm972, nan, %v982
    %v984 = vand.u32 2147483647, %v237
    %vm985 = vcmp.le.f32.partialorder %v984, 0.7853982
    %vm986 = vcmp.lt.s32.totalorder %v237, 0
    %v987 = vand.u32 %v237, 2139095040
    %v988 = vshrl.u32 %v987, 23
    %v989 = vsub.s32 %v988, 127
    %v990 = vand.u32 2147483647, %v237
    %v991 = vand.u32 %v990, 8388607
    %v992 = vor.u32 %v991, 8388608
    %v993 = vsub.s32 0, %v992
    %v994 = vadd.s32 %v989, 1
    %vm995 = vcmp.gt.s32.totalorder %v994, 0
    %v996 = vsel %vm995, %v994, 0
    %v997 = vshrl.u32 %v996, 5
    %v998 = vand.u32 %v996, 31
    %v999 = vsub.s32 32, %v998
    %v1000 = vshrl.u32 683565275, %v999
    %v1001 = vshll.u32 683565275, %v998
    %v1002 = vshrl.u32 2475754826, %v999
    %v1003 = vor.u32 %v1001, %v1002
    %v1004 = vshll.u32 2475754826, %v998
    %v1005 = vshrl.u32 2131351028, %v999
    %v1006 = vor.u32 %v1004, %v1005
    %v1007 = vshll.u32 2131351028, %v998
    %v1008 = vshrl.u32 2102212464, %v999
    %v1009 = vor.u32 %v1007, %v1008
    %v1010 = vshll.u32 2102212464, %v998
    %v1011 = vshrl.u32 920167782, %v999
    %v1012 = vor.u32 %v1010, %v1011
    %v1013 = vshll.u32 920167782, %v998
    %v1014 = vshrl.u32 1326507024, %v999
    %v1015 = vor.u32 %v1013, %v1014
    %vm1016 = vcmp.lt.s32.totalorder %v997, 1
    %vm1017 = vcmp.lt.s32.totalorder %v997, 2
    %vm1018 = vcmp.lt.s32.totalorder %v997, 3
    %vm1019 = vcmp.lt.s32.totalorder %v997, 4
    %v1020 = vsel %vm1016, %v1000, %v1003
    %v1021 = vsel %vm1019, %v1009, 2102212464
    %v1022 = vsel %vm1018, %v1006, %v1021
    %v1023 = vsel %vm1017, %v1020, %v1022
    %v1024 = vsel %vm1016, %v1003, %v1006
    %v1025 = vsel %vm1019, %v1012, 920167782
    %v1026 = vsel %vm1018, %v1009, %v1025
    %v1027 = vsel %vm1017, %v1024, %v1026
    %v1028 = vsel %vm1016, %v1006, %v1009
    %v1029 = vsel %vm1019, %v1015, 1326507024
    %v1030 = vsel %vm1018, %v1012, %v1029
    %v1031 = vsel %vm1017, %v1028, %v1030
    %v1032 = vshll.u32 %v992, 8
    %v1033 = vmul.u32.u64.compose %v1032, %v1031
    %v1034 = vextract.low.u32 %v1033
    %v1035 = vextract.high.u32 %v1033
    %v1036 = vmul.u32.u64.compose %v1032, %v1027
    %v1037 = vextract.low.u32 %v1036
    %v1038 = vextract.high.u32 %v1036
    %v1039 = vmul.u32 %v1032, %v1023
    %v1040 = vadd.s32 %v1035, %v1037
    %vm1041 = vc.u32 %v1035, %v1037
    %v1042 = vadd.s32 %v1038, 1
    %v1043 = vsel %vm1041, %v1042, %v1038
    %v1044 = vadd.s32 %v1039, %v1043
    %v1045 = vadd.s32 %v1044, 536870912
    %v1046 = vshrl.u32 %v1045, 30
    %v1047 = vshll.u32 %v1046, 30
    %v1048 = vsub.s32 %v1044, %v1047
    %vm1049 = vcmp.lt.s32.totalorder %v1048, 0
    %v1050 = vsub.s32 0, %v1048
    %v1051 = vsel %vm1049, %v1050, %v1048
    %v1052 = vclz %v1051
    %v1053 = vsub.s32 %v1052, 2
    %vm1054 = vcmp.gt.s32.totalorder 0, %v1053
    %v1055 = vsel %vm1054, 0, %v1053
    %v1056 = vsub.s32 32, %v1055
    %v1057 = vshll.u32 %v1048, %v1055
    %v1058 = vshrl.u32 %v1040, %v1056
    %v1059 = vor.u32 %v1057, %v1058
    %v1060 = vsub.s32 4294967266, %v1055
    %v1061 = vadd.s32 %v1060, 127
    %v1062 = vshll.u32 %v1061, 23
    %v1063 = vor.u32 4788187, %v1062
    %v1064 = vand.u32 2147483647, %v1063
    %v1066 = vcvt.s32.f32 %v1059
    %v1067 = vmul.f32 %v1066, %v1064
    %v1068 = vxor.u32 %v1067, 2147483648
    %v1069 = vsel %vm986, %v1068, %v1067
    %v1070 = vsub.s32 4, %v1046
    %v1071 = vsel %vm986, %v1070, %v1046
    %v1072 = vsel %vm985, %v237, %v1069
    %v1073 = vsel %vm985, 0, %v1071
    %v1074 = vcosq.f32.pop %v1072
    %v1075 = vsinq.f32.pop %v1072
    %vm1076 = vweird.f32 %v237
    %v1077 = vadd.s32 %v1073, 3
    %v1078 = vand.u32 %v1077, 3
    %vm1079 = vcmp.lt.s32.totalorder %v1078, 2
    %vm1080 = vcmp.eq.s32.totalorder %v1078, 0
    %v1081 = vxor.u32 %v1075, 2147483648
    %v1082 = vsel %vm1080, %v1074, %v1081
    %vm1083 = vcmp.eq.s32.totalorder %v1078, 2
    %v1084 = vxor.u32 %v1074, 2147483648
    %v1085 = vsel %vm1083, %v1084, %v1075
    %v1086 = vsel %vm1079, %v1082, %v1085
    %v1087 = vsel %vm1076, nan, %v1086
    %v1088 = vand.u32 2147483647, %v238
    %vm1089 = vcmp.le.f32.partialorder %v1088, 0.7853982
    %vm1090 = vcmp.lt.s32.totalorder %v238, 0
    %v1091 = vand.u32 %v238, 2139095040
    %v1092 = vshrl.u32 %v1091, 23
    %v1093 = vsub.s32 %v1092, 127
    %v1094 = vand.u32 2147483647, %v238
    %v1095 = vand.u32 %v1094, 8388607
    %v1096 = vor.u32 %v1095, 8388608
    %v1097 = vsub.s32 0, %v1096
    %v1098 = vadd.s32 %v1093, 1
    %vm1099 = vcmp.gt.s32.totalorder %v1098, 0
    %v1100 = vsel %vm1099, %v1098, 0
    %v1101 = vshrl.u32 %v1100, 5
    %v1102 = vand.u32 %v1100, 31
    %v1103 = vsub.s32 32, %v1102
    %v1104 = vshrl.u32 683565275, %v1103
    %v1105 = vshll.u32 683565275, %v1102
    %v1106 = vshrl.u32 2475754826, %v1103
    %v1107 = vor.u32 %v1105, %v1106
    %v1108 = vshll.u32 2475754826, %v1102
    %v1109 = vshrl.u32 2131351028, %v1103
    %v1110 = vor.u32 %v1108, %v1109
    %v1111 = vshll.u32 2131351028, %v1102
    %v1112 = vshrl.u32 2102212464, %v1103
    %v1113 = vor.u32 %v1111, %v1112
    %v1114 = vshll.u32 2102212464, %v1102
    %v1115 = vshrl.u32 920167782, %v1103
    %v1116 = vor.u32 %v1114, %v1115
    %v1117 = vshll.u32 920167782, %v1102
    %v1118 = vshrl.u32 1326507024, %v1103
    %v1119 = vor.u32 %v1117, %v1118
    %vm1120 = vcmp.lt.s32.totalorder %v1101, 1
    %vm1121 = vcmp.lt.s32.totalorder %v1101, 2
    %vm1122 = vcmp.lt.s32.totalorder %v1101, 3
    %vm1123 = vcmp.lt.s32.totalorder %v1101, 4
    %v1124 = vsel %vm1120, %v1104, %v1107
    %v1125 = vsel %vm1123, %v1113, 2102212464
    %v1126 = vsel %vm1122, %v1110, %v1125
    %v1127 = vsel %vm1121, %v1124, %v1126
    %v1128 = vsel %vm1120, %v1107, %v1110
    %v1129 = vsel %vm1123, %v1116, 920167782
    %v1130 = vsel %vm1122, %v1113, %v1129
    %v1131 = vsel %vm1121, %v1128, %v1130
    %v1132 = vsel %vm1120, %v1110, %v1113
    %v1133 = vsel %vm1123, %v1119, 1326507024
    %v1134 = vsel %vm1122, %v1116, %v1133
    %v1135 = vsel %vm1121, %v1132, %v1134
    %v1136 = vshll.u32 %v1096, 8
    %v1137 = vmul.u32.u64.compose %v1136, %v1135
    %v1138 = vextract.low.u32 %v1137
    %v1139 = vextract.high.u32 %v1137
    %v1140 = vmul.u32.u64.compose %v1136, %v1131
    %v1141 = vextract.low.u32 %v1140
    %v1142 = vextract.high.u32 %v1140
    %v1143 = vmul.u32 %v1136, %v1127
    %v1144 = vadd.s32 %v1139, %v1141
    %vm1145 = vc.u32 %v1139, %v1141
    %v1146 = vadd.s32 %v1142, 1
    %v1147 = vsel %vm1145, %v1146, %v1142
    %v1148 = vadd.s32 %v1143, %v1147
    %v1149 = vadd.s32 %v1148, 536870912
    %v1150 = vshrl.u32 %v1149, 30
    %v1151 = vshll.u32 %v1150, 30
    %v1152 = vsub.s32 %v1148, %v1151
    %vm1153 = vcmp.lt.s32.totalorder %v1152, 0
    %v1154 = vsub.s32 0, %v1152
    %v1155 = vsel %vm1153, %v1154, %v1152
    %v1156 = vclz %v1155
    %v1157 = vsub.s32 %v1156, 2
    %vm1158 = vcmp.gt.s32.totalorder 0, %v1157
    %v1159 = vsel %vm1158, 0, %v1157
    %v1160 = vsub.s32 32, %v1159
    %v1161 = vshll.u32 %v1152, %v1159
    %v1162 = vshrl.u32 %v1144, %v1160
    %v1163 = vor.u32 %v1161, %v1162
    %v1164 = vsub.s32 4294967266, %v1159
    %v1165 = vadd.s32 %v1164, 127
    %v1166 = vshll.u32 %v1165, 23
    %v1167 = vor.u32 4788187, %v1166
    %v1168 = vand.u32 2147483647, %v1167
    %v1170 = vcvt.s32.f32 %v1163
    %v1171 = vmul.f32 %v1170, %v1168
    %v1172 = vxor.u32 %v1171, 2147483648
    %v1173 = vsel %vm1090, %v1172, %v1171
    %v1174 = vsub.s32 4, %v1150
    %v1175 = vsel %vm1090, %v1174, %v1150
    %v1176 = vsel %vm1089, %v238, %v1173
    %v1177 = vsel %vm1089, 0, %v1175
    %v1178 = vcosq.f32.pop %v1176
    %v1179 = vsinq.f32.pop %v1176
    %vm1180 = vweird.f32 %v238
    %v1181 = vadd.s32 %v1177, 3
    %v1182 = vand.u32 %v1181, 3
    %vm1183 = vcmp.lt.s32.totalorder %v1182, 2
    %vm1184 = vcmp.eq.s32.totalorder %v1182, 0
    %v1185 = vxor.u32 %v1179, 2147483648
    %v1186 = vsel %vm1184, %v1178, %v1185
    %vm1187 = vcmp.eq.s32.totalorder %v1182, 2
    %v1188 = vxor.u32 %v1178, 2147483648
    %v1189 = vsel %vm1187, %v1188, %v1179
    %v1190 = vsel %vm1183, %v1186, %v1189
    %v1191 = vsel %vm1180, nan, %v1190
    %v1192 = vand.u32 2147483647, %v239
    %vm1193 = vcmp.le.f32.partialorder %v1192, 0.7853982
    %vm1194 = vcmp.lt.s32.totalorder %v239, 0
    %v1195 = vand.u32 %v239, 2139095040
    %v1196 = vshrl.u32 %v1195, 23
    %v1197 = vsub.s32 %v1196, 127
    %v1198 = vand.u32 2147483647, %v239
    %v1199 = vand.u32 %v1198, 8388607
    %v1200 = vor.u32 %v1199, 8388608
    %v1201 = vsub.s32 0, %v1200
    %v1202 = vadd.s32 %v1197, 1
    %vm1203 = vcmp.gt.s32.totalorder %v1202, 0
    %v1204 = vsel %vm1203, %v1202, 0
    %v1205 = vshrl.u32 %v1204, 5
    %v1206 = vand.u32 %v1204, 31
    %v1207 = vsub.s32 32, %v1206
    %v1208 = vshrl.u32 683565275, %v1207
    %v1209 = vshll.u32 683565275, %v1206
    %v1210 = vshrl.u32 2475754826, %v1207
    %v1211 = vor.u32 %v1209, %v1210
    %v1212 = vshll.u32 2475754826, %v1206
    %v1213 = vshrl.u32 2131351028, %v1207
    %v1214 = vor.u32 %v1212, %v1213
    %v1215 = vshll.u32 2131351028, %v1206
    %v1216 = vshrl.u32 2102212464, %v1207
    %v1217 = vor.u32 %v1215, %v1216
    %v1218 = vshll.u32 2102212464, %v1206
    %v1219 = vshrl.u32 920167782, %v1207
    %v1220 = vor.u32 %v1218, %v1219
    %v1221 = vshll.u32 920167782, %v1206
    %v1222 = vshrl.u32 1326507024, %v1207
    %v1223 = vor.u32 %v1221, %v1222
    %vm1224 = vcmp.lt.s32.totalorder %v1205, 1
    %vm1225 = vcmp.lt.s32.totalorder %v1205, 2
    %vm1226 = vcmp.lt.s32.totalorder %v1205, 3
    %vm1227 = vcmp.lt.s32.totalorder %v1205, 4
    %v1228 = vsel %vm1224, %v1208, %v1211
    %v1229 = vsel %vm1227, %v1217, 2102212464
    %v1230 = vsel %vm1226, %v1214, %v1229
    %v1231 = vsel %vm1225, %v1228, %v1230
    %v1232 = vsel %vm1224, %v1211, %v1214
    %v1233 = vsel %vm1227, %v1220, 920167782
    %v1234 = vsel %vm1226, %v1217, %v1233
    %v1235 = vsel %vm1225, %v1232, %v1234
    %v1236 = vsel %vm1224, %v1214, %v1217
    %v1237 = vsel %vm1227, %v1223, 1326507024
    %v1238 = vsel %vm1226, %v1220, %v1237
    %v1239 = vsel %vm1225, %v1236, %v1238
    %v1240 = vshll.u32 %v1200, 8
    %v1241 = vmul.u32.u64.compose %v1240, %v1239
    %v1242 = vextract.low.u32 %v1241
    %v1243 = vextract.high.u32 %v1241
    %v1244 = vmul.u32.u64.compose %v1240, %v1235
    %v1245 = vextract.low.u32 %v1244
    %v1246 = vextract.high.u32 %v1244
    %v1247 = vmul.u32 %v1240, %v1231
    %v1248 = vadd.s32 %v1243, %v1245
    %vm1249 = vc.u32 %v1243, %v1245
    %v1250 = vadd.s32 %v1246, 1
    %v1251 = vsel %vm1249, %v1250, %v1246
    %v1252 = vadd.s32 %v1247, %v1251
    %v1253 = vadd.s32 %v1252, 536870912
    %v1254 = vshrl.u32 %v1253, 30
    %v1255 = vshll.u32 %v1254, 30
    %v1256 = vsub.s32 %v1252, %v1255
    %vm1257 = vcmp.lt.s32.totalorder %v1256, 0
    %v1258 = vsub.s32 0, %v1256
    %v1259 = vsel %vm1257, %v1258, %v1256
    %v1260 = vclz %v1259
    %v1261 = vsub.s32 %v1260, 2
    %vm1262 = vcmp.gt.s32.totalorder 0, %v1261
    %v1263 = vsel %vm1262, 0, %v1261
    %v1264 = vsub.s32 32, %v1263
    %v1265 = vshll.u32 %v1256, %v1263
    %v1266 = vshrl.u32 %v1248, %v1264
    %v1267 = vor.u32 %v1265, %v1266
    %v1268 = vsub.s32 4294967266, %v1263
    %v1269 = vadd.s32 %v1268, 127
    %v1270 = vshll.u32 %v1269, 23
    %v1271 = vor.u32 4788187, %v1270
    %v1272 = vand.u32 2147483647, %v1271
    %v1274 = vcvt.s32.f32 %v1267
    %v1275 = vmul.f32 %v1274, %v1272
    %v1276 = vxor.u32 %v1275, 2147483648
    %v1277 = vsel %vm1194, %v1276, %v1275
    %v1278 = vsub.s32 4, %v1254
    %v1279 = vsel %vm1194, %v1278, %v1254
    %v1280 = vsel %vm1193, %v239, %v1277
    %v1281 = vsel %vm1193, 0, %v1279
    %v1282 = vcosq.f32.pop %v1280
    %v1283 = vsinq.f32.pop %v1280
    %vm1284 = vweird.f32 %v239
    %v1285 = vadd.s32 %v1281, 3
    %v1286 = vand.u32 %v1285, 3
    %vm1287 = vcmp.lt.s32.totalorder %v1286, 2
    %vm1288 = vcmp.eq.s32.totalorder %v1286, 0
    %v1289 = vxor.u32 %v1283, 2147483648
    %v1290 = vsel %vm1288, %v1282, %v1289
    %vm1291 = vcmp.eq.s32.totalorder %v1286, 2
    %v1292 = vxor.u32 %v1282, 2147483648
    %v1293 = vsel %vm1291, %v1292, %v1283
    %v1294 = vsel %vm1287, %v1290, %v1293
    %v1295 = vsel %vm1284, nan, %v1294
    %v1296 = vand.u32 2147483647, %v240
    %vm1297 = vcmp.le.f32.partialorder %v1296, 0.7853982
    %vm1298 = vcmp.lt.s32.totalorder %v240, 0
    %v1299 = vand.u32 %v240, 2139095040
    %v1300 = vshrl.u32 %v1299, 23
    %v1301 = vsub.s32 %v1300, 127
    %v1302 = vand.u32 2147483647, %v240
    %v1303 = vand.u32 %v1302, 8388607
    %v1304 = vor.u32 %v1303, 8388608
    %v1305 = vsub.s32 0, %v1304
    %v1306 = vadd.s32 %v1301, 1
    %vm1307 = vcmp.gt.s32.totalorder %v1306, 0
    %v1308 = vsel %vm1307, %v1306, 0
    %v1309 = vshrl.u32 %v1308, 5
    %v1310 = vand.u32 %v1308, 31
    %v1311 = vsub.s32 32, %v1310
    %v1312 = vshrl.u32 683565275, %v1311
    %v1313 = vshll.u32 683565275, %v1310
    %v1314 = vshrl.u32 2475754826, %v1311
    %v1315 = vor.u32 %v1313, %v1314
    %v1316 = vshll.u32 2475754826, %v1310
    %v1317 = vshrl.u32 2131351028, %v1311
    %v1318 = vor.u32 %v1316, %v1317
    %v1319 = vshll.u32 2131351028, %v1310
    %v1320 = vshrl.u32 2102212464, %v1311
    %v1321 = vor.u32 %v1319, %v1320
    %v1322 = vshll.u32 2102212464, %v1310
    %v1323 = vshrl.u32 920167782, %v1311
    %v1324 = vor.u32 %v1322, %v1323
    %v1325 = vshll.u32 920167782, %v1310
    %v1326 = vshrl.u32 1326507024, %v1311
    %v1327 = vor.u32 %v1325, %v1326
    %vm1328 = vcmp.lt.s32.totalorder %v1309, 1
    %vm1329 = vcmp.lt.s32.totalorder %v1309, 2
    %vm1330 = vcmp.lt.s32.totalorder %v1309, 3
    %vm1331 = vcmp.lt.s32.totalorder %v1309, 4
    %v1332 = vsel %vm1328, %v1312, %v1315
    %v1333 = vsel %vm1331, %v1321, 2102212464
    %v1334 = vsel %vm1330, %v1318, %v1333
    %v1335 = vsel %vm1329, %v1332, %v1334
    %v1336 = vsel %vm1328, %v1315, %v1318
    %v1337 = vsel %vm1331, %v1324, 920167782
    %v1338 = vsel %vm1330, %v1321, %v1337
    %v1339 = vsel %vm1329, %v1336, %v1338
    %v1340 = vsel %vm1328, %v1318, %v1321
    %v1341 = vsel %vm1331, %v1327, 1326507024
    %v1342 = vsel %vm1330, %v1324, %v1341
    %v1343 = vsel %vm1329, %v1340, %v1342
    %v1344 = vshll.u32 %v1304, 8
    %v1345 = vmul.u32.u64.compose %v1344, %v1343
    %v1346 = vextract.low.u32 %v1345
    %v1347 = vextract.high.u32 %v1345
    %v1348 = vmul.u32.u64.compose %v1344, %v1339
    %v1349 = vextract.low.u32 %v1348
    %v1350 = vextract.high.u32 %v1348
    %v1351 = vmul.u32 %v1344, %v1335
    %v1352 = vadd.s32 %v1347, %v1349
    %vm1353 = vc.u32 %v1347, %v1349
    %v1354 = vadd.s32 %v1350, 1
    %v1355 = vsel %vm1353, %v1354, %v1350
    %v1356 = vadd.s32 %v1351, %v1355
    %v1357 = vadd.s32 %v1356, 536870912
    %v1358 = vshrl.u32 %v1357, 30
    %v1359 = vshll.u32 %v1358, 30
    %v1360 = vsub.s32 %v1356, %v1359
    %vm1361 = vcmp.lt.s32.totalorder %v1360, 0
    %v1362 = vsub.s32 0, %v1360
    %v1363 = vsel %vm1361, %v1362, %v1360
    %v1364 = vclz %v1363
    %v1365 = vsub.s32 %v1364, 2
    %vm1366 = vcmp.gt.s32.totalorder 0, %v1365
    %v1367 = vsel %vm1366, 0, %v1365
    %v1368 = vsub.s32 32, %v1367
    %v1369 = vshll.u32 %v1360, %v1367
    %v1370 = vshrl.u32 %v1352, %v1368
    %v1371 = vor.u32 %v1369, %v1370
    %v1372 = vsub.s32 4294967266, %v1367
    %v1373 = vadd.s32 %v1372, 127
    %v1374 = vshll.u32 %v1373, 23
    %v1375 = vor.u32 4788187, %v1374
    %v1376 = vand.u32 2147483647, %v1375
    %v1378 = vcvt.s32.f32 %v1371
    %v1379 = vmul.f32 %v1378, %v1376
    %v1380 = vxor.u32 %v1379, 2147483648
    %v1381 = vsel %vm1298, %v1380, %v1379
    %v1382 = vsub.s32 4, %v1358
    %v1383 = vsel %vm1298, %v1382, %v1358
    %v1384 = vsel %vm1297, %v240, %v1381
    %v1385 = vsel %vm1297, 0, %v1383
    %v1386 = vcosq.f32.pop %v1384
    %v1387 = vsinq.f32.pop %v1384
    %vm1388 = vweird.f32 %v240
    %v1389 = vadd.s32 %v1385, 3
    %v1390 = vand.u32 %v1389, 3
    %vm1391 = vcmp.lt.s32.totalorder %v1390, 2
    %vm1392 = vcmp.eq.s32.totalorder %v1390, 0
    %v1393 = vxor.u32 %v1387, 2147483648
    %v1394 = vsel %vm1392, %v1386, %v1393
    %vm1395 = vcmp.eq.s32.totalorder %v1390, 2
    %v1396 = vxor.u32 %v1386, 2147483648
    %v1397 = vsel %vm1395, %v1396, %v1387
    %v1398 = vsel %vm1391, %v1394, %v1397
    %v1399 = vsel %vm1388, nan, %v1398
    %v1400 = vand.u32 2147483647, %v241
    %vm1401 = vcmp.le.f32.partialorder %v1400, 0.7853982
    %vm1402 = vcmp.lt.s32.totalorder %v241, 0
    %v1403 = vand.u32 %v241, 2139095040
    %v1404 = vshrl.u32 %v1403, 23
    %v1405 = vsub.s32 %v1404, 127
    %v1406 = vand.u32 2147483647, %v241
    %v1407 = vand.u32 %v1406, 8388607
    %v1408 = vor.u32 %v1407, 8388608
    %v1409 = vsub.s32 0, %v1408
    %v1410 = vadd.s32 %v1405, 1
    %vm1411 = vcmp.gt.s32.totalorder %v1410, 0
    %v1412 = vsel %vm1411, %v1410, 0
    %v1413 = vshrl.u32 %v1412, 5
    %v1414 = vand.u32 %v1412, 31
    %v1415 = vsub.s32 32, %v1414
    %v1416 = vshrl.u32 683565275, %v1415
    %v1417 = vshll.u32 683565275, %v1414
    %v1418 = vshrl.u32 2475754826, %v1415
    %v1419 = vor.u32 %v1417, %v1418
    %v1420 = vshll.u32 2475754826, %v1414
    %v1421 = vshrl.u32 2131351028, %v1415
    %v1422 = vor.u32 %v1420, %v1421
    %v1423 = vshll.u32 2131351028, %v1414
    %v1424 = vshrl.u32 2102212464, %v1415
    %v1425 = vor.u32 %v1423, %v1424
    %v1426 = vshll.u32 2102212464, %v1414
    %v1427 = vshrl.u32 920167782, %v1415
    %v1428 = vor.u32 %v1426, %v1427
    %v1429 = vshll.u32 920167782, %v1414
    %v1430 = vshrl.u32 1326507024, %v1415
    %v1431 = vor.u32 %v1429, %v1430
    %vm1432 = vcmp.lt.s32.totalorder %v1413, 1
    %vm1433 = vcmp.lt.s32.totalorder %v1413, 2
    %vm1434 = vcmp.lt.s32.totalorder %v1413, 3
    %vm1435 = vcmp.lt.s32.totalorder %v1413, 4
    %v1436 = vsel %vm1432, %v1416, %v1419
    %v1437 = vsel %vm1435, %v1425, 2102212464
    %v1438 = vsel %vm1434, %v1422, %v1437
    %v1439 = vsel %vm1433, %v1436, %v1438
    %v1440 = vsel %vm1432, %v1419, %v1422
    %v1441 = vsel %vm1435, %v1428, 920167782
    %v1442 = vsel %vm1434, %v1425, %v1441
    %v1443 = vsel %vm1433, %v1440, %v1442
    %v1444 = vsel %vm1432, %v1422, %v1425
    %v1445 = vsel %vm1435, %v1431, 1326507024
    %v1446 = vsel %vm1434, %v1428, %v1445
    %v1447 = vsel %vm1433, %v1444, %v1446
    %v1448 = vshll.u32 %v1408, 8
    %v1449 = vmul.u32.u64.compose %v1448, %v1447
    %v1450 = vextract.low.u32 %v1449
    %v1451 = vextract.high.u32 %v1449
    %v1452 = vmul.u32.u64.compose %v1448, %v1443
    %v1453 = vextract.low.u32 %v1452
    %v1454 = vextract.high.u32 %v1452
    %v1455 = vmul.u32 %v1448, %v1439
    %v1456 = vadd.s32 %v1451, %v1453
    %vm1457 = vc.u32 %v1451, %v1453
    %v1458 = vadd.s32 %v1454, 1
    %v1459 = vsel %vm1457, %v1458, %v1454
    %v1460 = vadd.s32 %v1455, %v1459
    %v1461 = vadd.s32 %v1460, 536870912
    %v1462 = vshrl.u32 %v1461, 30
    %v1463 = vshll.u32 %v1462, 30
    %v1464 = vsub.s32 %v1460, %v1463
    %vm1465 = vcmp.lt.s32.totalorder %v1464, 0
    %v1466 = vsub.s32 0, %v1464
    %v1467 = vsel %vm1465, %v1466, %v1464
    %v1468 = vclz %v1467
    %v1469 = vsub.s32 %v1468, 2
    %vm1470 = vcmp.gt.s32.totalorder 0, %v1469
    %v1471 = vsel %vm1470, 0, %v1469
    %v1472 = vsub.s32 32, %v1471
    %v1473 = vshll.u32 %v1464, %v1471
    %v1474 = vshrl.u32 %v1456, %v1472
    %v1475 = vor.u32 %v1473, %v1474
    %v1476 = vsub.s32 4294967266, %v1471
    %v1477 = vadd.s32 %v1476, 127
    %v1478 = vshll.u32 %v1477, 23
    %v1479 = vor.u32 4788187, %v1478
    %v1480 = vand.u32 2147483647, %v1479
    %v1482 = vcvt.s32.f32 %v1475
    %v1483 = vmul.f32 %v1482, %v1480
    %v1484 = vxor.u32 %v1483, 2147483648
    %v1485 = vsel %vm1402, %v1484, %v1483
    %v1486 = vsub.s32 4, %v1462
    %v1487 = vsel %vm1402, %v1486, %v1462
    %v1488 = vsel %vm1401, %v241, %v1485
    %v1489 = vsel %vm1401, 0, %v1487
    %v1490 = vcosq.f32.pop %v1488
    %v1491 = vsinq.f32.pop %v1488
    %vm1492 = vweird.f32 %v241
    %v1493 = vadd.s32 %v1489, 3
    %v1494 = vand.u32 %v1493, 3
    %vm1495 = vcmp.lt.s32.totalorder %v1494, 2
    %vm1496 = vcmp.eq.s32.totalorder %v1494, 0
    %v1497 = vxor.u32 %v1491, 2147483648
    %v1498 = vsel %vm1496, %v1490, %v1497
    %vm1499 = vcmp.eq.s32.totalorder %v1494, 2
    %v1500 = vxor.u32 %v1490, 2147483648
    %v1501 = vsel %vm1499, %v1500, %v1491
    %v1502 = vsel %vm1495, %v1498, %v1501
    %v1503 = vsel %vm1492, nan, %v1502
    %v1504 = vand.u32 2147483647, %v242
    %vm1505 = vcmp.le.f32.partialorder %v1504, 0.7853982
    %vm1506 = vcmp.lt.s32.totalorder %v242, 0
    %v1507 = vand.u32 %v242, 2139095040
    %v1508 = vshrl.u32 %v1507, 23
    %v1509 = vsub.s32 %v1508, 127
    %v1510 = vand.u32 2147483647, %v242
    %v1511 = vand.u32 %v1510, 8388607
    %v1512 = vor.u32 %v1511, 8388608
    %v1513 = vsub.s32 0, %v1512
    %v1514 = vadd.s32 %v1509, 1
    %vm1515 = vcmp.gt.s32.totalorder %v1514, 0
    %v1516 = vsel %vm1515, %v1514, 0
    %v1517 = vshrl.u32 %v1516, 5
    %v1518 = vand.u32 %v1516, 31
    %v1519 = vsub.s32 32, %v1518
    %v1520 = vshrl.u32 683565275, %v1519
    %v1521 = vshll.u32 683565275, %v1518
    %v1522 = vshrl.u32 2475754826, %v1519
    %v1523 = vor.u32 %v1521, %v1522
    %v1524 = vshll.u32 2475754826, %v1518
    %v1525 = vshrl.u32 2131351028, %v1519
    %v1526 = vor.u32 %v1524, %v1525
    %v1527 = vshll.u32 2131351028, %v1518
    %v1528 = vshrl.u32 2102212464, %v1519
    %v1529 = vor.u32 %v1527, %v1528
    %v1530 = vshll.u32 2102212464, %v1518
    %v1531 = vshrl.u32 920167782, %v1519
    %v1532 = vor.u32 %v1530, %v1531
    %v1533 = vshll.u32 920167782, %v1518
    %v1534 = vshrl.u32 1326507024, %v1519
    %v1535 = vor.u32 %v1533, %v1534
    %vm1536 = vcmp.lt.s32.totalorder %v1517, 1
    %vm1537 = vcmp.lt.s32.totalorder %v1517, 2
    %vm1538 = vcmp.lt.s32.totalorder %v1517, 3
    %vm1539 = vcmp.lt.s32.totalorder %v1517, 4
    %v1540 = vsel %vm1536, %v1520, %v1523
    %v1541 = vsel %vm1539, %v1529, 2102212464
    %v1542 = vsel %vm1538, %v1526, %v1541
    %v1543 = vsel %vm1537, %v1540, %v1542
    %v1544 = vsel %vm1536, %v1523, %v1526
    %v1545 = vsel %vm1539, %v1532, 920167782
    %v1546 = vsel %vm1538, %v1529, %v1545
    %v1547 = vsel %vm1537, %v1544, %v1546
    %v1548 = vsel %vm1536, %v1526, %v1529
    %v1549 = vsel %vm1539, %v1535, 1326507024
    %v1550 = vsel %vm1538, %v1532, %v1549
    %v1551 = vsel %vm1537, %v1548, %v1550
    %v1552 = vshll.u32 %v1512, 8
    %v1553 = vmul.u32.u64.compose %v1552, %v1551
    %v1554 = vextract.low.u32 %v1553
    %v1555 = vextract.high.u32 %v1553
    %v1556 = vmul.u32.u64.compose %v1552, %v1547
    %v1557 = vextract.low.u32 %v1556
    %v1558 = vextract.high.u32 %v1556
    %v1559 = vmul.u32 %v1552, %v1543
    %v1560 = vadd.s32 %v1555, %v1557
    %vm1561 = vc.u32 %v1555, %v1557
    %v1562 = vadd.s32 %v1558, 1
    %v1563 = vsel %vm1561, %v1562, %v1558
    %v1564 = vadd.s32 %v1559, %v1563
    %v1565 = vadd.s32 %v1564, 536870912
    %v1566 = vshrl.u32 %v1565, 30
    %v1567 = vshll.u32 %v1566, 30
    %v1568 = vsub.s32 %v1564, %v1567
    %vm1569 = vcmp.lt.s32.totalorder %v1568, 0
    %v1570 = vsub.s32 0, %v1568
    %v1571 = vsel %vm1569, %v1570, %v1568
    %v1572 = vclz %v1571
    %v1573 = vsub.s32 %v1572, 2
    %vm1574 = vcmp.gt.s32.totalorder 0, %v1573
    %v1575 = vsel %vm1574, 0, %v1573
    %v1576 = vsub.s32 32, %v1575
    %v1577 = vshll.u32 %v1568, %v1575
    %v1578 = vshrl.u32 %v1560, %v1576
    %v1579 = vor.u32 %v1577, %v1578
    %v1580 = vsub.s32 4294967266, %v1575
    %v1581 = vadd.s32 %v1580, 127
    %v1582 = vshll.u32 %v1581, 23
    %v1583 = vor.u32 4788187, %v1582
    %v1584 = vand.u32 2147483647, %v1583
    %v1586 = vcvt.s32.f32 %v1579
    %v1587 = vmul.f32 %v1586, %v1584
    %v1588 = vxor.u32 %v1587, 2147483648
    %v1589 = vsel %vm1506, %v1588, %v1587
    %v1590 = vsub.s32 4, %v1566
    %v1591 = vsel %vm1506, %v1590, %v1566
    %v1592 = vsel %vm1505, %v242, %v1589
    %v1593 = vsel %vm1505, 0, %v1591
    %v1594 = vcosq.f32.pop %v1592
    %v1595 = vsinq.f32.pop %v1592
    %vm1596 = vweird.f32 %v242
    %v1597 = vadd.s32 %v1593, 3
    %v1598 = vand.u32 %v1597, 3
    %vm1599 = vcmp.lt.s32.totalorder %v1598, 2
    %vm1600 = vcmp.eq.s32.totalorder %v1598, 0
    %v1601 = vxor.u32 %v1595, 2147483648
    %v1602 = vsel %vm1600, %v1594, %v1601
    %vm1603 = vcmp.eq.s32.totalorder %v1598, 2
    %v1604 = vxor.u32 %v1594, 2147483648
    %v1605 = vsel %vm1603, %v1604, %v1595
    %v1606 = vsel %vm1599, %v1602, %v1605
    %v1607 = vsel %vm1596, nan, %v1606
    %v1608 = vand.u32 2147483647, %v243
    %vm1609 = vcmp.le.f32.partialorder %v1608, 0.7853982
    %vm1610 = vcmp.lt.s32.totalorder %v243, 0
    %v1611 = vand.u32 %v243, 2139095040
    %v1612 = vshrl.u32 %v1611, 23
    %v1613 = vsub.s32 %v1612, 127
    %v1614 = vand.u32 2147483647, %v243
    %v1615 = vand.u32 %v1614, 8388607
    %v1616 = vor.u32 %v1615, 8388608
    %v1617 = vsub.s32 0, %v1616
    %v1618 = vadd.s32 %v1613, 1
    %vm1619 = vcmp.gt.s32.totalorder %v1618, 0
    %v1620 = vsel %vm1619, %v1618, 0
    %v1621 = vshrl.u32 %v1620, 5
    %v1622 = vand.u32 %v1620, 31
    %v1623 = vsub.s32 32, %v1622
    %v1624 = vshrl.u32 683565275, %v1623
    %v1625 = vshll.u32 683565275, %v1622
    %v1626 = vshrl.u32 2475754826, %v1623
    %v1627 = vor.u32 %v1625, %v1626
    %v1628 = vshll.u32 2475754826, %v1622
    %v1629 = vshrl.u32 2131351028, %v1623
    %v1630 = vor.u32 %v1628, %v1629
    %v1631 = vshll.u32 2131351028, %v1622
    %v1632 = vshrl.u32 2102212464, %v1623
    %v1633 = vor.u32 %v1631, %v1632
    %v1634 = vshll.u32 2102212464, %v1622
    %v1635 = vshrl.u32 920167782, %v1623
    %v1636 = vor.u32 %v1634, %v1635
    %v1637 = vshll.u32 920167782, %v1622
    %v1638 = vshrl.u32 1326507024, %v1623
    %v1639 = vor.u32 %v1637, %v1638
    %vm1640 = vcmp.lt.s32.totalorder %v1621, 1
    %vm1641 = vcmp.lt.s32.totalorder %v1621, 2
    %vm1642 = vcmp.lt.s32.totalorder %v1621, 3
    %vm1643 = vcmp.lt.s32.totalorder %v1621, 4
    %v1644 = vsel %vm1640, %v1624, %v1627
    %v1645 = vsel %vm1643, %v1633, 2102212464
    %v1646 = vsel %vm1642, %v1630, %v1645
    %v1647 = vsel %vm1641, %v1644, %v1646
    %v1648 = vsel %vm1640, %v1627, %v1630
    %v1649 = vsel %vm1643, %v1636, 920167782
    %v1650 = vsel %vm1642, %v1633, %v1649
    %v1651 = vsel %vm1641, %v1648, %v1650
    %v1652 = vsel %vm1640, %v1630, %v1633
    %v1653 = vsel %vm1643, %v1639, 1326507024
    %v1654 = vsel %vm1642, %v1636, %v1653
    %v1655 = vsel %vm1641, %v1652, %v1654
    %v1656 = vshll.u32 %v1616, 8
    %v1657 = vmul.u32.u64.compose %v1656, %v1655
    %v1658 = vextract.low.u32 %v1657
    %v1659 = vextract.high.u32 %v1657
    %v1660 = vmul.u32.u64.compose %v1656, %v1651
    %v1661 = vextract.low.u32 %v1660
    %v1662 = vextract.high.u32 %v1660
    %v1663 = vmul.u32 %v1656, %v1647
    %v1664 = vadd.s32 %v1659, %v1661
    %vm1665 = vc.u32 %v1659, %v1661
    %v1666 = vadd.s32 %v1662, 1
    %v1667 = vsel %vm1665, %v1666, %v1662
    %v1668 = vadd.s32 %v1663, %v1667
    %v1669 = vadd.s32 %v1668, 536870912
    %v1670 = vshrl.u32 %v1669, 30
    %v1671 = vshll.u32 %v1670, 30
    %v1672 = vsub.s32 %v1668, %v1671
    %vm1673 = vcmp.lt.s32.totalorder %v1672, 0
    %v1674 = vsub.s32 0, %v1672
    %v1675 = vsel %vm1673, %v1674, %v1672
    %v1676 = vclz %v1675
    %v1677 = vsub.s32 %v1676, 2
    %vm1678 = vcmp.gt.s32.totalorder 0, %v1677
    %v1679 = vsel %vm1678, 0, %v1677
    %v1680 = vsub.s32 32, %v1679
    %v1681 = vshll.u32 %v1672, %v1679
    %v1682 = vshrl.u32 %v1664, %v1680
    %v1683 = vor.u32 %v1681, %v1682
    %v1684 = vsub.s32 4294967266, %v1679
    %v1685 = vadd.s32 %v1684, 127
    %v1686 = vshll.u32 %v1685, 23
    %v1687 = vor.u32 4788187, %v1686
    %v1688 = vand.u32 2147483647, %v1687
    %v1690 = vcvt.s32.f32 %v1683
    %v1691 = vmul.f32 %v1690, %v1688
    %v1692 = vxor.u32 %v1691, 2147483648
    %v1693 = vsel %vm1610, %v1692, %v1691
    %v1694 = vsub.s32 4, %v1670
    %v1695 = vsel %vm1610, %v1694, %v1670
    %v1696 = vsel %vm1609, %v243, %v1693
    %v1697 = vsel %vm1609, 0, %v1695
    %v1698 = vcosq.f32.pop %v1696
    %v1699 = vsinq.f32.pop %v1696
    %vm1700 = vweird.f32 %v243
    %v1701 = vadd.s32 %v1697, 3
    %v1702 = vand.u32 %v1701, 3
    %vm1703 = vcmp.lt.s32.totalorder %v1702, 2
    %vm1704 = vcmp.eq.s32.totalorder %v1702, 0
    %v1705 = vxor.u32 %v1699, 2147483648
    %v1706 = vsel %vm1704, %v1698, %v1705
    %vm1707 = vcmp.eq.s32.totalorder %v1702, 2
    %v1708 = vxor.u32 %v1698, 2147483648
    %v1709 = vsel %vm1707, %v1708, %v1699
    %v1710 = vsel %vm1703, %v1706, %v1709
    %v1711 = vsel %vm1700, nan, %v1710
    %v1712 = vand.u32 2147483647, %v244
    %vm1713 = vcmp.le.f32.partialorder %v1712, 0.7853982
    %vm1714 = vcmp.lt.s32.totalorder %v244, 0
    %v1715 = vand.u32 %v244, 2139095040
    %v1716 = vshrl.u32 %v1715, 23
    %v1717 = vsub.s32 %v1716, 127
    %v1718 = vand.u32 2147483647, %v244
    %v1719 = vand.u32 %v1718, 8388607
    %v1720 = vor.u32 %v1719, 8388608
    %v1721 = vsub.s32 0, %v1720
    %v1722 = vadd.s32 %v1717, 1
    %vm1723 = vcmp.gt.s32.totalorder %v1722, 0
    %v1724 = vsel %vm1723, %v1722, 0
    %v1725 = vshrl.u32 %v1724, 5
    %v1726 = vand.u32 %v1724, 31
    %v1727 = vsub.s32 32, %v1726
    %v1728 = vshrl.u32 683565275, %v1727
    %v1729 = vshll.u32 683565275, %v1726
    %v1730 = vshrl.u32 2475754826, %v1727
    %v1731 = vor.u32 %v1729, %v1730
    %v1732 = vshll.u32 2475754826, %v1726
    %v1733 = vshrl.u32 2131351028, %v1727
    %v1734 = vor.u32 %v1732, %v1733
    %v1735 = vshll.u32 2131351028, %v1726
    %v1736 = vshrl.u32 2102212464, %v1727
    %v1737 = vor.u32 %v1735, %v1736
    %v1738 = vshll.u32 2102212464, %v1726
    %v1739 = vshrl.u32 920167782, %v1727
    %v1740 = vor.u32 %v1738, %v1739
    %v1741 = vshll.u32 920167782, %v1726
    %v1742 = vshrl.u32 1326507024, %v1727
    %v1743 = vor.u32 %v1741, %v1742
    %vm1744 = vcmp.lt.s32.totalorder %v1725, 1
    %vm1745 = vcmp.lt.s32.totalorder %v1725, 2
    %vm1746 = vcmp.lt.s32.totalorder %v1725, 3
    %vm1747 = vcmp.lt.s32.totalorder %v1725, 4
    %v1748 = vsel %vm1744, %v1728, %v1731
    %v1749 = vsel %vm1747, %v1737, 2102212464
    %v1750 = vsel %vm1746, %v1734, %v1749
    %v1751 = vsel %vm1745, %v1748, %v1750
    %v1752 = vsel %vm1744, %v1731, %v1734
    %v1753 = vsel %vm1747, %v1740, 920167782
    %v1754 = vsel %vm1746, %v1737, %v1753
    %v1755 = vsel %vm1745, %v1752, %v1754
    %v1756 = vsel %vm1744, %v1734, %v1737
    %v1757 = vsel %vm1747, %v1743, 1326507024
    %v1758 = vsel %vm1746, %v1740, %v1757
    %v1759 = vsel %vm1745, %v1756, %v1758
    %v1760 = vshll.u32 %v1720, 8
    %v1761 = vmul.u32.u64.compose %v1760, %v1759
    %v1762 = vextract.low.u32 %v1761
    %v1763 = vextract.high.u32 %v1761
    %v1764 = vmul.u32.u64.compose %v1760, %v1755
    %v1765 = vextract.low.u32 %v1764
    %v1766 = vextract.high.u32 %v1764
    %v1767 = vmul.u32 %v1760, %v1751
    %v1768 = vadd.s32 %v1763, %v1765
    %vm1769 = vc.u32 %v1763, %v1765
    %v1770 = vadd.s32 %v1766, 1
    %v1771 = vsel %vm1769, %v1770, %v1766
    %v1772 = vadd.s32 %v1767, %v1771
    %v1773 = vadd.s32 %v1772, 536870912
    %v1774 = vshrl.u32 %v1773, 30
    %v1775 = vshll.u32 %v1774, 30
    %v1776 = vsub.s32 %v1772, %v1775
    %vm1777 = vcmp.lt.s32.totalorder %v1776, 0
    %v1778 = vsub.s32 0, %v1776
    %v1779 = vsel %vm1777, %v1778, %v1776
    %v1780 = vclz %v1779
    %v1781 = vsub.s32 %v1780, 2
    %vm1782 = vcmp.gt.s32.totalorder 0, %v1781
    %v1783 = vsel %vm1782, 0, %v1781
    %v1784 = vsub.s32 32, %v1783
    %v1785 = vshll.u32 %v1776, %v1783
    %v1786 = vshrl.u32 %v1768, %v1784
    %v1787 = vor.u32 %v1785, %v1786
    %v1788 = vsub.s32 4294967266, %v1783
    %v1789 = vadd.s32 %v1788, 127
    %v1790 = vshll.u32 %v1789, 23
    %v1791 = vor.u32 4788187, %v1790
    %v1792 = vand.u32 2147483647, %v1791
    %v1794 = vcvt.s32.f32 %v1787
    %v1795 = vmul.f32 %v1794, %v1792
    %v1796 = vxor.u32 %v1795, 2147483648
    %v1797 = vsel %vm1714, %v1796, %v1795
    %v1798 = vsub.s32 4, %v1774
    %v1799 = vsel %vm1714, %v1798, %v1774
    %v1800 = vsel %vm1713, %v244, %v1797
    %v1801 = vsel %vm1713, 0, %v1799
    %v1802 = vcosq.f32.pop %v1800
    %v1803 = vsinq.f32.pop %v1800
    %vm1804 = vweird.f32 %v244
    %v1805 = vadd.s32 %v1801, 3
    %v1806 = vand.u32 %v1805, 3
    %vm1807 = vcmp.lt.s32.totalorder %v1806, 2
    %vm1808 = vcmp.eq.s32.totalorder %v1806, 0
    %v1809 = vxor.u32 %v1803, 2147483648
    %v1810 = vsel %vm1808, %v1802, %v1809
    %vm1811 = vcmp.eq.s32.totalorder %v1806, 2
    %v1812 = vxor.u32 %v1802, 2147483648
    %v1813 = vsel %vm1811, %v1812, %v1803
    %v1814 = vsel %vm1807, %v1810, %v1813
    %v1815 = vsel %vm1804, nan, %v1814
    %v1816 = vand.u32 2147483647, %v245
    %vm1817 = vcmp.le.f32.partialorder %v1816, 0.7853982
    %vm1818 = vcmp.lt.s32.totalorder %v245, 0
    %v1819 = vand.u32 %v245, 2139095040
    %v1820 = vshrl.u32 %v1819, 23
    %v1821 = vsub.s32 %v1820, 127
    %v1822 = vand.u32 2147483647, %v245
    %v1823 = vand.u32 %v1822, 8388607
    %v1824 = vor.u32 %v1823, 8388608
    %v1825 = vsub.s32 0, %v1824
    %v1826 = vadd.s32 %v1821, 1
    %vm1827 = vcmp.gt.s32.totalorder %v1826, 0
    %v1828 = vsel %vm1827, %v1826, 0
    %v1829 = vshrl.u32 %v1828, 5
    %v1830 = vand.u32 %v1828, 31
    %v1831 = vsub.s32 32, %v1830
    %v1832 = vshrl.u32 683565275, %v1831
    %v1833 = vshll.u32 683565275, %v1830
    %v1834 = vshrl.u32 2475754826, %v1831
    %v1835 = vor.u32 %v1833, %v1834
    %v1836 = vshll.u32 2475754826, %v1830
    %v1837 = vshrl.u32 2131351028, %v1831
    %v1838 = vor.u32 %v1836, %v1837
    %v1839 = vshll.u32 2131351028, %v1830
    %v1840 = vshrl.u32 2102212464, %v1831
    %v1841 = vor.u32 %v1839, %v1840
    %v1842 = vshll.u32 2102212464, %v1830
    %v1843 = vshrl.u32 920167782, %v1831
    %v1844 = vor.u32 %v1842, %v1843
    %v1845 = vshll.u32 920167782, %v1830
    %v1846 = vshrl.u32 1326507024, %v1831
    %v1847 = vor.u32 %v1845, %v1846
    %vm1848 = vcmp.lt.s32.totalorder %v1829, 1
    %vm1849 = vcmp.lt.s32.totalorder %v1829, 2
    %vm1850 = vcmp.lt.s32.totalorder %v1829, 3
    %vm1851 = vcmp.lt.s32.totalorder %v1829, 4
    %v1852 = vsel %vm1848, %v1832, %v1835
    %v1853 = vsel %vm1851, %v1841, 2102212464
    %v1854 = vsel %vm1850, %v1838, %v1853
    %v1855 = vsel %vm1849, %v1852, %v1854
    %v1856 = vsel %vm1848, %v1835, %v1838
    %v1857 = vsel %vm1851, %v1844, 920167782
    %v1858 = vsel %vm1850, %v1841, %v1857
    %v1859 = vsel %vm1849, %v1856, %v1858
    %v1860 = vsel %vm1848, %v1838, %v1841
    %v1861 = vsel %vm1851, %v1847, 1326507024
    %v1862 = vsel %vm1850, %v1844, %v1861
    %v1863 = vsel %vm1849, %v1860, %v1862
    %v1864 = vshll.u32 %v1824, 8
    %v1865 = vmul.u32.u64.compose %v1864, %v1863
    %v1866 = vextract.low.u32 %v1865
    %v1867 = vextract.high.u32 %v1865
    %v1868 = vmul.u32.u64.compose %v1864, %v1859
    %v1869 = vextract.low.u32 %v1868
    %v1870 = vextract.high.u32 %v1868
    %v1871 = vmul.u32 %v1864, %v1855
    %v1872 = vadd.s32 %v1867, %v1869
    %vm1873 = vc.u32 %v1867, %v1869
    %v1874 = vadd.s32 %v1870, 1
    %v1875 = vsel %vm1873, %v1874, %v1870
    %v1876 = vadd.s32 %v1871, %v1875
    %v1877 = vadd.s32 %v1876, 536870912
    %v1878 = vshrl.u32 %v1877, 30
    %v1879 = vshll.u32 %v1878, 30
    %v1880 = vsub.s32 %v1876, %v1879
    %vm1881 = vcmp.lt.s32.totalorder %v1880, 0
    %v1882 = vsub.s32 0, %v1880
    %v1883 = vsel %vm1881, %v1882, %v1880
    %v1884 = vclz %v1883
    %v1885 = vsub.s32 %v1884, 2
    %vm1886 = vcmp.gt.s32.totalorder 0, %v1885
    %v1887 = vsel %vm1886, 0, %v1885
    %v1888 = vsub.s32 32, %v1887
    %v1889 = vshll.u32 %v1880, %v1887
    %v1890 = vshrl.u32 %v1872, %v1888
    %v1891 = vor.u32 %v1889, %v1890
    %v1892 = vsub.s32 4294967266, %v1887
    %v1893 = vadd.s32 %v1892, 127
    %v1894 = vshll.u32 %v1893, 23
    %v1895 = vor.u32 4788187, %v1894
    %v1896 = vand.u32 2147483647, %v1895
    %v1898 = vcvt.s32.f32 %v1891
    %v1899 = vmul.f32 %v1898, %v1896
    %v1900 = vxor.u32 %v1899, 2147483648
    %v1901 = vsel %vm1818, %v1900, %v1899
    %v1902 = vsub.s32 4, %v1878
    %v1903 = vsel %vm1818, %v1902, %v1878
    %v1904 = vsel %vm1817, %v245, %v1901
    %v1905 = vsel %vm1817, 0, %v1903
    %v1906 = vcosq.f32.pop %v1904
    %v1907 = vsinq.f32.pop %v1904
    %vm1908 = vweird.f32 %v245
    %v1909 = vadd.s32 %v1905, 3
    %v1910 = vand.u32 %v1909, 3
    %vm1911 = vcmp.lt.s32.totalorder %v1910, 2
    %vm1912 = vcmp.eq.s32.totalorder %v1910, 0
    %v1913 = vxor.u32 %v1907, 2147483648
    %v1914 = vsel %vm1912, %v1906, %v1913
    %vm1915 = vcmp.eq.s32.totalorder %v1910, 2
    %v1916 = vxor.u32 %v1906, 2147483648
    %v1917 = vsel %vm1915, %v1916, %v1907
    %v1918 = vsel %vm1911, %v1914, %v1917
    %v1919 = vsel %vm1908, nan, %v1918
    %v1920 = vand.u32 2147483647, %v246
    %vm1921 = vcmp.le.f32.partialorder %v1920, 0.7853982
    %vm1922 = vcmp.lt.s32.totalorder %v246, 0
    %v1923 = vand.u32 %v246, 2139095040
    %v1924 = vshrl.u32 %v1923, 23
    %v1925 = vsub.s32 %v1924, 127
    %v1926 = vand.u32 2147483647, %v246
    %v1927 = vand.u32 %v1926, 8388607
    %v1928 = vor.u32 %v1927, 8388608
    %v1929 = vsub.s32 0, %v1928
    %v1930 = vadd.s32 %v1925, 1
    %vm1931 = vcmp.gt.s32.totalorder %v1930, 0
    %v1932 = vsel %vm1931, %v1930, 0
    %v1933 = vshrl.u32 %v1932, 5
    %v1934 = vand.u32 %v1932, 31
    %v1935 = vsub.s32 32, %v1934
    %v1936 = vshrl.u32 683565275, %v1935
    %v1937 = vshll.u32 683565275, %v1934
    %v1938 = vshrl.u32 2475754826, %v1935
    %v1939 = vor.u32 %v1937, %v1938
    %v1940 = vshll.u32 2475754826, %v1934
    %v1941 = vshrl.u32 2131351028, %v1935
    %v1942 = vor.u32 %v1940, %v1941
    %v1943 = vshll.u32 2131351028, %v1934
    %v1944 = vshrl.u32 2102212464, %v1935
    %v1945 = vor.u32 %v1943, %v1944
    %v1946 = vshll.u32 2102212464, %v1934
    %v1947 = vshrl.u32 920167782, %v1935
    %v1948 = vor.u32 %v1946, %v1947
    %v1949 = vshll.u32 920167782, %v1934
    %v1950 = vshrl.u32 1326507024, %v1935
    %v1951 = vor.u32 %v1949, %v1950
    %vm1952 = vcmp.lt.s32.totalorder %v1933, 1
    %vm1953 = vcmp.lt.s32.totalorder %v1933, 2
    %vm1954 = vcmp.lt.s32.totalorder %v1933, 3
    %vm1955 = vcmp.lt.s32.totalorder %v1933, 4
    %v1956 = vsel %vm1952, %v1936, %v1939
    %v1957 = vsel %vm1955, %v1945, 2102212464
    %v1958 = vsel %vm1954, %v1942, %v1957
    %v1959 = vsel %vm1953, %v1956, %v1958
    %v1960 = vsel %vm1952, %v1939, %v1942
    %v1961 = vsel %vm1955, %v1948, 920167782
    %v1962 = vsel %vm1954, %v1945, %v1961
    %v1963 = vsel %vm1953, %v1960, %v1962
    %v1964 = vsel %vm1952, %v1942, %v1945
    %v1965 = vsel %vm1955, %v1951, 1326507024
    %v1966 = vsel %vm1954, %v1948, %v1965
    %v1967 = vsel %vm1953, %v1964, %v1966
    %v1968 = vshll.u32 %v1928, 8
    %v1969 = vmul.u32.u64.compose %v1968, %v1967
    %v1970 = vextract.low.u32 %v1969
    %v1971 = vextract.high.u32 %v1969
    %v1972 = vmul.u32.u64.compose %v1968, %v1963
    %v1973 = vextract.low.u32 %v1972
    %v1974 = vextract.high.u32 %v1972
    %v1975 = vmul.u32 %v1968, %v1959
    %v1976 = vadd.s32 %v1971, %v1973
    %vm1977 = vc.u32 %v1971, %v1973
    %v1978 = vadd.s32 %v1974, 1
    %v1979 = vsel %vm1977, %v1978, %v1974
    %v1980 = vadd.s32 %v1975, %v1979
    %v1981 = vadd.s32 %v1980, 536870912
    %v1982 = vshrl.u32 %v1981, 30
    %v1983 = vshll.u32 %v1982, 30
    %v1984 = vsub.s32 %v1980, %v1983
    %vm1985 = vcmp.lt.s32.totalorder %v1984, 0
    %v1986 = vsub.s32 0, %v1984
    %v1987 = vsel %vm1985, %v1986, %v1984
    %v1988 = vclz %v1987
    %v1989 = vsub.s32 %v1988, 2
    %vm1990 = vcmp.gt.s32.totalorder 0, %v1989
    %v1991 = vsel %vm1990, 0, %v1989
    %v1992 = vsub.s32 32, %v1991
    %v1993 = vshll.u32 %v1984, %v1991
    %v1994 = vshrl.u32 %v1976, %v1992
    %v1995 = vor.u32 %v1993, %v1994
    %v1996 = vsub.s32 4294967266, %v1991
    %v1997 = vadd.s32 %v1996, 127
    %v1998 = vshll.u32 %v1997, 23
    %v1999 = vor.u32 4788187, %v1998
    %v2000 = vand.u32 2147483647, %v1999
    %v2002 = vcvt.s32.f32 %v1995
    %v2003 = vmul.f32 %v2002, %v2000
    %v2004 = vxor.u32 %v2003, 2147483648
    %v2005 = vsel %vm1922, %v2004, %v2003
    %v2006 = vsub.s32 4, %v1982
    %v2007 = vsel %vm1922, %v2006, %v1982
    %v2008 = vsel %vm1921, %v246, %v2005
    %v2009 = vsel %vm1921, 0, %v2007
    %v2010 = vcosq.f32.pop %v2008
    %v2011 = vsinq.f32.pop %v2008
    %vm2012 = vweird.f32 %v246
    %v2013 = vadd.s32 %v2009, 3
    %v2014 = vand.u32 %v2013, 3
    %vm2015 = vcmp.lt.s32.totalorder %v2014, 2
    %vm2016 = vcmp.eq.s32.totalorder %v2014, 0
    %v2017 = vxor.u32 %v2011, 2147483648
    %v2018 = vsel %vm2016, %v2010, %v2017
    %vm2019 = vcmp.eq.s32.totalorder %v2014, 2
    %v2020 = vxor.u32 %v2010, 2147483648
    %v2021 = vsel %vm2019, %v2020, %v2011
    %v2022 = vsel %vm2015, %v2018, %v2021
    %v2023 = vsel %vm2012, nan, %v2022
    %v2024 = vand.u32 2147483647, %v247
    %vm2025 = vcmp.le.f32.partialorder %v2024, 0.7853982
    %vm2026 = vcmp.lt.s32.totalorder %v247, 0
    %v2027 = vand.u32 %v247, 2139095040
    %v2028 = vshrl.u32 %v2027, 23
    %v2029 = vsub.s32 %v2028, 127
    %v2030 = vand.u32 2147483647, %v247
    %v2031 = vand.u32 %v2030, 8388607
    %v2032 = vor.u32 %v2031, 8388608
    %v2033 = vsub.s32 0, %v2032
    %v2034 = vadd.s32 %v2029, 1
    %vm2035 = vcmp.gt.s32.totalorder %v2034, 0
    %v2036 = vsel %vm2035, %v2034, 0
    %v2037 = vshrl.u32 %v2036, 5
    %v2038 = vand.u32 %v2036, 31
    %v2039 = vsub.s32 32, %v2038
    %v2040 = vshrl.u32 683565275, %v2039
    %v2041 = vshll.u32 683565275, %v2038
    %v2042 = vshrl.u32 2475754826, %v2039
    %v2043 = vor.u32 %v2041, %v2042
    %v2044 = vshll.u32 2475754826, %v2038
    %v2045 = vshrl.u32 2131351028, %v2039
    %v2046 = vor.u32 %v2044, %v2045
    %v2047 = vshll.u32 2131351028, %v2038
    %v2048 = vshrl.u32 2102212464, %v2039
    %v2049 = vor.u32 %v2047, %v2048
    %v2050 = vshll.u32 2102212464, %v2038
    %v2051 = vshrl.u32 920167782, %v2039
    %v2052 = vor.u32 %v2050, %v2051
    %v2053 = vshll.u32 920167782, %v2038
    %v2054 = vshrl.u32 1326507024, %v2039
    %v2055 = vor.u32 %v2053, %v2054
    %vm2056 = vcmp.lt.s32.totalorder %v2037, 1
    %vm2057 = vcmp.lt.s32.totalorder %v2037, 2
    %vm2058 = vcmp.lt.s32.totalorder %v2037, 3
    %vm2059 = vcmp.lt.s32.totalorder %v2037, 4
    %v2060 = vsel %vm2056, %v2040, %v2043
    %v2061 = vsel %vm2059, %v2049, 2102212464
    %v2062 = vsel %vm2058, %v2046, %v2061
    %v2063 = vsel %vm2057, %v2060, %v2062
    %v2064 = vsel %vm2056, %v2043, %v2046
    %v2065 = vsel %vm2059, %v2052, 920167782
    %v2066 = vsel %vm2058, %v2049, %v2065
    %v2067 = vsel %vm2057, %v2064, %v2066
    %v2068 = vsel %vm2056, %v2046, %v2049
    %v2069 = vsel %vm2059, %v2055, 1326507024
    %v2070 = vsel %vm2058, %v2052, %v2069
    %v2071 = vsel %vm2057, %v2068, %v2070
    %v2072 = vshll.u32 %v2032, 8
    %v2073 = vmul.u32.u64.compose %v2072, %v2071
    %v2074 = vextract.low.u32 %v2073
    %v2075 = vextract.high.u32 %v2073
    %v2076 = vmul.u32.u64.compose %v2072, %v2067
    %v2077 = vextract.low.u32 %v2076
    %v2078 = vextract.high.u32 %v2076
    %v2079 = vmul.u32 %v2072, %v2063
    %v2080 = vadd.s32 %v2075, %v2077
    %vm2081 = vc.u32 %v2075, %v2077
    %v2082 = vadd.s32 %v2078, 1
    %v2083 = vsel %vm2081, %v2082, %v2078
    %v2084 = vadd.s32 %v2079, %v2083
    %v2085 = vadd.s32 %v2084, 536870912
    %v2086 = vshrl.u32 %v2085, 30
    %v2087 = vshll.u32 %v2086, 30
    %v2088 = vsub.s32 %v2084, %v2087
    %vm2089 = vcmp.lt.s32.totalorder %v2088, 0
    %v2090 = vsub.s32 0, %v2088
    %v2091 = vsel %vm2089, %v2090, %v2088
    %v2092 = vclz %v2091
    %v2093 = vsub.s32 %v2092, 2
    %vm2094 = vcmp.gt.s32.totalorder 0, %v2093
    %v2095 = vsel %vm2094, 0, %v2093
    %v2096 = vsub.s32 32, %v2095
    %v2097 = vshll.u32 %v2088, %v2095
    %v2098 = vshrl.u32 %v2080, %v2096
    %v2099 = vor.u32 %v2097, %v2098
    %v2100 = vsub.s32 4294967266, %v2095
    %v2101 = vadd.s32 %v2100, 127
    %v2102 = vshll.u32 %v2101, 23
    %v2103 = vor.u32 4788187, %v2102
    %v2104 = vand.u32 2147483647, %v2103
    %v2106 = vcvt.s32.f32 %v2099
    %v2107 = vmul.f32 %v2106, %v2104
    %v2108 = vxor.u32 %v2107, 2147483648
    %v2109 = vsel %vm2026, %v2108, %v2107
    %v2110 = vsub.s32 4, %v2086
    %v2111 = vsel %vm2026, %v2110, %v2086
    %v2112 = vsel %vm2025, %v247, %v2109
    %v2113 = vsel %vm2025, 0, %v2111
    %v2114 = vcosq.f32.pop %v2112
    %v2115 = vsinq.f32.pop %v2112
    %vm2116 = vweird.f32 %v247
    %v2117 = vadd.s32 %v2113, 3
    %v2118 = vand.u32 %v2117, 3
    %vm2119 = vcmp.lt.s32.totalorder %v2118, 2
    %vm2120 = vcmp.eq.s32.totalorder %v2118, 0
    %v2121 = vxor.u32 %v2115, 2147483648
    %v2122 = vsel %vm2120, %v2114, %v2121
    %vm2123 = vcmp.eq.s32.totalorder %v2118, 2
    %v2124 = vxor.u32 %v2114, 2147483648
    %v2125 = vsel %vm2123, %v2124, %v2115
    %v2126 = vsel %vm2119, %v2122, %v2125
    %v2127 = vsel %vm2116, nan, %v2126
    %v2128 = vand.u32 2147483647, %v248
    %vm2129 = vcmp.le.f32.partialorder %v2128, 0.7853982
    %vm2130 = vcmp.lt.s32.totalorder %v248, 0
    %v2131 = vand.u32 %v248, 2139095040
    %v2132 = vshrl.u32 %v2131, 23
    %v2133 = vsub.s32 %v2132, 127
    %v2134 = vand.u32 2147483647, %v248
    %v2135 = vand.u32 %v2134, 8388607
    %v2136 = vor.u32 %v2135, 8388608
    %v2137 = vsub.s32 0, %v2136
    %v2138 = vadd.s32 %v2133, 1
    %vm2139 = vcmp.gt.s32.totalorder %v2138, 0
    %v2140 = vsel %vm2139, %v2138, 0
    %v2141 = vshrl.u32 %v2140, 5
    %v2142 = vand.u32 %v2140, 31
    %v2143 = vsub.s32 32, %v2142
    %v2144 = vshrl.u32 683565275, %v2143
    %v2145 = vshll.u32 683565275, %v2142
    %v2146 = vshrl.u32 2475754826, %v2143
    %v2147 = vor.u32 %v2145, %v2146
    %v2148 = vshll.u32 2475754826, %v2142
    %v2149 = vshrl.u32 2131351028, %v2143
    %v2150 = vor.u32 %v2148, %v2149
    %v2151 = vshll.u32 2131351028, %v2142
    %v2152 = vshrl.u32 2102212464, %v2143
    %v2153 = vor.u32 %v2151, %v2152
    %v2154 = vshll.u32 2102212464, %v2142
    %v2155 = vshrl.u32 920167782, %v2143
    %v2156 = vor.u32 %v2154, %v2155
    %v2157 = vshll.u32 920167782, %v2142
    %v2158 = vshrl.u32 1326507024, %v2143
    %v2159 = vor.u32 %v2157, %v2158
    %vm2160 = vcmp.lt.s32.totalorder %v2141, 1
    %vm2161 = vcmp.lt.s32.totalorder %v2141, 2
    %vm2162 = vcmp.lt.s32.totalorder %v2141, 3
    %vm2163 = vcmp.lt.s32.totalorder %v2141, 4
    %v2164 = vsel %vm2160, %v2144, %v2147
    %v2165 = vsel %vm2163, %v2153, 2102212464
    %v2166 = vsel %vm2162, %v2150, %v2165
    %v2167 = vsel %vm2161, %v2164, %v2166
    %v2168 = vsel %vm2160, %v2147, %v2150
    %v2169 = vsel %vm2163, %v2156, 920167782
    %v2170 = vsel %vm2162, %v2153, %v2169
    %v2171 = vsel %vm2161, %v2168, %v2170
    %v2172 = vsel %vm2160, %v2150, %v2153
    %v2173 = vsel %vm2163, %v2159, 1326507024
    %v2174 = vsel %vm2162, %v2156, %v2173
    %v2175 = vsel %vm2161, %v2172, %v2174
    %v2176 = vshll.u32 %v2136, 8
    %v2177 = vmul.u32.u64.compose %v2176, %v2175
    %v2178 = vextract.low.u32 %v2177
    %v2179 = vextract.high.u32 %v2177
    %v2180 = vmul.u32.u64.compose %v2176, %v2171
    %v2181 = vextract.low.u32 %v2180
    %v2182 = vextract.high.u32 %v2180
    %v2183 = vmul.u32 %v2176, %v2167
    %v2184 = vadd.s32 %v2179, %v2181
    %vm2185 = vc.u32 %v2179, %v2181
    %v2186 = vadd.s32 %v2182, 1
    %v2187 = vsel %vm2185, %v2186, %v2182
    %v2188 = vadd.s32 %v2183, %v2187
    %v2189 = vadd.s32 %v2188, 536870912
    %v2190 = vshrl.u32 %v2189, 30
    %v2191 = vshll.u32 %v2190, 30
    %v2192 = vsub.s32 %v2188, %v2191
    %vm2193 = vcmp.lt.s32.totalorder %v2192, 0
    %v2194 = vsub.s32 0, %v2192
    %v2195 = vsel %vm2193, %v2194, %v2192
    %v2196 = vclz %v2195
    %v2197 = vsub.s32 %v2196, 2
    %vm2198 = vcmp.gt.s32.totalorder 0, %v2197
    %v2199 = vsel %vm2198, 0, %v2197
    %v2200 = vsub.s32 32, %v2199
    %v2201 = vshll.u32 %v2192, %v2199
    %v2202 = vshrl.u32 %v2184, %v2200
    %v2203 = vor.u32 %v2201, %v2202
    %v2204 = vsub.s32 4294967266, %v2199
    %v2205 = vadd.s32 %v2204, 127
    %v2206 = vshll.u32 %v2205, 23
    %v2207 = vor.u32 4788187, %v2206
    %v2208 = vand.u32 2147483647, %v2207
    %v2210 = vcvt.s32.f32 %v2203
    %v2211 = vmul.f32 %v2210, %v2208
    %v2212 = vxor.u32 %v2211, 2147483648
    %v2213 = vsel %vm2130, %v2212, %v2211
    %v2214 = vsub.s32 4, %v2190
    %v2215 = vsel %vm2130, %v2214, %v2190
    %v2216 = vsel %vm2129, %v248, %v2213
    %v2217 = vsel %vm2129, 0, %v2215
    %v2218 = vcosq.f32.pop %v2216
    %v2219 = vsinq.f32.pop %v2216
    %vm2220 = vweird.f32 %v248
    %v2221 = vadd.s32 %v2217, 3
    %v2222 = vand.u32 %v2221, 3
    %vm2223 = vcmp.lt.s32.totalorder %v2222, 2
    %vm2224 = vcmp.eq.s32.totalorder %v2222, 0
    %v2225 = vxor.u32 %v2219, 2147483648
    %v2226 = vsel %vm2224, %v2218, %v2225
    %vm2227 = vcmp.eq.s32.totalorder %v2222, 2
    %v2228 = vxor.u32 %v2218, 2147483648
    %v2229 = vsel %vm2227, %v2228, %v2219
    %v2230 = vsel %vm2223, %v2226, %v2229
    %v2231 = vsel %vm2220, nan, %v2230
    %v2232 = vand.u32 2147483647, %v249
    %vm2233 = vcmp.le.f32.partialorder %v2232, 0.7853982
    %vm2234 = vcmp.lt.s32.totalorder %v249, 0
    %v2235 = vand.u32 %v249, 2139095040
    %v2236 = vshrl.u32 %v2235, 23
    %v2237 = vsub.s32 %v2236, 127
    %v2238 = vand.u32 2147483647, %v249
    %v2239 = vand.u32 %v2238, 8388607
    %v2240 = vor.u32 %v2239, 8388608
    %v2241 = vsub.s32 0, %v2240
    %v2242 = vadd.s32 %v2237, 1
    %vm2243 = vcmp.gt.s32.totalorder %v2242, 0
    %v2244 = vsel %vm2243, %v2242, 0
    %v2245 = vshrl.u32 %v2244, 5
    %v2246 = vand.u32 %v2244, 31
    %v2247 = vsub.s32 32, %v2246
    %v2248 = vshrl.u32 683565275, %v2247
    %v2249 = vshll.u32 683565275, %v2246
    %v2250 = vshrl.u32 2475754826, %v2247
    %v2251 = vor.u32 %v2249, %v2250
    %v2252 = vshll.u32 2475754826, %v2246
    %v2253 = vshrl.u32 2131351028, %v2247
    %v2254 = vor.u32 %v2252, %v2253
    %v2255 = vshll.u32 2131351028, %v2246
    %v2256 = vshrl.u32 2102212464, %v2247
    %v2257 = vor.u32 %v2255, %v2256
    %v2258 = vshll.u32 2102212464, %v2246
    %v2259 = vshrl.u32 920167782, %v2247
    %v2260 = vor.u32 %v2258, %v2259
    %v2261 = vshll.u32 920167782, %v2246
    %v2262 = vshrl.u32 1326507024, %v2247
    %v2263 = vor.u32 %v2261, %v2262
    %vm2264 = vcmp.lt.s32.totalorder %v2245, 1
    %vm2265 = vcmp.lt.s32.totalorder %v2245, 2
    %vm2266 = vcmp.lt.s32.totalorder %v2245, 3
    %vm2267 = vcmp.lt.s32.totalorder %v2245, 4
    %v2268 = vsel %vm2264, %v2248, %v2251
    %v2269 = vsel %vm2267, %v2257, 2102212464
    %v2270 = vsel %vm2266, %v2254, %v2269
    %v2271 = vsel %vm2265, %v2268, %v2270
    %v2272 = vsel %vm2264, %v2251, %v2254
    %v2273 = vsel %vm2267, %v2260, 920167782
    %v2274 = vsel %vm2266, %v2257, %v2273
    %v2275 = vsel %vm2265, %v2272, %v2274
    %v2276 = vsel %vm2264, %v2254, %v2257
    %v2277 = vsel %vm2267, %v2263, 1326507024
    %v2278 = vsel %vm2266, %v2260, %v2277
    %v2279 = vsel %vm2265, %v2276, %v2278
    %v2280 = vshll.u32 %v2240, 8
    %v2281 = vmul.u32.u64.compose %v2280, %v2279
    %v2282 = vextract.low.u32 %v2281
    %v2283 = vextract.high.u32 %v2281
    %v2284 = vmul.u32.u64.compose %v2280, %v2275
    %v2285 = vextract.low.u32 %v2284
    %v2286 = vextract.high.u32 %v2284
    %v2287 = vmul.u32 %v2280, %v2271
    %v2288 = vadd.s32 %v2283, %v2285
    %vm2289 = vc.u32 %v2283, %v2285
    %v2290 = vadd.s32 %v2286, 1
    %v2291 = vsel %vm2289, %v2290, %v2286
    %v2292 = vadd.s32 %v2287, %v2291
    %v2293 = vadd.s32 %v2292, 536870912
    %v2294 = vshrl.u32 %v2293, 30
    %v2295 = vshll.u32 %v2294, 30
    %v2296 = vsub.s32 %v2292, %v2295
    %vm2297 = vcmp.lt.s32.totalorder %v2296, 0
    %v2298 = vsub.s32 0, %v2296
    %v2299 = vsel %vm2297, %v2298, %v2296
    %v2300 = vclz %v2299
    %v2301 = vsub.s32 %v2300, 2
    %vm2302 = vcmp.gt.s32.totalorder 0, %v2301
    %v2303 = vsel %vm2302, 0, %v2301
    %v2304 = vsub.s32 32, %v2303
    %v2305 = vshll.u32 %v2296, %v2303
    %v2306 = vshrl.u32 %v2288, %v2304
    %v2307 = vor.u32 %v2305, %v2306
    %v2308 = vsub.s32 4294967266, %v2303
    %v2309 = vadd.s32 %v2308, 127
    %v2310 = vshll.u32 %v2309, 23
    %v2311 = vor.u32 4788187, %v2310
    %v2312 = vand.u32 2147483647, %v2311
    %v2314 = vcvt.s32.f32 %v2307
    %v2315 = vmul.f32 %v2314, %v2312
    %v2316 = vxor.u32 %v2315, 2147483648
    %v2317 = vsel %vm2234, %v2316, %v2315
    %v2318 = vsub.s32 4, %v2294
    %v2319 = vsel %vm2234, %v2318, %v2294
    %v2320 = vsel %vm2233, %v249, %v2317
    %v2321 = vsel %vm2233, 0, %v2319
    %v2322 = vcosq.f32.pop %v2320
    %v2323 = vsinq.f32.pop %v2320
    %vm2324 = vweird.f32 %v249
    %v2325 = vadd.s32 %v2321, 3
    %v2326 = vand.u32 %v2325, 3
    %vm2327 = vcmp.lt.s32.totalorder %v2326, 2
    %vm2328 = vcmp.eq.s32.totalorder %v2326, 0
    %v2329 = vxor.u32 %v2323, 2147483648
    %v2330 = vsel %vm2328, %v2322, %v2329
    %vm2331 = vcmp.eq.s32.totalorder %v2326, 2
    %v2332 = vxor.u32 %v2322, 2147483648
    %v2333 = vsel %vm2331, %v2332, %v2323
    %v2334 = vsel %vm2327, %v2330, %v2333
    %v2335 = vsel %vm2324, nan, %v2334
    %v2336 = vand.u32 2147483647, %v250
    %vm2337 = vcmp.le.f32.partialorder %v2336, 0.7853982
    %vm2338 = vcmp.lt.s32.totalorder %v250, 0
    %v2339 = vand.u32 %v250, 2139095040
    %v2340 = vshrl.u32 %v2339, 23
    %v2341 = vsub.s32 %v2340, 127
    %v2342 = vand.u32 2147483647, %v250
    %v2343 = vand.u32 %v2342, 8388607
    %v2344 = vor.u32 %v2343, 8388608
    %v2345 = vsub.s32 0, %v2344
    %v2346 = vadd.s32 %v2341, 1
    %vm2347 = vcmp.gt.s32.totalorder %v2346, 0
    %v2348 = vsel %vm2347, %v2346, 0
    %v2349 = vshrl.u32 %v2348, 5
    %v2350 = vand.u32 %v2348, 31
    %v2351 = vsub.s32 32, %v2350
    %v2352 = vshrl.u32 683565275, %v2351
    %v2353 = vshll.u32 683565275, %v2350
    %v2354 = vshrl.u32 2475754826, %v2351
    %v2355 = vor.u32 %v2353, %v2354
    %v2356 = vshll.u32 2475754826, %v2350
    %v2357 = vshrl.u32 2131351028, %v2351
    %v2358 = vor.u32 %v2356, %v2357
    %v2359 = vshll.u32 2131351028, %v2350
    %v2360 = vshrl.u32 2102212464, %v2351
    %v2361 = vor.u32 %v2359, %v2360
    %v2362 = vshll.u32 2102212464, %v2350
    %v2363 = vshrl.u32 920167782, %v2351
    %v2364 = vor.u32 %v2362, %v2363
    %v2365 = vshll.u32 920167782, %v2350
    %v2366 = vshrl.u32 1326507024, %v2351
    %v2367 = vor.u32 %v2365, %v2366
    %vm2368 = vcmp.lt.s32.totalorder %v2349, 1
    %vm2369 = vcmp.lt.s32.totalorder %v2349, 2
    %vm2370 = vcmp.lt.s32.totalorder %v2349, 3
    %vm2371 = vcmp.lt.s32.totalorder %v2349, 4
    %v2372 = vsel %vm2368, %v2352, %v2355
    %v2373 = vsel %vm2371, %v2361, 2102212464
    %v2374 = vsel %vm2370, %v2358, %v2373
    %v2375 = vsel %vm2369, %v2372, %v2374
    %v2376 = vsel %vm2368, %v2355, %v2358
    %v2377 = vsel %vm2371, %v2364, 920167782
    %v2378 = vsel %vm2370, %v2361, %v2377
    %v2379 = vsel %vm2369, %v2376, %v2378
    %v2380 = vsel %vm2368, %v2358, %v2361
    %v2381 = vsel %vm2371, %v2367, 1326507024
    %v2382 = vsel %vm2370, %v2364, %v2381
    %v2383 = vsel %vm2369, %v2380, %v2382
    %v2384 = vshll.u32 %v2344, 8
    %v2385 = vmul.u32.u64.compose %v2384, %v2383
    %v2386 = vextract.low.u32 %v2385
    %v2387 = vextract.high.u32 %v2385
    %v2388 = vmul.u32.u64.compose %v2384, %v2379
    %v2389 = vextract.low.u32 %v2388
    %v2390 = vextract.high.u32 %v2388
    %v2391 = vmul.u32 %v2384, %v2375
    %v2392 = vadd.s32 %v2387, %v2389
    %vm2393 = vc.u32 %v2387, %v2389
    %v2394 = vadd.s32 %v2390, 1
    %v2395 = vsel %vm2393, %v2394, %v2390
    %v2396 = vadd.s32 %v2391, %v2395
    %v2397 = vadd.s32 %v2396, 536870912
    %v2398 = vshrl.u32 %v2397, 30
    %v2399 = vshll.u32 %v2398, 30
    %v2400 = vsub.s32 %v2396, %v2399
    %vm2401 = vcmp.lt.s32.totalorder %v2400, 0
    %v2402 = vsub.s32 0, %v2400
    %v2403 = vsel %vm2401, %v2402, %v2400
    %v2404 = vclz %v2403
    %v2405 = vsub.s32 %v2404, 2
    %vm2406 = vcmp.gt.s32.totalorder 0, %v2405
    %v2407 = vsel %vm2406, 0, %v2405
    %v2408 = vsub.s32 32, %v2407
    %v2409 = vshll.u32 %v2400, %v2407
    %v2410 = vshrl.u32 %v2392, %v2408
    %v2411 = vor.u32 %v2409, %v2410
    %v2412 = vsub.s32 4294967266, %v2407
    %v2413 = vadd.s32 %v2412, 127
    %v2414 = vshll.u32 %v2413, 23
    %v2415 = vor.u32 4788187, %v2414
    %v2416 = vand.u32 2147483647, %v2415
    %v2418 = vcvt.s32.f32 %v2411
    %v2419 = vmul.f32 %v2418, %v2416
    %v2420 = vxor.u32 %v2419, 2147483648
    %v2421 = vsel %vm2338, %v2420, %v2419
    %v2422 = vsub.s32 4, %v2398
    %v2423 = vsel %vm2338, %v2422, %v2398
    %v2424 = vsel %vm2337, %v250, %v2421
    %v2425 = vsel %vm2337, 0, %v2423
    %v2426 = vcosq.f32.pop %v2424
    %v2427 = vsinq.f32.pop %v2424
    %vm2428 = vweird.f32 %v250
    %v2429 = vadd.s32 %v2425, 3
    %v2430 = vand.u32 %v2429, 3
    %vm2431 = vcmp.lt.s32.totalorder %v2430, 2
    %vm2432 = vcmp.eq.s32.totalorder %v2430, 0
    %v2433 = vxor.u32 %v2427, 2147483648
    %v2434 = vsel %vm2432, %v2426, %v2433
    %vm2435 = vcmp.eq.s32.totalorder %v2430, 2
    %v2436 = vxor.u32 %v2426, 2147483648
    %v2437 = vsel %vm2435, %v2436, %v2427
    %v2438 = vsel %vm2431, %v2434, %v2437
    %v2439 = vsel %vm2428, nan, %v2438
    %v2440 = vand.u32 2147483647, %v251
    %vm2441 = vcmp.le.f32.partialorder %v2440, 0.7853982
    %vm2442 = vcmp.lt.s32.totalorder %v251, 0
    %v2443 = vand.u32 %v251, 2139095040
    %v2444 = vshrl.u32 %v2443, 23
    %v2445 = vsub.s32 %v2444, 127
    %v2446 = vand.u32 2147483647, %v251
    %v2447 = vand.u32 %v2446, 8388607
    %v2448 = vor.u32 %v2447, 8388608
    %v2449 = vsub.s32 0, %v2448
    %v2450 = vadd.s32 %v2445, 1
    %vm2451 = vcmp.gt.s32.totalorder %v2450, 0
    %v2452 = vsel %vm2451, %v2450, 0
    %v2453 = vshrl.u32 %v2452, 5
    %v2454 = vand.u32 %v2452, 31
    %v2455 = vsub.s32 32, %v2454
    %v2456 = vshrl.u32 683565275, %v2455
    %v2457 = vshll.u32 683565275, %v2454
    %v2458 = vshrl.u32 2475754826, %v2455
    %v2459 = vor.u32 %v2457, %v2458
    %v2460 = vshll.u32 2475754826, %v2454
    %v2461 = vshrl.u32 2131351028, %v2455
    %v2462 = vor.u32 %v2460, %v2461
    %v2463 = vshll.u32 2131351028, %v2454
    %v2464 = vshrl.u32 2102212464, %v2455
    %v2465 = vor.u32 %v2463, %v2464
    %v2466 = vshll.u32 2102212464, %v2454
    %v2467 = vshrl.u32 920167782, %v2455
    %v2468 = vor.u32 %v2466, %v2467
    %v2469 = vshll.u32 920167782, %v2454
    %v2470 = vshrl.u32 1326507024, %v2455
    %v2471 = vor.u32 %v2469, %v2470
    %vm2472 = vcmp.lt.s32.totalorder %v2453, 1
    %vm2473 = vcmp.lt.s32.totalorder %v2453, 2
    %vm2474 = vcmp.lt.s32.totalorder %v2453, 3
    %vm2475 = vcmp.lt.s32.totalorder %v2453, 4
    %v2476 = vsel %vm2472, %v2456, %v2459
    %v2477 = vsel %vm2475, %v2465, 2102212464
    %v2478 = vsel %vm2474, %v2462, %v2477
    %v2479 = vsel %vm2473, %v2476, %v2478
    %v2480 = vsel %vm2472, %v2459, %v2462
    %v2481 = vsel %vm2475, %v2468, 920167782
    %v2482 = vsel %vm2474, %v2465, %v2481
    %v2483 = vsel %vm2473, %v2480, %v2482
    %v2484 = vsel %vm2472, %v2462, %v2465
    %v2485 = vsel %vm2475, %v2471, 1326507024
    %v2486 = vsel %vm2474, %v2468, %v2485
    %v2487 = vsel %vm2473, %v2484, %v2486
    %v2488 = vshll.u32 %v2448, 8
    %v2489 = vmul.u32.u64.compose %v2488, %v2487
    %v2490 = vextract.low.u32 %v2489
    %v2491 = vextract.high.u32 %v2489
    %v2492 = vmul.u32.u64.compose %v2488, %v2483
    %v2493 = vextract.low.u32 %v2492
    %v2494 = vextract.high.u32 %v2492
    %v2495 = vmul.u32 %v2488, %v2479
    %v2496 = vadd.s32 %v2491, %v2493
    %vm2497 = vc.u32 %v2491, %v2493
    %v2498 = vadd.s32 %v2494, 1
    %v2499 = vsel %vm2497, %v2498, %v2494
    %v2500 = vadd.s32 %v2495, %v2499
    %v2501 = vadd.s32 %v2500, 536870912
    %v2502 = vshrl.u32 %v2501, 30
    %v2503 = vshll.u32 %v2502, 30
    %v2504 = vsub.s32 %v2500, %v2503
    %vm2505 = vcmp.lt.s32.totalorder %v2504, 0
    %v2506 = vsub.s32 0, %v2504
    %v2507 = vsel %vm2505, %v2506, %v2504
    %v2508 = vclz %v2507
    %v2509 = vsub.s32 %v2508, 2
    %vm2510 = vcmp.gt.s32.totalorder 0, %v2509
    %v2511 = vsel %vm2510, 0, %v2509
    %v2512 = vsub.s32 32, %v2511
    %v2513 = vshll.u32 %v2504, %v2511
    %v2514 = vshrl.u32 %v2496, %v2512
    %v2515 = vor.u32 %v2513, %v2514
    %v2516 = vsub.s32 4294967266, %v2511
    %v2517 = vadd.s32 %v2516, 127
    %v2518 = vshll.u32 %v2517, 23
    %v2519 = vor.u32 4788187, %v2518
    %v2520 = vand.u32 2147483647, %v2519
    %v2522 = vcvt.s32.f32 %v2515
    %v2523 = vmul.f32 %v2522, %v2520
    %v2524 = vxor.u32 %v2523, 2147483648
    %v2525 = vsel %vm2442, %v2524, %v2523
    %v2526 = vsub.s32 4, %v2502
    %v2527 = vsel %vm2442, %v2526, %v2502
    %v2528 = vsel %vm2441, %v251, %v2525
    %v2529 = vsel %vm2441, 0, %v2527
    %v2530 = vcosq.f32.pop %v2528
    %v2531 = vsinq.f32.pop %v2528
    %vm2532 = vweird.f32 %v251
    %v2533 = vadd.s32 %v2529, 3
    %v2534 = vand.u32 %v2533, 3
    %vm2535 = vcmp.lt.s32.totalorder %v2534, 2
    %vm2536 = vcmp.eq.s32.totalorder %v2534, 0
    %v2537 = vxor.u32 %v2531, 2147483648
    %v2538 = vsel %vm2536, %v2530, %v2537
    %vm2539 = vcmp.eq.s32.totalorder %v2534, 2
    %v2540 = vxor.u32 %v2530, 2147483648
    %v2541 = vsel %vm2539, %v2540, %v2531
    %v2542 = vsel %vm2535, %v2538, %v2541
    %v2543 = vsel %vm2532, nan, %v2542
    %v2544 = vand.u32 2147483647, %v252
    %vm2545 = vcmp.le.f32.partialorder %v2544, 0.7853982
    %vm2546 = vcmp.lt.s32.totalorder %v252, 0
    %v2547 = vand.u32 %v252, 2139095040
    %v2548 = vshrl.u32 %v2547, 23
    %v2549 = vsub.s32 %v2548, 127
    %v2550 = vand.u32 2147483647, %v252
    %v2551 = vand.u32 %v2550, 8388607
    %v2552 = vor.u32 %v2551, 8388608
    %v2553 = vsub.s32 0, %v2552
    %v2554 = vadd.s32 %v2549, 1
    %vm2555 = vcmp.gt.s32.totalorder %v2554, 0
    %v2556 = vsel %vm2555, %v2554, 0
    %v2557 = vshrl.u32 %v2556, 5
    %v2558 = vand.u32 %v2556, 31
    %v2559 = vsub.s32 32, %v2558
    %v2560 = vshrl.u32 683565275, %v2559
    %v2561 = vshll.u32 683565275, %v2558
    %v2562 = vshrl.u32 2475754826, %v2559
    %v2563 = vor.u32 %v2561, %v2562
    %v2564 = vshll.u32 2475754826, %v2558
    %v2565 = vshrl.u32 2131351028, %v2559
    %v2566 = vor.u32 %v2564, %v2565
    %v2567 = vshll.u32 2131351028, %v2558
    %v2568 = vshrl.u32 2102212464, %v2559
    %v2569 = vor.u32 %v2567, %v2568
    %v2570 = vshll.u32 2102212464, %v2558
    %v2571 = vshrl.u32 920167782, %v2559
    %v2572 = vor.u32 %v2570, %v2571
    %v2573 = vshll.u32 920167782, %v2558
    %v2574 = vshrl.u32 1326507024, %v2559
    %v2575 = vor.u32 %v2573, %v2574
    %vm2576 = vcmp.lt.s32.totalorder %v2557, 1
    %vm2577 = vcmp.lt.s32.totalorder %v2557, 2
    %vm2578 = vcmp.lt.s32.totalorder %v2557, 3
    %vm2579 = vcmp.lt.s32.totalorder %v2557, 4
    %v2580 = vsel %vm2576, %v2560, %v2563
    %v2581 = vsel %vm2579, %v2569, 2102212464
    %v2582 = vsel %vm2578, %v2566, %v2581
    %v2583 = vsel %vm2577, %v2580, %v2582
    %v2584 = vsel %vm2576, %v2563, %v2566
    %v2585 = vsel %vm2579, %v2572, 920167782
    %v2586 = vsel %vm2578, %v2569, %v2585
    %v2587 = vsel %vm2577, %v2584, %v2586
    %v2588 = vsel %vm2576, %v2566, %v2569
    %v2589 = vsel %vm2579, %v2575, 1326507024
    %v2590 = vsel %vm2578, %v2572, %v2589
    %v2591 = vsel %vm2577, %v2588, %v2590
    %v2592 = vshll.u32 %v2552, 8
    %v2593 = vmul.u32.u64.compose %v2592, %v2591
    %v2594 = vextract.low.u32 %v2593
    %v2595 = vextract.high.u32 %v2593
    %v2596 = vmul.u32.u64.compose %v2592, %v2587
    %v2597 = vextract.low.u32 %v2596
    %v2598 = vextract.high.u32 %v2596
    %v2599 = vmul.u32 %v2592, %v2583
    %v2600 = vadd.s32 %v2595, %v2597
    %vm2601 = vc.u32 %v2595, %v2597
    %v2602 = vadd.s32 %v2598, 1
    %v2603 = vsel %vm2601, %v2602, %v2598
    %v2604 = vadd.s32 %v2599, %v2603
    %v2605 = vadd.s32 %v2604, 536870912
    %v2606 = vshrl.u32 %v2605, 30
    %v2607 = vshll.u32 %v2606, 30
    %v2608 = vsub.s32 %v2604, %v2607
    %vm2609 = vcmp.lt.s32.totalorder %v2608, 0
    %v2610 = vsub.s32 0, %v2608
    %v2611 = vsel %vm2609, %v2610, %v2608
    %v2612 = vclz %v2611
    %v2613 = vsub.s32 %v2612, 2
    %vm2614 = vcmp.gt.s32.totalorder 0, %v2613
    %v2615 = vsel %vm2614, 0, %v2613
    %v2616 = vsub.s32 32, %v2615
    %v2617 = vshll.u32 %v2608, %v2615
    %v2618 = vshrl.u32 %v2600, %v2616
    %v2619 = vor.u32 %v2617, %v2618
    %v2620 = vsub.s32 4294967266, %v2615
    %v2621 = vadd.s32 %v2620, 127
    %v2622 = vshll.u32 %v2621, 23
    %v2623 = vor.u32 4788187, %v2622
    %v2624 = vand.u32 2147483647, %v2623
    %v2626 = vcvt.s32.f32 %v2619
    %v2627 = vmul.f32 %v2626, %v2624
    %v2628 = vxor.u32 %v2627, 2147483648
    %v2629 = vsel %vm2546, %v2628, %v2627
    %v2630 = vsub.s32 4, %v2606
    %v2631 = vsel %vm2546, %v2630, %v2606
    %v2632 = vsel %vm2545, %v252, %v2629
    %v2633 = vsel %vm2545, 0, %v2631
    %v2634 = vcosq.f32.pop %v2632
    %v2635 = vsinq.f32.pop %v2632
    %vm2636 = vweird.f32 %v252
    %v2637 = vadd.s32 %v2633, 3
    %v2638 = vand.u32 %v2637, 3
    %vm2639 = vcmp.lt.s32.totalorder %v2638, 2
    %vm2640 = vcmp.eq.s32.totalorder %v2638, 0
    %v2641 = vxor.u32 %v2635, 2147483648
    %v2642 = vsel %vm2640, %v2634, %v2641
    %vm2643 = vcmp.eq.s32.totalorder %v2638, 2
    %v2644 = vxor.u32 %v2634, 2147483648
    %v2645 = vsel %vm2643, %v2644, %v2635
    %v2646 = vsel %vm2639, %v2642, %v2645
    %v2647 = vsel %vm2636, nan, %v2646
    %v2648 = vand.u32 2147483647, %v253
    %vm2649 = vcmp.le.f32.partialorder %v2648, 0.7853982
    %vm2650 = vcmp.lt.s32.totalorder %v253, 0
    %v2651 = vand.u32 %v253, 2139095040
    %v2652 = vshrl.u32 %v2651, 23
    %v2653 = vsub.s32 %v2652, 127
    %v2654 = vand.u32 2147483647, %v253
    %v2655 = vand.u32 %v2654, 8388607
    %v2656 = vor.u32 %v2655, 8388608
    %v2657 = vsub.s32 0, %v2656
    %v2658 = vadd.s32 %v2653, 1
    %vm2659 = vcmp.gt.s32.totalorder %v2658, 0
    %v2660 = vsel %vm2659, %v2658, 0
    %v2661 = vshrl.u32 %v2660, 5
    %v2662 = vand.u32 %v2660, 31
    %v2663 = vsub.s32 32, %v2662
    %v2664 = vshrl.u32 683565275, %v2663
    %v2665 = vshll.u32 683565275, %v2662
    %v2666 = vshrl.u32 2475754826, %v2663
    %v2667 = vor.u32 %v2665, %v2666
    %v2668 = vshll.u32 2475754826, %v2662
    %v2669 = vshrl.u32 2131351028, %v2663
    %v2670 = vor.u32 %v2668, %v2669
    %v2671 = vshll.u32 2131351028, %v2662
    %v2672 = vshrl.u32 2102212464, %v2663
    %v2673 = vor.u32 %v2671, %v2672
    %v2674 = vshll.u32 2102212464, %v2662
    %v2675 = vshrl.u32 920167782, %v2663
    %v2676 = vor.u32 %v2674, %v2675
    %v2677 = vshll.u32 920167782, %v2662
    %v2678 = vshrl.u32 1326507024, %v2663
    %v2679 = vor.u32 %v2677, %v2678
    %vm2680 = vcmp.lt.s32.totalorder %v2661, 1
    %vm2681 = vcmp.lt.s32.totalorder %v2661, 2
    %vm2682 = vcmp.lt.s32.totalorder %v2661, 3
    %vm2683 = vcmp.lt.s32.totalorder %v2661, 4
    %v2684 = vsel %vm2680, %v2664, %v2667
    %v2685 = vsel %vm2683, %v2673, 2102212464
    %v2686 = vsel %vm2682, %v2670, %v2685
    %v2687 = vsel %vm2681, %v2684, %v2686
    %v2688 = vsel %vm2680, %v2667, %v2670
    %v2689 = vsel %vm2683, %v2676, 920167782
    %v2690 = vsel %vm2682, %v2673, %v2689
    %v2691 = vsel %vm2681, %v2688, %v2690
    %v2692 = vsel %vm2680, %v2670, %v2673
    %v2693 = vsel %vm2683, %v2679, 1326507024
    %v2694 = vsel %vm2682, %v2676, %v2693
    %v2695 = vsel %vm2681, %v2692, %v2694
    %v2696 = vshll.u32 %v2656, 8
    %v2697 = vmul.u32.u64.compose %v2696, %v2695
    %v2698 = vextract.low.u32 %v2697
    %v2699 = vextract.high.u32 %v2697
    %v2700 = vmul.u32.u64.compose %v2696, %v2691
    %v2701 = vextract.low.u32 %v2700
    %v2702 = vextract.high.u32 %v2700
    %v2703 = vmul.u32 %v2696, %v2687
    %v2704 = vadd.s32 %v2699, %v2701
    %vm2705 = vc.u32 %v2699, %v2701
    %v2706 = vadd.s32 %v2702, 1
    %v2707 = vsel %vm2705, %v2706, %v2702
    %v2708 = vadd.s32 %v2703, %v2707
    %v2709 = vadd.s32 %v2708, 536870912
    %v2710 = vshrl.u32 %v2709, 30
    %v2711 = vshll.u32 %v2710, 30
    %v2712 = vsub.s32 %v2708, %v2711
    %vm2713 = vcmp.lt.s32.totalorder %v2712, 0
    %v2714 = vsub.s32 0, %v2712
    %v2715 = vsel %vm2713, %v2714, %v2712
    %v2716 = vclz %v2715
    %v2717 = vsub.s32 %v2716, 2
    %vm2718 = vcmp.gt.s32.totalorder 0, %v2717
    %v2719 = vsel %vm2718, 0, %v2717
    %v2720 = vsub.s32 32, %v2719
    %v2721 = vshll.u32 %v2712, %v2719
    %v2722 = vshrl.u32 %v2704, %v2720
    %v2723 = vor.u32 %v2721, %v2722
    %v2724 = vsub.s32 4294967266, %v2719
    %v2725 = vadd.s32 %v2724, 127
    %v2726 = vshll.u32 %v2725, 23
    %v2727 = vor.u32 4788187, %v2726
    %v2728 = vand.u32 2147483647, %v2727
    %v2730 = vcvt.s32.f32 %v2723
    %v2731 = vmul.f32 %v2730, %v2728
    %v2732 = vxor.u32 %v2731, 2147483648
    %v2733 = vsel %vm2650, %v2732, %v2731
    %v2734 = vsub.s32 4, %v2710
    %v2735 = vsel %vm2650, %v2734, %v2710
    %v2736 = vsel %vm2649, %v253, %v2733
    %v2737 = vsel %vm2649, 0, %v2735
    %v2738 = vcosq.f32.pop %v2736
    %v2739 = vsinq.f32.pop %v2736
    %vm2740 = vweird.f32 %v253
    %v2741 = vadd.s32 %v2737, 3
    %v2742 = vand.u32 %v2741, 3
    %vm2743 = vcmp.lt.s32.totalorder %v2742, 2
    %vm2744 = vcmp.eq.s32.totalorder %v2742, 0
    %v2745 = vxor.u32 %v2739, 2147483648
    %v2746 = vsel %vm2744, %v2738, %v2745
    %vm2747 = vcmp.eq.s32.totalorder %v2742, 2
    %v2748 = vxor.u32 %v2738, 2147483648
    %v2749 = vsel %vm2747, %v2748, %v2739
    %v2750 = vsel %vm2743, %v2746, %v2749
    %v2751 = vsel %vm2740, nan, %v2750
    %v2752 = vand.u32 2147483647, %v254
    %vm2753 = vcmp.le.f32.partialorder %v2752, 0.7853982
    %vm2754 = vcmp.lt.s32.totalorder %v254, 0
    %v2755 = vand.u32 %v254, 2139095040
    %v2756 = vshrl.u32 %v2755, 23
    %v2757 = vsub.s32 %v2756, 127
    %v2758 = vand.u32 2147483647, %v254
    %v2759 = vand.u32 %v2758, 8388607
    %v2760 = vor.u32 %v2759, 8388608
    %v2761 = vsub.s32 0, %v2760
    %v2762 = vadd.s32 %v2757, 1
    %vm2763 = vcmp.gt.s32.totalorder %v2762, 0
    %v2764 = vsel %vm2763, %v2762, 0
    %v2765 = vshrl.u32 %v2764, 5
    %v2766 = vand.u32 %v2764, 31
    %v2767 = vsub.s32 32, %v2766
    %v2768 = vshrl.u32 683565275, %v2767
    %v2769 = vshll.u32 683565275, %v2766
    %v2770 = vshrl.u32 2475754826, %v2767
    %v2771 = vor.u32 %v2769, %v2770
    %v2772 = vshll.u32 2475754826, %v2766
    %v2773 = vshrl.u32 2131351028, %v2767
    %v2774 = vor.u32 %v2772, %v2773
    %v2775 = vshll.u32 2131351028, %v2766
    %v2776 = vshrl.u32 2102212464, %v2767
    %v2777 = vor.u32 %v2775, %v2776
    %v2778 = vshll.u32 2102212464, %v2766
    %v2779 = vshrl.u32 920167782, %v2767
    %v2780 = vor.u32 %v2778, %v2779
    %v2781 = vshll.u32 920167782, %v2766
    %v2782 = vshrl.u32 1326507024, %v2767
    %v2783 = vor.u32 %v2781, %v2782
    %vm2784 = vcmp.lt.s32.totalorder %v2765, 1
    %vm2785 = vcmp.lt.s32.totalorder %v2765, 2
    %vm2786 = vcmp.lt.s32.totalorder %v2765, 3
    %vm2787 = vcmp.lt.s32.totalorder %v2765, 4
    %v2788 = vsel %vm2784, %v2768, %v2771
    %v2789 = vsel %vm2787, %v2777, 2102212464
    %v2790 = vsel %vm2786, %v2774, %v2789
    %v2791 = vsel %vm2785, %v2788, %v2790
    %v2792 = vsel %vm2784, %v2771, %v2774
    %v2793 = vsel %vm2787, %v2780, 920167782
    %v2794 = vsel %vm2786, %v2777, %v2793
    %v2795 = vsel %vm2785, %v2792, %v2794
    %v2796 = vsel %vm2784, %v2774, %v2777
    %v2797 = vsel %vm2787, %v2783, 1326507024
    %v2798 = vsel %vm2786, %v2780, %v2797
    %v2799 = vsel %vm2785, %v2796, %v2798
    %v2800 = vshll.u32 %v2760, 8
    %v2801 = vmul.u32.u64.compose %v2800, %v2799
    %v2802 = vextract.low.u32 %v2801
    %v2803 = vextract.high.u32 %v2801
    %v2804 = vmul.u32.u64.compose %v2800, %v2795
    %v2805 = vextract.low.u32 %v2804
    %v2806 = vextract.high.u32 %v2804
    %v2807 = vmul.u32 %v2800, %v2791
    %v2808 = vadd.s32 %v2803, %v2805
    %vm2809 = vc.u32 %v2803, %v2805
    %v2810 = vadd.s32 %v2806, 1
    %v2811 = vsel %vm2809, %v2810, %v2806
    %v2812 = vadd.s32 %v2807, %v2811
    %v2813 = vadd.s32 %v2812, 536870912
    %v2814 = vshrl.u32 %v2813, 30
    %v2815 = vshll.u32 %v2814, 30
    %v2816 = vsub.s32 %v2812, %v2815
    %vm2817 = vcmp.lt.s32.totalorder %v2816, 0
    %v2818 = vsub.s32 0, %v2816
    %v2819 = vsel %vm2817, %v2818, %v2816
    %v2820 = vclz %v2819
    %v2821 = vsub.s32 %v2820, 2
    %vm2822 = vcmp.gt.s32.totalorder 0, %v2821
    %v2823 = vsel %vm2822, 0, %v2821
    %v2824 = vsub.s32 32, %v2823
    %v2825 = vshll.u32 %v2816, %v2823
    %v2826 = vshrl.u32 %v2808, %v2824
    %v2827 = vor.u32 %v2825, %v2826
    %v2828 = vsub.s32 4294967266, %v2823
    %v2829 = vadd.s32 %v2828, 127
    %v2830 = vshll.u32 %v2829, 23
    %v2831 = vor.u32 4788187, %v2830
    %v2832 = vand.u32 2147483647, %v2831
    %v2834 = vcvt.s32.f32 %v2827
    %v2835 = vmul.f32 %v2834, %v2832
    %v2836 = vxor.u32 %v2835, 2147483648
    %v2837 = vsel %vm2754, %v2836, %v2835
    %v2838 = vsub.s32 4, %v2814
    %v2839 = vsel %vm2754, %v2838, %v2814
    %v2840 = vsel %vm2753, %v254, %v2837
    %v2841 = vsel %vm2753, 0, %v2839
    %v2842 = vcosq.f32.pop %v2840
    %v2843 = vsinq.f32.pop %v2840
    %vm2844 = vweird.f32 %v254
    %v2845 = vadd.s32 %v2841, 3
    %v2846 = vand.u32 %v2845, 3
    %vm2847 = vcmp.lt.s32.totalorder %v2846, 2
    %vm2848 = vcmp.eq.s32.totalorder %v2846, 0
    %v2849 = vxor.u32 %v2843, 2147483648
    %v2850 = vsel %vm2848, %v2842, %v2849
    %vm2851 = vcmp.eq.s32.totalorder %v2846, 2
    %v2852 = vxor.u32 %v2842, 2147483648
    %v2853 = vsel %vm2851, %v2852, %v2843
    %v2854 = vsel %vm2847, %v2850, %v2853
    %v2855 = vsel %vm2844, nan, %v2854
    %v2856 = vand.u32 2147483647, %v255
    %vm2857 = vcmp.le.f32.partialorder %v2856, 0.7853982
    %vm2858 = vcmp.lt.s32.totalorder %v255, 0
    %v2859 = vand.u32 %v255, 2139095040
    %v2860 = vshrl.u32 %v2859, 23
    %v2861 = vsub.s32 %v2860, 127
    %v2862 = vand.u32 2147483647, %v255
    %v2863 = vand.u32 %v2862, 8388607
    %v2864 = vor.u32 %v2863, 8388608
    %v2865 = vsub.s32 0, %v2864
    %v2866 = vadd.s32 %v2861, 1
    %vm2867 = vcmp.gt.s32.totalorder %v2866, 0
    %v2868 = vsel %vm2867, %v2866, 0
    %v2869 = vshrl.u32 %v2868, 5
    %v2870 = vand.u32 %v2868, 31
    %v2871 = vsub.s32 32, %v2870
    %v2872 = vshrl.u32 683565275, %v2871
    %v2873 = vshll.u32 683565275, %v2870
    %v2874 = vshrl.u32 2475754826, %v2871
    %v2875 = vor.u32 %v2873, %v2874
    %v2876 = vshll.u32 2475754826, %v2870
    %v2877 = vshrl.u32 2131351028, %v2871
    %v2878 = vor.u32 %v2876, %v2877
    %v2879 = vshll.u32 2131351028, %v2870
    %v2880 = vshrl.u32 2102212464, %v2871
    %v2881 = vor.u32 %v2879, %v2880
    %v2882 = vshll.u32 2102212464, %v2870
    %v2883 = vshrl.u32 920167782, %v2871
    %v2884 = vor.u32 %v2882, %v2883
    %v2885 = vshll.u32 920167782, %v2870
    %v2886 = vshrl.u32 1326507024, %v2871
    %v2887 = vor.u32 %v2885, %v2886
    %vm2888 = vcmp.lt.s32.totalorder %v2869, 1
    %vm2889 = vcmp.lt.s32.totalorder %v2869, 2
    %vm2890 = vcmp.lt.s32.totalorder %v2869, 3
    %vm2891 = vcmp.lt.s32.totalorder %v2869, 4
    %v2892 = vsel %vm2888, %v2872, %v2875
    %v2893 = vsel %vm2891, %v2881, 2102212464
    %v2894 = vsel %vm2890, %v2878, %v2893
    %v2895 = vsel %vm2889, %v2892, %v2894
    %v2896 = vsel %vm2888, %v2875, %v2878
    %v2897 = vsel %vm2891, %v2884, 920167782
    %v2898 = vsel %vm2890, %v2881, %v2897
    %v2899 = vsel %vm2889, %v2896, %v2898
    %v2900 = vsel %vm2888, %v2878, %v2881
    %v2901 = vsel %vm2891, %v2887, 1326507024
    %v2902 = vsel %vm2890, %v2884, %v2901
    %v2903 = vsel %vm2889, %v2900, %v2902
    %v2904 = vshll.u32 %v2864, 8
    %v2905 = vmul.u32.u64.compose %v2904, %v2903
    %v2906 = vextract.low.u32 %v2905
    %v2907 = vextract.high.u32 %v2905
    %v2908 = vmul.u32.u64.compose %v2904, %v2899
    %v2909 = vextract.low.u32 %v2908
    %v2910 = vextract.high.u32 %v2908
    %v2911 = vmul.u32 %v2904, %v2895
    %v2912 = vadd.s32 %v2907, %v2909
    %vm2913 = vc.u32 %v2907, %v2909
    %v2914 = vadd.s32 %v2910, 1
    %v2915 = vsel %vm2913, %v2914, %v2910
    %v2916 = vadd.s32 %v2911, %v2915
    %v2917 = vadd.s32 %v2916, 536870912
    %v2918 = vshrl.u32 %v2917, 30
    %v2919 = vshll.u32 %v2918, 30
    %v2920 = vsub.s32 %v2916, %v2919
    %vm2921 = vcmp.lt.s32.totalorder %v2920, 0
    %v2922 = vsub.s32 0, %v2920
    %v2923 = vsel %vm2921, %v2922, %v2920
    %v2924 = vclz %v2923
    %v2925 = vsub.s32 %v2924, 2
    %vm2926 = vcmp.gt.s32.totalorder 0, %v2925
    %v2927 = vsel %vm2926, 0, %v2925
    %v2928 = vsub.s32 32, %v2927
    %v2929 = vshll.u32 %v2920, %v2927
    %v2930 = vshrl.u32 %v2912, %v2928
    %v2931 = vor.u32 %v2929, %v2930
    %v2932 = vsub.s32 4294967266, %v2927
    %v2933 = vadd.s32 %v2932, 127
    %v2934 = vshll.u32 %v2933, 23
    %v2935 = vor.u32 4788187, %v2934
    %v2936 = vand.u32 2147483647, %v2935
    %v2938 = vcvt.s32.f32 %v2931
    %v2939 = vmul.f32 %v2938, %v2936
    %v2940 = vxor.u32 %v2939, 2147483648
    %v2941 = vsel %vm2858, %v2940, %v2939
    %v2942 = vsub.s32 4, %v2918
    %v2943 = vsel %vm2858, %v2942, %v2918
    %v2944 = vsel %vm2857, %v255, %v2941
    %v2945 = vsel %vm2857, 0, %v2943
    %v2946 = vcosq.f32.pop %v2944
    %v2947 = vsinq.f32.pop %v2944
    %vm2948 = vweird.f32 %v255
    %v2949 = vadd.s32 %v2945, 3
    %v2950 = vand.u32 %v2949, 3
    %vm2951 = vcmp.lt.s32.totalorder %v2950, 2
    %vm2952 = vcmp.eq.s32.totalorder %v2950, 0
    %v2953 = vxor.u32 %v2947, 2147483648
    %v2954 = vsel %vm2952, %v2946, %v2953
    %vm2955 = vcmp.eq.s32.totalorder %v2950, 2
    %v2956 = vxor.u32 %v2946, 2147483648
    %v2957 = vsel %vm2955, %v2956, %v2947
    %v2958 = vsel %vm2951, %v2954, %v2957
    %v2959 = vsel %vm2948, nan, %v2958
    %v2960 = vld [vmem:[%s3] sm:$0xff]
    %v2961 = vld [vmem:[%s3 + $0x8] sm:$0xff]
    %v2962 = vld [vmem:[%s3 + $0x10] sm:$0xff]
    %v2963 = vld [vmem:[%s3 + $0x18] sm:$0xff]
    %v2964 = vld [vmem:[%s3 + $0x20] sm:$0xff]
    %v2965 = vld [vmem:[%s3 + $0x28] sm:$0xff]
    %v2966 = vld [vmem:[%s3 + $0x30] sm:$0xff]
    %v2967 = vld [vmem:[%s3 + $0x38] sm:$0xff]
    %v2968 = vld [vmem:[%s3 + $0x40] sm:$0xff]
    %v2969 = vld [vmem:[%s3 + $0x48] sm:$0xff]
    %v2970 = vld [vmem:[%s3 + $0x50] sm:$0xff]
    %v2971 = vld [vmem:[%s3 + $0x58] sm:$0xff]
    %v2972 = vld [vmem:[%s3 + $0x60] sm:$0xf]
    %v2973 = vld [vmem:[%s4] sm:$0xff]
    %v2974 = vld [vmem:[%s4 + $0x8] sm:$0xff]
    %v2975 = vld [vmem:[%s4 + $0x10] sm:$0xff]
    %v2976 = vld [vmem:[%s4 + $0x18] sm:$0xff]
    %v2977 = vld [vmem:[%s4 + $0x20] sm:$0xff]
    %v2978 = vld [vmem:[%s4 + $0x28] sm:$0xff]
    %v2979 = vld [vmem:[%s4 + $0x30] sm:$0xff]
    %v2980 = vld [vmem:[%s4 + $0x38] sm:$0xff]
    %v2981 = vld [vmem:[%s4 + $0x40] sm:$0xff]
    %v2982 = vld [vmem:[%s4 + $0x48] sm:$0xff]
    %v2983 = vld [vmem:[%s4 + $0x50] sm:$0xff]
    %v2984 = vld [vmem:[%s4 + $0x58] sm:$0xff]
    %v2985 = vld [vmem:[%s4 + $0x60] sm:$0xf]
    %2987 = vset.pattern.permute.xlu0 0
    %2988 = vperm.xlu0 %2987, %v2973
    %v2989 = vpop.permute.xlu0 %2988
    %2992 = vset.pattern.permute.xlu0 0
    %2993 = vperm.xlu0 %2992, %v2974
    %v2994 = vpop.permute.xlu0 %2993
    %2997 = vset.pattern.permute.xlu0 0
    %2998 = vperm.xlu0 %2997, %v2975
    %v2999 = vpop.permute.xlu0 %2998
    %3002 = vset.pattern.permute.xlu0 0
    %3003 = vperm.xlu0 %3002, %v2976
    %v3004 = vpop.permute.xlu0 %3003
    %3007 = vset.pattern.permute.xlu0 0
    %3008 = vperm.xlu0 %3007, %v2977
    %v3009 = vpop.permute.xlu0 %3008
    %3012 = vset.pattern.permute.xlu0 0
    %3013 = vperm.xlu0 %3012, %v2978
    %v3014 = vpop.permute.xlu0 %3013
    %3017 = vset.pattern.permute.xlu0 0
    %3018 = vperm.xlu0 %3017, %v2979
    %v3019 = vpop.permute.xlu0 %3018
    %3022 = vset.pattern.permute.xlu0 0
    %3023 = vperm.xlu0 %3022, %v2980
    %v3024 = vpop.permute.xlu0 %3023
    %3027 = vset.pattern.permute.xlu0 0
    %3028 = vperm.xlu0 %3027, %v2981
    %v3029 = vpop.permute.xlu0 %3028
    %3032 = vset.pattern.permute.xlu0 0
    %3033 = vperm.xlu0 %3032, %v2982
    %v3034 = vpop.permute.xlu0 %3033
    %3037 = vset.pattern.permute.xlu0 0
    %3038 = vperm.xlu0 %3037, %v2983
    %v3039 = vpop.permute.xlu0 %3038
    %3042 = vset.pattern.permute.xlu0 0
    %3043 = vperm.xlu0 %3042, %v2984
    %v3044 = vpop.permute.xlu0 %3043
    %3047 = vset.pattern.permute.xlu0 0
    %3048 = vperm.xlu0 %3047, %v2985
    %v3049 = vpop.permute.xlu0 %3048
    %vm3051 = vcmask 818176
    %v3053 = vsel %vm3051, %v2960, 0
    %v3056 = vsel %vm3051, %v2961, 0
    %v3059 = vsel %vm3051, %v2962, 0
    %v3062 = vsel %vm3051, %v2963, 0
    %v3065 = vsel %vm3051, %v2964, 0
    %v3068 = vsel %vm3051, %v2965, 0
    %v3071 = vsel %vm3051, %v2966, 0
    %v3074 = vsel %vm3051, %v2967, 0
    %v3077 = vsel %vm3051, %v2968, 0
    %v3080 = vsel %vm3051, %v2969, 0
    %v3083 = vsel %vm3051, %v2970, 0
    %v3086 = vsel %vm3051, %v2971, 0
    %v3089 = vsel %vm3051, %v2972, 0
    %vm3091 = vcmask 1043456
    %v3093 = vsel %vm3091, %v2855, 0
    %v3096 = vsel %vm3091, %v2959, 0
    %3098 = vmatprep.subr.mxu0 %v463
    %3099 = vmatpush1.msra.mxu0 %v359
    %3100 = vmatprep.subr.mxu0 %v671
    %3101 = vmatpush1.msra.mxu0 %v567
    %3102 = vmatprep.subr.mxu0 %v879
    %3103 = vmatpush1.msra.mxu0 %v775
    %3104 = vmatprep.subr.mxu0 %v1087
    %3105 = vmatpush1.msra.mxu0 %v983
    %3106 = vmatprep.subr.mxu0 %v1295
    %3107 = vmatpush1.msra.mxu0 %v1191
    %3108 = vmatprep.subr.mxu0 %v1503
    %3109 = vmatpush1.msra.mxu0 %v1399
    %3110 = vmatprep.subr.mxu0 %v1711
    %3111 = vmatpush1.msra.mxu0 %v1607
    %3112 = vmatprep.subr.mxu0 %v1919
    %3113 = vmatpush1.msra.mxu0 %v1815
    %3114 = vmatprep.subr.mxu0 %v2127
    %3115 = vmatpush1.msra.mxu0 %v2023
    %3116 = vmatprep.subr.mxu0 %v2335
    %3117 = vmatpush1.msra.mxu0 %v2231
    %3118 = vmatprep.subr.mxu0 %v2543
    %3119 = vmatpush1.msra.mxu0 %v2439
    %3120 = vmatprep.subr.mxu0 %v2751
    %3121 = vmatpush1.msra.mxu0 %v2647
    %3122 = vmatprep.subr.mxu0 %v3096
    %3123 = vmatpush1.msra.mxu0 %v3093
    %3124 = vmatprep.subr.mxu0 0.0
    %3125 = vmatpush1.msra.mxu0 0.0
    %3126 = vmatprep.subr.mxu0 0.0
    %3127 = vmatpush1.msra.mxu0 0.0
    %3128 = vmatprep.subr.mxu0 0.0
    %3129 = vmatpush1.msra.mxu0 0.0
    %3130 = vmatprep.subr.mxu0 0.0
    %3131 = vmatpush1.msra.mxu0 0.0
    %3132 = vmatprep.subr.mxu0 0.0
    %3133 = vmatpush1.msra.mxu0 0.0
    %3134 = vmatprep.subr.mxu0 0.0
    %3135 = vmatpush1.msra.mxu0 0.0
    %3136 = vmatprep.subr.mxu0 0.0
    %3137 = vmatpush1.msra.mxu0 0.0
    %3138 = vmatprep.subr.mxu0 0.0
    %3139 = vmatpush1.msra.mxu0 0.0
    %3140 = vmatprep.subr.mxu0 0.0
    %3141 = vmatpush1.msra.mxu0 0.0
    %3142 = vmatprep.subr.mxu0 0.0
    %3143 = vmatpush1.msra.mxu0 0.0
    %3144 = vmatprep.subr.mxu0 0.0
    %3145 = vmatpush1.msra.mxu0 0.0
    %3146 = vmatprep.subr.mxu0 0.0
    %3147 = vmatpush1.msra.mxu0 0.0
    %3148 = vmatprep.subr.mxu0 0.0
    %3149 = vmatpush1.msra.mxu0 0.0
    %3150 = vmatprep.subr.mxu0 0.0
    %3151 = vmatpush1.msra.mxu0 0.0
    %3152 = vmatprep.subr.mxu0 0.0
    %3153 = vmatpush1.msra.mxu0 0.0
    %3154 = vmatprep.subr.mxu0 0.0
    %3155 = vmatpush1.msra.mxu0 0.0
    %3156 = vmatprep.subr.mxu0 0.0
    %3157 = vmatpush1.msra.mxu0 0.0
    %3158 = vmatprep.subr.mxu0 0.0
    %3159 = vmatpush1.msra.mxu0 0.0
    %3160 = vmatprep.subr.mxu0 0.0
    %3161 = vmatpush1.msra.mxu0 0.0
    %3162 = vmatprep.mubr.f32.mxu0 0.0
    %3163 = vmatmul.mubr.f32.gmra.mrb[0].mxu0 %v3053
    %v3164 = vpop.f32.mrb[0].mxu0
    %v3165 = vadd.f32 %v2989, %v3164
    %v3166 = vpop.f32.mrb[0].mxu0
    %v3167 = vadd.f32 %v2989, %v3166
    %3168 = vmatprep.mubr.f32.mxu0 0.0
    %3169 = vmatmul.mubr.f32.gmra.mrb[0].mxu0 %v3056
    %v3170 = vpop.f32.mrb[0].mxu0
    %v3171 = vadd.f32 %v2994, %v3170
    %v3172 = vpop.f32.mrb[0].mxu0
    %v3173 = vadd.f32 %v2994, %v3172
    %3174 = vmatprep.mubr.f32.mxu0 0.0
    %3175 = vmatmul.mubr.f32.gmra.mrb[0].mxu0 %v3059
    %v3176 = vpop.f32.mrb[0].mxu0
    %v3177 = vadd.f32 %v2999, %v3176
    %v3178 = vpop.f32.mrb[0].mxu0
    %v3179 = vadd.f32 %v2999, %v3178
    %3180 = vmatprep.mubr.f32.mxu0 0.0
    %3181 = vmatmul.mubr.f32.gmra.mrb[0].mxu0 %v3062
    %v3182 = vpop.f32.mrb[0].mxu0
    %v3183 = vadd.f32 %v3004, %v3182
    %v3184 = vpop.f32.mrb[0].mxu0
    %v3185 = vadd.f32 %v3004, %v3184
    %3186 = vmatprep.mubr.f32.mxu0 0.0
    %3187 = vmatmul.mubr.f32.gmra.mrb[0].mxu0 %v3065
    %v3188 = vpop.f32.mrb[0].mxu0
    %v3189 = vadd.f32 %v3009, %v3188
    %v3190 = vpop.f32.mrb[0].mxu0
    %v3191 = vadd.f32 %v3009, %v3190
    %3192 = vmatprep.mubr.f32.mxu0 0.0
    %3193 = vmatmul.mubr.f32.gmra.mrb[0].mxu0 %v3068
    %v3194 = vpop.f32.mrb[0].mxu0
    %v3195 = vadd.f32 %v3014, %v3194
    %v3196 = vpop.f32.mrb[0].mxu0
    %v3197 = vadd.f32 %v3014, %v3196
    %3198 = vmatprep.mubr.f32.mxu0 0.0
    %3199 = vmatmul.mubr.f32.gmra.mrb[0].mxu0 %v3071
    %v3200 = vpop.f32.mrb[0].mxu0
    %v3201 = vadd.f32 %v3019, %v3200
    %v3202 = vpop.f32.mrb[0].mxu0
    %v3203 = vadd.f32 %v3019, %v3202
    %3204 = vmatprep.mubr.f32.mxu0 0.0
    %3205 = vmatmul.mubr.f32.gmra.mrb[0].mxu0 %v3074
    %v3206 = vpop.f32.mrb[0].mxu0
    %v3207 = vadd.f32 %v3024, %v3206
    %v3208 = vpop.f32.mrb[0].mxu0
    %v3209 = vadd.f32 %v3024, %v3208
    %3210 = vmatprep.mubr.f32.mxu0 0.0
    %3211 = vmatmul.mubr.f32.gmra.mrb[0].mxu0 %v3077
    %v3212 = vpop.f32.mrb[0].mxu0
    %v3213 = vadd.f32 %v3029, %v3212
    %v3214 = vpop.f32.mrb[0].mxu0
    %v3215 = vadd.f32 %v3029, %v3214
    %3216 = vmatprep.mubr.f32.mxu0 0.0
    %3217 = vmatmul.mubr.f32.gmra.mrb[0].mxu0 %v3080
    %v3218 = vpop.f32.mrb[0].mxu0
    %v3219 = vadd.f32 %v3034, %v3218
    %v3220 = vpop.f32.mrb[0].mxu0
    %v3221 = vadd.f32 %v3034, %v3220
    %3222 = vmatprep.mubr.f32.mxu0 0.0
    %3223 = vmatmul.mubr.f32.gmra.mrb[0].mxu0 %v3083
    %v3224 = vpop.f32.mrb[0].mxu0
    %v3225 = vadd.f32 %v3039, %v3224
    %v3226 = vpop.f32.mrb[0].mxu0
    %v3227 = vadd.f32 %v3039, %v3226
    %3228 = vmatprep.mubr.f32.mxu0 0.0
    %3229 = vmatmul.mubr.f32.gmra.mrb[0].mxu0 %v3086
    %v3230 = vpop.f32.mrb[0].mxu0
    %v3231 = vadd.f32 %v3044, %v3230
    %v3232 = vpop.f32.mrb[0].mxu0
    %v3233 = vadd.f32 %v3044, %v3232
    %3234 = vmatprep.mubr.f32.mxu0 0.0
    %3235 = vmatmul.mubr.f32.gmra.mrb[0].mxu0 %v3089
    %v3236 = vpop.f32.mrb[0].mxu0
    %v3237 = vadd.f32 %v3049, %v3236
    %v3238 = vpop.f32.mrb[0].mxu0
    %v3239 = vadd.f32 %v3049, %v3238
    %3240 = vdwg.mxu0
    %v3241 = vtanh.pop %v3165
    %v3242 = vtanh.pop %v3167
    %v3243 = vtanh.pop %v3171
    %v3244 = vtanh.pop %v3173
    %v3245 = vtanh.pop %v3177
    %v3246 = vtanh.pop %v3179
    %v3247 = vtanh.pop %v3183
    %v3248 = vtanh.pop %v3185
    %v3249 = vtanh.pop %v3189
    %v3250 = vtanh.pop %v3191
    %v3251 = vtanh.pop %v3195
    %v3252 = vtanh.pop %v3197
    %v3253 = vtanh.pop %v3201
    %v3254 = vtanh.pop %v3203
    %v3255 = vtanh.pop %v3207
    %v3256 = vtanh.pop %v3209
    %v3257 = vtanh.pop %v3213
    %v3258 = vtanh.pop %v3215
    %v3259 = vtanh.pop %v3219
    %v3260 = vtanh.pop %v3221
    %v3261 = vtanh.pop %v3225
    %v3262 = vtanh.pop %v3227
    %v3263 = vtanh.pop %v3231
    %v3264 = vtanh.pop %v3233
    %v3265 = vtanh.pop %v3237
    %v3266 = vtanh.pop %v3239
    %v3267 = vld [vmem:[%s5] sm:$0xff]
    %v3268 = vld [vmem:[%s5 + $0x8] sm:$0xff]
    %v3269 = vld [vmem:[%s5 + $0x10] sm:$0xff]
    %v3270 = vld [vmem:[%s5 + $0x18] sm:$0xff]
    %v3271 = vld [vmem:[%s5 + $0x20] sm:$0xff]
    %v3272 = vld [vmem:[%s5 + $0x28] sm:$0xff]
    %v3273 = vld [vmem:[%s5 + $0x30] sm:$0xff]
    %v3274 = vld [vmem:[%s5 + $0x38] sm:$0xff]
    %v3275 = vld [vmem:[%s5 + $0x40] sm:$0xff]
    %v3276 = vld [vmem:[%s5 + $0x48] sm:$0xff]
    %v3277 = vld [vmem:[%s5 + $0x50] sm:$0xff]
    %v3278 = vld [vmem:[%s5 + $0x58] sm:$0xff]
    %v3279 = vld [vmem:[%s5 + $0x60] sm:$0xf]
    %v3280 = vld [vmem:[%s6] sm:$0xff]
    %v3281 = vld [vmem:[%s6 + $0x8] sm:$0xff]
    %v3282 = vld [vmem:[%s6 + $0x10] sm:$0xff]
    %v3283 = vld [vmem:[%s6 + $0x18] sm:$0xff]
    %v3284 = vld [vmem:[%s6 + $0x20] sm:$0xff]
    %v3285 = vld [vmem:[%s6 + $0x28] sm:$0xff]
    %v3286 = vld [vmem:[%s6 + $0x30] sm:$0xff]
    %v3287 = vld [vmem:[%s6 + $0x38] sm:$0xff]
    %v3288 = vld [vmem:[%s6 + $0x40] sm:$0xff]
    %v3289 = vld [vmem:[%s6 + $0x48] sm:$0xff]
    %v3290 = vld [vmem:[%s6 + $0x50] sm:$0xff]
    %v3291 = vld [vmem:[%s6 + $0x58] sm:$0xff]
    %v3292 = vld [vmem:[%s6 + $0x60] sm:$0xf]
    %3294 = vset.pattern.permute.xlu0 0
    %3295 = vperm.xlu0 %3294, %v3280
    %v3296 = vpop.permute.xlu0 %3295
    %3299 = vset.pattern.permute.xlu0 0
    %3300 = vperm.xlu0 %3299, %v3281
    %v3301 = vpop.permute.xlu0 %3300
    %3304 = vset.pattern.permute.xlu0 0
    %3305 = vperm.xlu0 %3304, %v3282
    %v3306 = vpop.permute.xlu0 %3305
    %3309 = vset.pattern.permute.xlu0 0
    %3310 = vperm.xlu0 %3309, %v3283
    %v3311 = vpop.permute.xlu0 %3310
    %3314 = vset.pattern.permute.xlu0 0
    %3315 = vperm.xlu0 %3314, %v3284
    %v3316 = vpop.permute.xlu0 %3315
    %3319 = vset.pattern.permute.xlu0 0
    %3320 = vperm.xlu0 %3319, %v3285
    %v3321 = vpop.permute.xlu0 %3320
    %3324 = vset.pattern.permute.xlu0 0
    %3325 = vperm.xlu0 %3324, %v3286
    %v3326 = vpop.permute.xlu0 %3325
    %3329 = vset.pattern.permute.xlu0 0
    %3330 = vperm.xlu0 %3329, %v3287
    %v3331 = vpop.permute.xlu0 %3330
    %3334 = vset.pattern.permute.xlu0 0
    %3335 = vperm.xlu0 %3334, %v3288
    %v3336 = vpop.permute.xlu0 %3335
    %3339 = vset.pattern.permute.xlu0 0
    %3340 = vperm.xlu0 %3339, %v3289
    %v3341 = vpop.permute.xlu0 %3340
    %3344 = vset.pattern.permute.xlu0 0
    %3345 = vperm.xlu0 %3344, %v3290
    %v3346 = vpop.permute.xlu0 %3345
    %3349 = vset.pattern.permute.xlu0 0
    %3350 = vperm.xlu0 %3349, %v3291
    %v3351 = vpop.permute.xlu0 %3350
    %3354 = vset.pattern.permute.xlu0 0
    %3355 = vperm.xlu0 %3354, %v3292
    %v3356 = vpop.permute.xlu0 %3355
    %v3359 = vsel %vm3051, %v3267, 0
    %v3362 = vsel %vm3051, %v3268, 0
    %v3365 = vsel %vm3051, %v3269, 0
    %v3368 = vsel %vm3051, %v3270, 0
    %v3371 = vsel %vm3051, %v3271, 0
    %v3374 = vsel %vm3051, %v3272, 0
    %v3377 = vsel %vm3051, %v3273, 0
    %v3380 = vsel %vm3051, %v3274, 0
    %v3383 = vsel %vm3051, %v3275, 0
    %v3386 = vsel %vm3051, %v3276, 0
    %v3389 = vsel %vm3051, %v3277, 0
    %v3392 = vsel %vm3051, %v3278, 0
    %v3395 = vsel %vm3051, %v3279, 0
    %v3398 = vsel %vm3091, %v3265, 0
    %v3401 = vsel %vm3091, %v3266, 0
    %3403 = vmatprep.subr.mxu0 %v3242
    %3404 = vmatpush1.msra.mxu0 %v3241
    %3405 = vmatprep.subr.mxu0 %v3244
    %3406 = vmatpush1.msra.mxu0 %v3243
    %3407 = vmatprep.subr.mxu0 %v3246
    %3408 = vmatpush1.msra.mxu0 %v3245
    %3409 = vmatprep.subr.mxu0 %v3248
    %3410 = vmatpush1.msra.mxu0 %v3247
    %3411 = vmatprep.subr.mxu0 %v3250
    %3412 = vmatpush1.msra.mxu0 %v3249
    %3413 = vmatprep.subr.mxu0 %v3252
    %3414 = vmatpush1.msra.mxu0 %v3251
    %3415 = vmatprep.subr.mxu0 %v3254
    %3416 = vmatpush1.msra.mxu0 %v3253
    %3417 = vmatprep.subr.mxu0 %v3256
    %3418 = vmatpush1.msra.mxu0 %v3255
    %3419 = vmatprep.subr.mxu0 %v3258
    %3420 = vmatpush1.msra.mxu0 %v3257
    %3421 = vmatprep.subr.mxu0 %v3260
    %3422 = vmatpush1.msra.mxu0 %v3259
    %3423 = vmatprep.subr.mxu0 %v3262
    %3424 = vmatpush1.msra.mxu0 %v3261
    %3425 = vmatprep.subr.mxu0 %v3264
    %3426 = vmatpush1.msra.mxu0 %v3263
    %3427 = vmatprep.subr.mxu0 %v3401
    %3428 = vmatpush1.msra.mxu0 %v3398
    %3429 = vmatprep.subr.mxu0 0.0
    %3430 = vmatpush1.msra.mxu0 0.0
    %3431 = vmatprep.subr.mxu0 0.0
    %3432 = vmatpush1.msra.mxu0 0.0
    %3433 = vmatprep.subr.mxu0 0.0
    %3434 = vmatpush1.msra.mxu0 0.0
    %3435 = vmatprep.subr.mxu0 0.0
    %3436 = vmatpush1.msra.mxu0 0.0
    %3437 = vmatprep.subr.mxu0 0.0
    %3438 = vmatpush1.msra.mxu0 0.0
    %3439 = vmatprep.subr.mxu0 0.0
    %3440 = vmatpush1.msra.mxu0 0.0
    %3441 = vmatprep.subr.mxu0 0.0
    %3442 = vmatpush1.msra.mxu0 0.0
    %3443 = vmatprep.subr.mxu0 0.0
    %3444 = vmatpush1.msra.mxu0 0.0
    %3445 = vmatprep.subr.mxu0 0.0
    %3446 = vmatpush1.msra.mxu0 0.0
    %3447 = vmatprep.subr.mxu0 0.0
    %3448 = vmatpush1.msra.mxu0 0.0
    %3449 = vmatprep.subr.mxu0 0.0
    %3450 = vmatpush1.msra.mxu0 0.0
    %3451 = vmatprep.subr.mxu0 0.0
    %3452 = vmatpush1.msra.mxu0 0.0
    %3453 = vmatprep.subr.mxu0 0.0
    %3454 = vmatpush1.msra.mxu0 0.0
    %3455 = vmatprep.subr.mxu0 0.0
    %3456 = vmatpush1.msra.mxu0 0.0
    %3457 = vmatprep.subr.mxu0 0.0
    %3458 = vmatpush1.msra.mxu0 0.0
    %3459 = vmatprep.subr.mxu0 0.0
    %3460 = vmatpush1.msra.mxu0 0.0
    %3461 = vmatprep.subr.mxu0 0.0
    %3462 = vmatpush1.msra.mxu0 0.0
    %3463 = vmatprep.subr.mxu0 0.0
    %3464 = vmatpush1.msra.mxu0 0.0
    %3465 = vmatprep.subr.mxu0 0.0
    %3466 = vmatpush1.msra.mxu0 0.0
    %3467 = vmatprep.mubr.f32.mxu0 0.0
    %3468 = vmatmul.mubr.f32.gmra.mrb[0].mxu0 %v3359
    %v3469 = vpop.f32.mrb[0].mxu0
    %v3470 = vadd.f32 %v3296, %v3469
    %v3471 = vpop.f32.mrb[0].mxu0
    %v3472 = vadd.f32 %v3296, %v3471
    %3473 = vmatprep.mubr.f32.mxu0 0.0
    %3474 = vmatmul.mubr.f32.gmra.mrb[0].mxu0 %v3362
    %v3475 = vpop.f32.mrb[0].mxu0
    %v3476 = vadd.f32 %v3301, %v3475
    %v3477 = vpop.f32.mrb[0].mxu0
    %v3478 = vadd.f32 %v3301, %v3477
    %3479 = vmatprep.mubr.f32.mxu0 0.0
    %3480 = vmatmul.mubr.f32.gmra.mrb[0].mxu0 %v3365
    %v3481 = vpop.f32.mrb[0].mxu0
    %v3482 = vadd.f32 %v3306, %v3481
    %v3483 = vpop.f32.mrb[0].mxu0
    %v3484 = vadd.f32 %v3306, %v3483
    %3485 = vmatprep.mubr.f32.mxu0 0.0
    %3486 = vmatmul.mubr.f32.gmra.mrb[0].mxu0 %v3368
    %v3487 = vpop.f32.mrb[0].mxu0
    %v3488 = vadd.f32 %v3311, %v3487
    %v3489 = vpop.f32.mrb[0].mxu0
    %v3490 = vadd.f32 %v3311, %v3489
    %3491 = vmatprep.mubr.f32.mxu0 0.0
    %3492 = vmatmul.mubr.f32.gmra.mrb[0].mxu0 %v3371
    %v3493 = vpop.f32.mrb[0].mxu0
    %v3494 = vadd.f32 %v3316, %v3493
    %v3495 = vpop.f32.mrb[0].mxu0
    %v3496 = vadd.f32 %v3316, %v3495
    %3497 = vmatprep.mubr.f32.mxu0 0.0
    %3498 = vmatmul.mubr.f32.gmra.mrb[0].mxu0 %v3374
    %v3499 = vpop.f32.mrb[0].mxu0
    %v3500 = vadd.f32 %v3321, %v3499
    %v3501 = vpop.f32.mrb[0].mxu0
    %v3502 = vadd.f32 %v3321, %v3501
    %3503 = vmatprep.mubr.f32.mxu0 0.0
    %3504 = vmatmul.mubr.f32.gmra.mrb[0].mxu0 %v3377
    %v3505 = vpop.f32.mrb[0].mxu0
    %v3506 = vadd.f32 %v3326, %v3505
    %v3507 = vpop.f32.mrb[0].mxu0
    %v3508 = vadd.f32 %v3326, %v3507
    %3509 = vmatprep.mubr.f32.mxu0 0.0
    %3510 = vmatmul.mubr.f32.gmra.mrb[0].mxu0 %v3380
    %v3511 = vpop.f32.mrb[0].mxu0
    %v3512 = vadd.f32 %v3331, %v3511
    %v3513 = vpop.f32.mrb[0].mxu0
    %v3514 = vadd.f32 %v3331, %v3513
    %3515 = vmatprep.mubr.f32.mxu0 0.0
    %3516 = vmatmul.mubr.f32.gmra.mrb[0].mxu0 %v3383
    %v3517 = vpop.f32.mrb[0].mxu0
    %v3518 = vadd.f32 %v3336, %v3517
    %v3519 = vpop.f32.mrb[0].mxu0
    %v3520 = vadd.f32 %v3336, %v3519
    %3521 = vmatprep.mubr.f32.mxu0 0.0
    %3522 = vmatmul.mubr.f32.gmra.mrb[0].mxu0 %v3386
    %v3523 = vpop.f32.mrb[0].mxu0
    %v3524 = vadd.f32 %v3341, %v3523
    %v3525 = vpop.f32.mrb[0].mxu0
    %v3526 = vadd.f32 %v3341, %v3525
    %3527 = vmatprep.mubr.f32.mxu0 0.0
    %3528 = vmatmul.mubr.f32.gmra.mrb[0].mxu0 %v3389
    %v3529 = vpop.f32.mrb[0].mxu0
    %v3530 = vadd.f32 %v3346, %v3529
    %v3531 = vpop.f32.mrb[0].mxu0
    %v3532 = vadd.f32 %v3346, %v3531
    %3533 = vmatprep.mubr.f32.mxu0 0.0
    %3534 = vmatmul.mubr.f32.gmra.mrb[0].mxu0 %v3392
    %v3535 = vpop.f32.mrb[0].mxu0
    %v3536 = vadd.f32 %v3351, %v3535
    %v3537 = vpop.f32.mrb[0].mxu0
    %v3538 = vadd.f32 %v3351, %v3537
    %3539 = vmatprep.mubr.f32.mxu0 0.0
    %3540 = vmatmul.mubr.f32.gmra.mrb[0].mxu0 %v3395
    %v3541 = vpop.f32.mrb[0].mxu0
    %v3542 = vadd.f32 %v3356, %v3541
    %v3543 = vpop.f32.mrb[0].mxu0
    %v3544 = vadd.f32 %v3356, %v3543
    %3545 = vdwg.mxu0
    %v3546 = vtanh.pop %v3470
    %v3547 = vtanh.pop %v3472
    %v3548 = vtanh.pop %v3476
    %v3549 = vtanh.pop %v3478
    %v3550 = vtanh.pop %v3482
    %v3551 = vtanh.pop %v3484
    %v3552 = vtanh.pop %v3488
    %v3553 = vtanh.pop %v3490
    %v3554 = vtanh.pop %v3494
    %v3555 = vtanh.pop %v3496
    %v3556 = vtanh.pop %v3500
    %v3557 = vtanh.pop %v3502
    %v3558 = vtanh.pop %v3506
    %v3559 = vtanh.pop %v3508
    %v3560 = vtanh.pop %v3512
    %v3561 = vtanh.pop %v3514
    %v3562 = vtanh.pop %v3518
    %v3563 = vtanh.pop %v3520
    %v3564 = vtanh.pop %v3524
    %v3565 = vtanh.pop %v3526
    %v3566 = vtanh.pop %v3530
    %v3567 = vtanh.pop %v3532
    %v3568 = vtanh.pop %v3536
    %v3569 = vtanh.pop %v3538
    %v3570 = vtanh.pop %v3542
    %v3571 = vtanh.pop %v3544
    %v3572 = vld [vmem:[%s7] sm:$0x1]
    %v3573 = vld [vmem:[#allocation2] sm:$0x1]
    %3575 = vset.pattern.permute.xlu0 0
    %3576 = vperm.xlu0 %3575, %v3573
    %v3577 = vpop.permute.xlu0 %3576
    %v3579 = vlaneseq
    %v3580 = vshrl.u32 %v3579, 7
    %v3581 = vsub.s32 0, %v3580
    %v3582 = vrot.slane %v3577, %v3581
    %v3584 = vsel %vm3051, %v3572, 0
    %v3587 = vsel %vm3091, %v3570, 0
    %v3590 = vsel %vm3091, %v3571, 0
    %3592 = vmatprep.subr.mxu0 %v3547
    %3593 = vmatpush1.msra.mxu0 %v3546
    %3594 = vmatprep.subr.mxu0 %v3549
    %3595 = vmatpush1.msra.mxu0 %v3548
    %3596 = vmatprep.subr.mxu0 %v3551
    %3597 = vmatpush1.msra.mxu0 %v3550
    %3598 = vmatprep.subr.mxu0 %v3553
    %3599 = vmatpush1.msra.mxu0 %v3552
    %3600 = vmatprep.subr.mxu0 %v3555
    %3601 = vmatpush1.msra.mxu0 %v3554
    %3602 = vmatprep.subr.mxu0 %v3557
    %3603 = vmatpush1.msra.mxu0 %v3556
    %3604 = vmatprep.subr.mxu0 %v3559
    %3605 = vmatpush1.msra.mxu0 %v3558
    %3606 = vmatprep.subr.mxu0 %v3561
    %3607 = vmatpush1.msra.mxu0 %v3560
    %3608 = vmatprep.subr.mxu0 %v3563
    %3609 = vmatpush1.msra.mxu0 %v3562
    %3610 = vmatprep.subr.mxu0 %v3565
    %3611 = vmatpush1.msra.mxu0 %v3564
    %3612 = vmatprep.subr.mxu0 %v3567
    %3613 = vmatpush1.msra.mxu0 %v3566
    %3614 = vmatprep.subr.mxu0 %v3569
    %3615 = vmatpush1.msra.mxu0 %v3568
    %3616 = vmatprep.subr.mxu0 %v3590
    %3617 = vmatpush1.msra.mxu0 %v3587
    %3618 = vmatprep.subr.mxu0 0.0
    %3619 = vmatpush1.msra.mxu0 0.0
    %3620 = vmatprep.subr.mxu0 0.0
    %3621 = vmatpush1.msra.mxu0 0.0
    %3622 = vmatprep.subr.mxu0 0.0
    %3623 = vmatpush1.msra.mxu0 0.0
    %3624 = vmatprep.subr.mxu0 0.0
    %3625 = vmatpush1.msra.mxu0 0.0
    %3626 = vmatprep.subr.mxu0 0.0
    %3627 = vmatpush1.msra.mxu0 0.0
    %3628 = vmatprep.subr.mxu0 0.0
    %3629 = vmatpush1.msra.mxu0 0.0
    %3630 = vmatprep.subr.mxu0 0.0
    %3631 = vmatpush1.msra.mxu0 0.0
    %3632 = vmatprep.subr.mxu0 0.0
    %3633 = vmatpush1.msra.mxu0 0.0
    %3634 = vmatprep.subr.mxu0 0.0
    %3635 = vmatpush1.msra.mxu0 0.0
    %3636 = vmatprep.subr.mxu0 0.0
    %3637 = vmatpush1.msra.mxu0 0.0
    %3638 = vmatprep.subr.mxu0 0.0
    %3639 = vmatpush1.msra.mxu0 0.0
    %3640 = vmatprep.subr.mxu0 0.0
    %3641 = vmatpush1.msra.mxu0 0.0
    %3642 = vmatprep.subr.mxu0 0.0
    %3643 = vmatpush1.msra.mxu0 0.0
    %3644 = vmatprep.subr.mxu0 0.0
    %3645 = vmatpush1.msra.mxu0 0.0
    %3646 = vmatprep.subr.mxu0 0.0
    %3647 = vmatpush1.msra.mxu0 0.0
    %3648 = vmatprep.subr.mxu0 0.0
    %3649 = vmatpush1.msra.mxu0 0.0
    %3650 = vmatprep.subr.mxu0 0.0
    %3651 = vmatpush1.msra.mxu0 0.0
    %3652 = vmatprep.subr.mxu0 0.0
    %3653 = vmatpush1.msra.mxu0 0.0
    %3654 = vmatprep.subr.mxu0 0.0
    %3655 = vmatpush1.msra.mxu0 0.0
    %3656 = vmatprep.mubr.f32.mxu0 0.0
    %3657 = vmatmul.mubr.f32.gmra.mrb[0].mxu0 %v3584
    %v3658 = vpop.f32.mrb[0].mxu0
    %v3659 = vadd.f32 %v3582, %v3658
    %v3660 = vpop.f32.mrb[0].mxu0
    %v3661 = vadd.f32 %v3582, %v3660
    %3662 = vdwg.mxu0
    %v3665 = vcombine.low %v3659, %v3661
    %v3667 = vunpack.c.l.s4 1966171168
    %v3668 = vunpack.c.0.s8 %v3667
    %v3669 = vlaneseq
    %v3670 = vshrl.u32 %v3669, 7
    %v3671 = vsub.s32 %v3668, %v3670
    %v3672 = vrot.slane %v3665, %v3671
    %v3674 = vunpack.c.l.s4 1966171168
    %v3675 = vunpack.c.0.s8 %v3674
    %v3676 = vlaneseq
    %v3677 = vshrl.u32 %v3676, 7
    %v3678 = vsub.s32 %v3675, %v3677
    %v3679 = vrot.slane %v3672, %v3678
    %v3681 = vlaneseq
    %vm3682 = vcmp.ge.s32.totalorder %v3681, 0
    %vm3683 = vcmp.lt.s32.totalorder %v3681, 256
    %vm3684 = vmand %vm3682, %vm3683
    %3685 = vst.msk [vmem:[#allocation3] sm:$0x3] %vm3684, %v3679
    // Predicated region
    $region38: #{tpu_custom_call.1} parent=1 // pred_check
      _
    $region39: #{tpu_custom_call.1} parent=1 // pred_check_branch
      %3687 = sbr.rel (0) target = $region41
    $region40: #{tpu_custom_call.1} parent=1 // pred_region
      %s3689 = ssub.s32 32, 32
      %3690 = vsyncadd [#allocation4], %s3689
      %s3692 = sshll.u32 [#allocation3], 4
      %s3693 = int_to_ptr.vmem [resolvable:$true] %s3692
      %3695 = dma.vmem_to_hbm [thread:$0]  %s3693, 32, %s9, [#allocation4]
    $region41: #{tpu_custom_call.1} parent=1 // pred_fallthru
      _
    // Predicated region
    $region42: #{tpu_custom_call.1} parent=1 // pred_check
      _
    $region43: #{tpu_custom_call.1} parent=1 // pred_check_branch
      %3697 = sbr.rel (0) target = $region45
    $region44: #{tpu_custom_call.1} parent=1 // pred_region
      %3698 = dma.done [#allocation4], 32
    $region45: #{tpu_custom_call.1} parent=1 // pred_fallthru
      _
    %3699 = vsyncpa [#allocation4], 1

</llo_original>
